<compile_context>
chip_gen: v5e
topology: v5e:2x2
jax: 0.10.0
libtpu: 0.0.40
codegen_flags: <defaults>
</compile_context>

<pallas_src>
import math
import functools

import jax
import jax.numpy as jnp
from jax.experimental import pallas as pl
from jax.experimental.pallas import tpu as pltpu


def _round_up(x, m):
    return ((x + m - 1) // m) * m


# ----------------------------------------------------------------------------
# Kernel 1: backbone stand-in (1x1 conv + ReLU) + AdaptiveAvgPool2d(1)
#   grid = (batch tiles [parallel], spatial tiles [arbitrary reduction])
#   pooled output block (tb, Cbb) is resident across the spatial axis.
# ----------------------------------------------------------------------------
def _backbone_pool_kernel(x_ref, wconv_ref, bconv_ref, pooled_ref, *, inv_p):
    p_idx = pl.program_id(1)

    @pl.when(p_idx == 0)
    def _():
        pooled_ref[...] = jnp.zeros_like(pooled_ref)

    tb = x_ref.shape[0]
    parts = []
    for b in range(tb):                         # static unroll over batch tile
        xb = x_ref[b]                           # (Cin, tp) bf16, spatial on lanes
        # contract the tiny Cin on sublanes: (Cin, tp)^T x (Cin, Cbb) -> (tp, Cbb)
        h = jax.lax.dot_general(
            xb, wconv_ref[...], (((0,), (0,)), ((), ())),
            preferred_element_type=jnp.float32)
        h = jnp.maximum(h + bconv_ref[...], 0.0)            # bias + ReLU
        parts.append(jnp.sum(h, axis=0, keepdims=True))     # spatial partial sum
    pooled_ref[...] += jnp.concatenate(parts, axis=0)       # (tb, Cbb)

    @pl.when(p_idx == pl.num_programs(1) - 1)
    def _():
        pooled_ref[...] = pooled_ref[...] * inv_p            # /= H*W


def shopee_features(x_bcp, wconv, bconv, *, tb, tp):
    B, Cin, P = x_bcp.shape
    Cbb = wconv.shape[1]
    assert B % tb == 0 and P % tp == 0
    assert tp % 128 == 0 and Cbb % 128 == 0
    assert tb == B or tb % 8 == 0
    kern = functools.partial(_backbone_pool_kernel, inv_p=1.0 / P)
    return pl.pallas_call(
        kern,
        out_shape=jax.ShapeDtypeStruct((B, Cbb), jnp.float32),
        grid=(B // tb, P // tp),
        in_specs=[
            pl.BlockSpec((tb, Cin, tp), lambda b, p: (b, 0, p)),   # image tile
            pl.BlockSpec((Cin, Cbb), lambda b, p: (0, 0)),         # conv weight
            pl.BlockSpec((1, Cbb), lambda b, p: (0, 0)),           # conv bias
        ],
        out_specs=pl.BlockSpec((tb, Cbb), lambda b, p: (b, 0)),
        compiler_params=pltpu.CompilerParams(
            dimension_semantics=("parallel", "arbitrary"),
            vmem_limit_bytes=32 * 1024 * 1024),
    )(x_bcp, wconv, bconv)


# ----------------------------------------------------------------------------
# Kernel 2 (prologue): Dropout + Linear + BatchNorm1d(train) + F.normalize
#   one shot, full batch resident (BN needs batch statistics).
# ----------------------------------------------------------------------------
def _head_prologue_kernel(pooled_ref, mask_ref, wfc_ref, bfc_ref,
                          gamma_ref, beta_ref, xn_ref):
    x = pooled_ref[...] * mask_ref[...]                      # dropout (host mask)
    z = jnp.dot(x.astype(jnp.bfloat16), wfc_ref[...],
                preferred_element_type=jnp.float32) + bfc_ref[...]
    # BatchNorm1d training mode: batch stats, biased var, eps=1e-5
    mu = jnp.mean(z, axis=0, keepdims=True)
    var = jnp.mean((z - mu) * (z - mu), axis=0, keepdims=True)
    feat = (z - mu) * jax.lax.rsqrt(var + 1e-5) * gamma_ref[...] + beta_ref[...]
    # F.normalize(features): row-wise L2
    ss = jnp.sum(feat * feat, axis=-1, keepdims=True)
    xn_ref[...] = (feat * jax.lax.rsqrt(jnp.maximum(ss, 1e-24))).astype(xn_ref.dtype)


def shopee_prologue(pooled, drop_mask, wfc, bfc, gamma, beta):
    B = pooled.shape[0]
    D = wfc.shape[1]
    return pl.pallas_call(
        _head_prologue_kernel,
        out_shape=jax.ShapeDtypeStruct((B, D), jnp.bfloat16),
        compiler_params=pltpu.CompilerParams(vmem_limit_bytes=32 * 1024 * 1024),
    )(pooled, drop_mask, wfc, bfc, gamma, beta)


# ----------------------------------------------------------------------------
# Kernel 3: ArcMarginProduct + online logsumexp over streamed class tiles
#   grid = (class super-splits [parallel], class tiles [arbitrary])
#   (m, l, target) partials live in per-split resident output blocks.
# ----------------------------------------------------------------------------
def _arc_head_kernel(xn_ref, label_ref, arcw_ref,
                     logits_ref, m_ref, l_ref, t_ref,
                     *, scale, cos_m, sin_m, th, mm, n_classes):
    jj = pl.program_id(1)
    B = xn_ref.shape[0]
    TN = arcw_ref.shape[0]
    tile_idx = pl.program_id(0) * pl.num_programs(1) + jj

    @pl.when(jj == 0)
    def _():
        m_ref[0] = jnp.full((B, 1), -jnp.inf, jnp.float32)
        l_ref[0] = jnp.zeros((B, 1), jnp.float32)
        t_ref[0] = jnp.zeros((B, 1), jnp.float32)

    # F.normalize(W) for this class tile (f32 norm, bf16 MXU operand)
    w = arcw_ref[...].astype(jnp.float32)
    wss = jnp.sum(w * w, axis=-1, keepdims=True)
    wn = (w * jax.lax.rsqrt(jnp.maximum(wss, 1e-24))).astype(jnp.bfloat16)
    cosine = jax.lax.dot_general(xn_ref[...], wn, (((1,), (1,)), ((), ())),
                                 preferred_element_type=jnp.float32)   # (B, TN)
    cosine = jnp.clip(cosine, -1.0, 1.0)
    sine = jnp.sqrt(jnp.maximum(1.0 - cosine * cosine, 0.0))
    phi = cosine * cos_m - sine * sin_m
    phi = jnp.where(cosine > th, phi, cosine - mm)          # easy_margin=False

    classes = tile_idx * TN + jax.lax.broadcasted_iota(jnp.int32, (B, TN), 1)
    one_hot = (classes == label_ref[...]).astype(jnp.float32)
    logits = (one_hot * phi + (1.0 - one_hot) * cosine) * scale
    logits = jnp.where(classes < n_classes, logits, -1e30)  # mask padded classes
    logits_ref[...] = logits

    # online logsumexp partials for CrossEntropyLoss
    m_prev = m_ref[0]
    m_new = jnp.maximum(m_prev, jnp.max(logits, axis=-1, keepdims=True))
    l_ref[0] = l_ref[0] * jnp.exp(m_prev - m_new) + jnp.sum(
        jnp.exp(logits - m_new), axis=-1, keepdims=True)
    t_ref[0] = t_ref[0] + jnp.sum(one_hot * logits, axis=-1, keepdims=True)
    m_ref[0] = m_new


def shopee_arc_head(xn, label2, arc_w_pad, *, n_classes, tn, class_splits,
                    scale, margin):
    B, D = xn.shape
    N_pad = arc_w_pad.shape[0]
    S = class_splits
    assert D % 128 == 0 and tn % 128 == 0 and N_pad % (tn * S) == 0
    n_inner = N_pad // (tn * S)
    kern = functools.partial(
        _arc_head_kernel,
        scale=float(scale),
        cos_m=math.cos(margin), sin_m=math.sin(margin),
        th=math.cos(math.pi - margin), mm=math.sin(math.pi - margin) * margin,
        n_classes=n_classes)
    return pl.pallas_call(
        kern,
        out_shape=(jax.ShapeDtypeStruct((B, N_pad), jnp.float32),
                   jax.ShapeDtypeStruct((S, B, 1), jnp.float32),
                   jax.ShapeDtypeStruct((S, B, 1), jnp.float32),
                   jax.ShapeDtypeStruct((S, B, 1), jnp.float32)),
        grid=(S, n_inner),
        in_specs=[
            pl.BlockSpec((B, D), lambda s, j: (0, 0)),               # xn (bf16)
            pl.BlockSpec((B, 1), lambda s, j: (0, 0)),               # labels
            pl.BlockSpec((tn, D), lambda s, j: (s * n_inner + j, 0)),  # arc_w tile
        ],
        out_specs=(
            pl.BlockSpec((B, tn), lambda s, j: (0, s * n_inner + j)),  # logits
            pl.BlockSpec((1, B, 1), lambda s, j: (s, 0, 0)),           # m partial
            pl.BlockSpec((1, B, 1), lambda s, j: (s, 0, 0)),           # l partial
            pl.BlockSpec((1, B, 1), lambda s, j: (s, 0, 0)),           # tgt partial
        ),
        compiler_params=pltpu.CompilerParams(
            dimension_semantics=("parallel", "arbitrary"),
            vmem_limit_bytes=32 * 1024 * 1024),
    )(xn, label2, arc_w_pad)


# ----------------------------------------------------------------------------
# Full ShopeeModel.forward (training): features -> ArcMargin -> (logits, loss)
# ----------------------------------------------------------------------------
def shopee_forward(image_nchw, label, params, dropout_key, *,
                   tb=8, tp=512, tn=512, class_splits=2,
                   scale=30.0, margin=0.5, p_drop=0.1):
    B, C, H, W = image_nchw.shape
    P = H * W
    # NCHW -> (B, Cin, H*W): pure reshape.  Big spatial dim lane-dense, tiny
    # channel dim on sublanes -> no 32x zero-padded HBM traffic.
    x = image_nchw.reshape(B, C, P).astype(jnp.bfloat16)

    tb = min(tb, B)
    tp = min(tp, P)
    pooled = shopee_features(x, params["wconv"].astype(jnp.bfloat16),
                             params["bconv"], tb=tb, tp=tp)

    # TODO(synk): dropout uses a host-side jax.random mask (different RNG
    # stream than torch.nn.Dropout; statistically equivalent).
    keep = jax.random.bernoulli(dropout_key, 1.0 - p_drop, pooled.shape)
    drop_mask = keep.astype(jnp.float32) / (1.0 - p_drop)

    # TODO(synk): BatchNorm1d running_mean/running_var updates are not emitted
    # (forward pass only).
    xn = shopee_prologue(pooled, drop_mask, params["wfc"].astype(jnp.bfloat16),
                         params["bfc"], params["bn_gamma"], params["bn_beta"])

    # Pad classes to a multiple of (tn * class_splits); padded classes are
    # masked to -1e30 inside the kernel and sliced away below.
    N, D = params["arc_w"].shape
    S = class_splits
    tn = min(tn, _round_up(N, 128))
    n_pad = _round_up(N, tn * S)
    arc_w = jnp.pad(params["arc_w"], ((0, n_pad - N), (0, 0))).astype(jnp.bfloat16)

    label2 = label.reshape(B, 1).astype(jnp.int32)
    logits_pad, m_p, l_p, t_p = shopee_arc_head(
        xn, label2, arc_w, n_classes=N, tn=tn, class_splits=S,
        scale=scale, margin=margin)

    # Tiny epilogue: merge per-split online-softmax partials -> mean CE loss.
    m = jnp.max(m_p, axis=0)                                  # (B, 1)
    l = jnp.sum(l_p * jnp.exp(m_p - m), axis=0)               # (B, 1)
    tgt = jnp.sum(t_p, axis=0)                                # (B, 1)
    loss = jnp.mean(m + jnp.log(l) - tgt)
    return logits_pad[:, :N], loss


if __name__ == "__main__":
    # Small shapes consistent with the module (real: B=16, fc_dim=512,
    # classes=11014, in_features=1792, img 512x512x3).
    B, Cin, H, W = 16, 3, 16, 16       # P = H*W = 256
    CBB = 256                          # backbone output channels (in_features)
    FC_DIM = 128                       # fc_dim
    N_CLASSES = 300                    # deliberately NOT a tile multiple
    P_DROP = 0.1

    key = jax.random.PRNGKey(0)
    k_img, k_conv, k_fc, k_arc, k_lbl, k_drop = jax.random.split(key, 6)

    image = jax.random.normal(k_img, (B, Cin, H, W), jnp.float32)
    label = jax.random.randint(k_lbl, (B,), 0, N_CLASSES, jnp.int32)

    # backbone stand-in 1x1 conv weights
    bc = math.sqrt(6.0 / (Cin + CBB))
    wconv = jax.random.uniform(k_conv, (Cin, CBB), jnp.float32, -bc, bc)
    bconv = jnp.zeros((1, CBB), jnp.float32)

    # classifier Linear(in_features -> fc_dim): xavier_normal weight, zero bias
    std_fc = math.sqrt(2.0 / (CBB + FC_DIM))
    wfc = std_fc * jax.random.normal(k_fc, (CBB, FC_DIM), jnp.float32)   # = W.T
    bfc = jnp.zeros((1, FC_DIM), jnp.float32)

    # BatchNorm1d(fc_dim): weight=1, bias=0
    bn_gamma = jnp.ones((1, FC_DIM), jnp.float32)
    bn_beta = jnp.zeros((1, FC_DIM), jnp.float32)

    # ArcMarginProduct weight (out_features, in_features), xavier_uniform
    ba = math.sqrt(6.0 / (FC_DIM + N_CLASSES))
    arc_w = jax.random.uniform(k_arc, (N_CLASSES, FC_DIM), jnp.float32, -ba, ba)

    params = dict(wconv=wconv, bconv=bconv, wfc=wfc, bfc=bfc,
                  bn_gamma=bn_gamma, bn_beta=bn_beta, arc_w=arc_w)

    logits, loss = shopee_forward(image, label, params, k_drop,
                                  tb=8, tp=256, tn=128, class_splits=2,
                                  scale=30.0, margin=0.5, p_drop=P_DROP)
    jax.block_until_ready((logits, loss))

    assert logits.shape == (B, N_CLASSES)
    assert loss.shape == ()
    assert bool(jnp.isfinite(loss))
    assert bool(jnp.all(jnp.isfinite(logits)))
    print("KERNEL_OK")
</pallas_src>

<mosaic_0001>
module attributes {stable_mosaic.version = 11 : i64} {
  func.func @_backbone_pool_kernel(%arg0: i32, %arg1: i32, %arg2: memref<8x3x256xbf16, #tpu.memory_space<vmem>>, %arg3: memref<3x256xbf16, #tpu.memory_space<vmem>>, %arg4: memref<1x256xf32, #tpu.memory_space<vmem>>, %arg5: memref<8x256xf32, #tpu.memory_space<vmem>>) attributes {dimension_semantics = [#tpu.dimension_semantics<parallel>, #tpu.dimension_semantics<arbitrary>], iteration_bounds = array<i64: 2, 1>, scalar_prefetch = 0 : i64, scratch_operands = 0 : i64, tpu.core_type = #tpu.core_type<tc>, window_params = [{transform_indices = @transform_0, window_bounds = array<i64: 8, 3, 256>}, {pipeline_mode = #tpu.pipeline_mode<synchronous>, transform_indices = @transform_1, window_bounds = array<i64: 3, 256>}, {pipeline_mode = #tpu.pipeline_mode<synchronous>, transform_indices = @transform_2, window_bounds = array<i64: 1, 256>}, {transform_indices = @transform_3, window_bounds = array<i64: 8, 256>}]} {
    %c0_i32 = arith.constant 0 : i32
    %0 = arith.cmpi eq, %arg1, %c0_i32 : i32
    %1 = arith.extui %0 : i1 to i32
    %c0_i32_0 = arith.constant 0 : i32
    %2 = arith.cmpi ne, %1, %c0_i32_0 : i32
    scf.if %2 {
      %cst_78 = arith.constant 0.000000e+00 : f32
      %98 = vector.broadcast %cst_78 : f32 to vector<8x256xf32>
      %c0_79 = arith.constant 0 : index
      %c0_80 = arith.constant 0 : index
      %99 = vector.load %arg5[%c0_79, %c0_80] : memref<8x256xf32, #tpu.memory_space<vmem>>, vector<8x256xf32>
      tpu.vector_store %arg5[%c0_79, %c0_80], %98 {strides = array<i32>} : memref<8x256xf32, #tpu.memory_space<vmem>>, vector<8x256xf32>,
    } else {
    }
    %c0 = arith.constant 0 : index
    %c0_1 = arith.constant 0 : index
    %c0_2 = arith.constant 0 : index
    %3 = vector.load %arg2[%c0, %c0_1, %c0_2] : memref<8x3x256xbf16, #tpu.memory_space<vmem>>, vector<1x3x256xbf16>
    %4 = vector.shape_cast %3 : vector<1x3x256xbf16> to vector<3x256xbf16>
    %c0_3 = arith.constant 0 : index
    %c0_4 = arith.constant 0 : index
    %5 = vector.load %arg3[%c0_3, %c0_4] : memref<3x256xbf16, #tpu.memory_space<vmem>>, vector<3x256xbf16>
    %cst = arith.constant dense<0.000000e+00> : vector<256x256xf32>
    %6 = tpu.matmul %4, %5, %cst {dimension_numbers = #tpu.dot_dimension_numbers<[0], [0], [1], [1], [0, 1, 1, 1], [], []>} : vector<3x256xbf16>, vector<3x256xbf16>, vector<256x256xf32> -> vector<256x256xf32>
    %c0_5 = arith.constant 0 : index
    %c0_6 = arith.constant 0 : index
    %7 = vector.load %arg4[%c0_5, %c0_6] : memref<1x256xf32, #tpu.memory_space<vmem>>, vector<1x256xf32>
    %8 = vector.broadcast %7 : vector<1x256xf32> to vector<256x256xf32>
    %9 = arith.addf %6, %8 : vector<256x256xf32>
    %cst_7 = arith.constant 0.000000e+00 : f32
    %10 = vector.broadcast %cst_7 : f32 to vector<256x256xf32>
    %11 = arith.maximumf %9, %10 : vector<256x256xf32>
    %cst_8 = arith.constant dense<0.000000e+00> : vector<256xf32>
    %12 = vector.multi_reduction <add>, %11, %cst_8 [0] : vector<256x256xf32> to vector<256xf32>
    %13 = vector.shape_cast %12 : vector<256xf32> to vector<1x256xf32>
    %c1 = arith.constant 1 : index
    %c0_9 = arith.constant 0 : index
    %c0_10 = arith.constant 0 : index
    %14 = vector.load %arg2[%c1, %c0_9, %c0_10] : memref<8x3x256xbf16, #tpu.memory_space<vmem>>, vector<1x3x256xbf16>
    %15 = vector.shape_cast %14 : vector<1x3x256xbf16> to vector<3x256xbf16>
    %c0_11 = arith.constant 0 : index
    %c0_12 = arith.constant 0 : index
    %16 = vector.load %arg3[%c0_11, %c0_12] : memref<3x256xbf16, #tpu.memory_space<vmem>>, vector<3x256xbf16>
    %cst_13 = arith.constant dense<0.000000e+00> : vector<256x256xf32>
    %17 = tpu.matmul %15, %16, %cst_13 {dimension_numbers = #tpu.dot_dimension_numbers<[0], [0], [1], [1], [0, 1, 1, 1], [], []>} : vector<3x256xbf16>, vector<3x256xbf16>, vector<256x256xf32> -> vector<256x256xf32>
    %c0_14 = arith.constant 0 : index
    %c0_15 = arith.constant 0 : index
    %18 = vector.load %arg4[%c0_14, %c0_15] : memref<1x256xf32, #tpu.memory_space<vmem>>, vector<1x256xf32>
    %19 = vector.broadcast %18 : vector<1x256xf32> to vector<256x256xf32>
    %20 = arith.addf %17, %19 : vector<256x256xf32>
    %cst_16 = arith.constant 0.000000e+00 : f32
    %21 = vector.broadcast %cst_16 : f32 to vector<256x256xf32>
    %22 = arith.maximumf %20, %21 : vector<256x256xf32>
    %cst_17 = arith.constant dense<0.000000e+00> : vector<256xf32>
    %23 = vector.multi_reduction <add>, %22, %cst_17 [0] : vector<256x256xf32> to vector<256xf32>
    %24 = vector.shape_cast %23 : vector<256xf32> to vector<1x256xf32>
    %c2 = arith.constant 2 : index
    %c0_18 = arith.constant 0 : index
    %c0_19 = arith.constant 0 : index
    %25 = vector.load %arg2[%c2, %c0_18, %c0_19] : memref<8x3x256xbf16, #tpu.memory_space<vmem>>, vector<1x3x256xbf16>
    %26 = vector.shape_cast %25 : vector<1x3x256xbf16> to vector<3x256xbf16>
    %c0_20 = arith.constant 0 : index
    %c0_21 = arith.constant 0 : index
    %27 = vector.load %arg3[%c0_20, %c0_21] : memref<3x256xbf16, #tpu.memory_space<vmem>>, vector<3x256xbf16>
    %cst_22 = arith.constant dense<0.000000e+00> : vector<256x256xf32>
    %28 = tpu.matmul %26, %27, %cst_22 {dimension_numbers = #tpu.dot_dimension_numbers<[0], [0], [1], [1], [0, 1, 1, 1], [], []>} : vector<3x256xbf16>, vector<3x256xbf16>, vector<256x256xf32> -> vector<256x256xf32>
    %c0_23 = arith.constant 0 : index
    %c0_24 = arith.constant 0 : index
    %29 = vector.load %arg4[%c0_23, %c0_24] : memref<1x256xf32, #tpu.memory_space<vmem>>, vector<1x256xf32>
    %30 = vector.broadcast %29 : vector<1x256xf32> to vector<256x256xf32>
    %31 = arith.addf %28, %30 : vector<256x256xf32>
    %cst_25 = arith.constant 0.000000e+00 : f32
    %32 = vector.broadcast %cst_25 : f32 to vector<256x256xf32>
    %33 = arith.maximumf %31, %32 : vector<256x256xf32>
    %cst_26 = arith.constant dense<0.000000e+00> : vector<256xf32>
    %34 = vector.multi_reduction <add>, %33, %cst_26 [0] : vector<256x256xf32> to vector<256xf32>
    %35 = vector.shape_cast %34 : vector<256xf32> to vector<1x256xf32>
    %c3 = arith.constant 3 : index
    %c0_27 = arith.constant 0 : index
    %c0_28 = arith.constant 0 : index
    %36 = vector.load %arg2[%c3, %c0_27, %c0_28] : memref<8x3x256xbf16, #tpu.memory_space<vmem>>, vector<1x3x256xbf16>
    %37 = vector.shape_cast %36 : vector<1x3x256xbf16> to vector<3x256xbf16>
    %c0_29 = arith.constant 0 : index
    %c0_30 = arith.constant 0 : index
    %38 = vector.load %arg3[%c0_29, %c0_30] : memref<3x256xbf16, #tpu.memory_space<vmem>>, vector<3x256xbf16>
    %cst_31 = arith.constant dense<0.000000e+00> : vector<256x256xf32>
    %39 = tpu.matmul %37, %38, %cst_31 {dimension_numbers = #tpu.dot_dimension_numbers<[0], [0], [1], [1], [0, 1, 1, 1], [], []>} : vector<3x256xbf16>, vector<3x256xbf16>, vector<256x256xf32> -> vector<256x256xf32>
    %c0_32 = arith.constant 0 : index
    %c0_33 = arith.constant 0 : index
    %40 = vector.load %arg4[%c0_32, %c0_33] : memref<1x256xf32, #tpu.memory_space<vmem>>, vector<1x256xf32>
    %41 = vector.broadcast %40 : vector<1x256xf32> to vector<256x256xf32>
    %42 = arith.addf %39, %41 : vector<256x256xf32>
    %cst_34 = arith.constant 0.000000e+00 : f32
    %43 = vector.broadcast %cst_34 : f32 to vector<256x256xf32>
    %44 = arith.maximumf %42, %43 : vector<256x256xf32>
    %cst_35 = arith.constant dense<0.000000e+00> : vector<256xf32>
    %45 = vector.multi_reduction <add>, %44, %cst_35 [0] : vector<256x256xf32> to vector<256xf32>
    %46 = vector.shape_cast %45 : vector<256xf32> to vector<1x256xf32>
    %c4 = arith.constant 4 : index
    %c0_36 = arith.constant 0 : index
    %c0_37 = arith.constant 0 : index
    %47 = vector.load %arg2[%c4, %c0_36, %c0_37] : memref<8x3x256xbf16, #tpu.memory_space<vmem>>, vector<1x3x256xbf16>
    %48 = vector.shape_cast %47 : vector<1x3x256xbf16> to vector<3x256xbf16>
    %c0_38 = arith.constant 0 : index
    %c0_39 = arith.constant 0 : index
    %49 = vector.load %arg3[%c0_38, %c0_39] : memref<3x256xbf16, #tpu.memory_space<vmem>>, vector<3x256xbf16>
    %cst_40 = arith.constant dense<0.000000e+00> : vector<256x256xf32>
    %50 = tpu.matmul %48, %49, %cst_40 {dimension_numbers = #tpu.dot_dimension_numbers<[0], [0], [1], [1], [0, 1, 1, 1], [], []>} : vector<3x256xbf16>, vector<3x256xbf16>, vector<256x256xf32> -> vector<256x256xf32>
    %c0_41 = arith.constant 0 : index
    %c0_42 = arith.constant 0 : index
    %51 = vector.load %arg4[%c0_41, %c0_42] : memref<1x256xf32, #tpu.memory_space<vmem>>, vector<1x256xf32>
    %52 = vector.broadcast %51 : vector<1x256xf32> to vector<256x256xf32>
    %53 = arith.addf %50, %52 : vector<256x256xf32>
    %cst_43 = arith.constant 0.000000e+00 : f32
    %54 = vector.broadcast %cst_43 : f32 to vector<256x256xf32>
    %55 = arith.maximumf %53, %54 : vector<256x256xf32>
    %cst_44 = arith.constant dense<0.000000e+00> : vector<256xf32>
    %56 = vector.multi_reduction <add>, %55, %cst_44 [0] : vector<256x256xf32> to vector<256xf32>
    %57 = vector.shape_cast %56 : vector<256xf32> to vector<1x256xf32>
    %c5 = arith.constant 5 : index
    %c0_45 = arith.constant 0 : index
    %c0_46 = arith.constant 0 : index
    %58 = vector.load %arg2[%c5, %c0_45, %c0_46] : memref<8x3x256xbf16, #tpu.memory_space<vmem>>, vector<1x3x256xbf16>
    %59 = vector.shape_cast %58 : vector<1x3x256xbf16> to vector<3x256xbf16>
    %c0_47 = arith.constant 0 : index
    %c0_48 = arith.constant 0 : index
    %60 = vector.load %arg3[%c0_47, %c0_48] : memref<3x256xbf16, #tpu.memory_space<vmem>>, vector<3x256xbf16>
    %cst_49 = arith.constant dense<0.000000e+00> : vector<256x256xf32>
    %61 = tpu.matmul %59, %60, %cst_49 {dimension_numbers = #tpu.dot_dimension_numbers<[0], [0], [1], [1], [0, 1, 1, 1], [], []>} : vector<3x256xbf16>, vector<3x256xbf16>, vector<256x256xf32> -> vector<256x256xf32>
    %c0_50 = arith.constant 0 : index
    %c0_51 = arith.constant 0 : index
    %62 = vector.load %arg4[%c0_50, %c0_51] : memref<1x256xf32, #tpu.memory_space<vmem>>, vector<1x256xf32>
    %63 = vector.broadcast %62 : vector<1x256xf32> to vector<256x256xf32>
    %64 = arith.addf %61, %63 : vector<256x256xf32>
    %cst_52 = arith.constant 0.000000e+00 : f32
    %65 = vector.broadcast %cst_52 : f32 to vector<256x256xf32>
    %66 = arith.maximumf %64, %65 : vector<256x256xf32>
    %cst_53 = arith.constant dense<0.000000e+00> : vector<256xf32>
    %67 = vector.multi_reduction <add>, %66, %cst_53 [0] : vector<256x256xf32> to vector<256xf32>
    %68 = vector.shape_cast %67 : vector<256xf32> to vector<1x256xf32>
    %c6 = arith.constant 6 : index
    %c0_54 = arith.constant 0 : index
    %c0_55 = arith.constant 0 : index
    %69 = vector.load %arg2[%c6, %c0_54, %c0_55] : memref<8x3x256xbf16, #tpu.memory_space<vmem>>, vector<1x3x256xbf16>
    %70 = vector.shape_cast %69 : vector<1x3x256xbf16> to vector<3x256xbf16>
    %c0_56 = arith.constant 0 : index
    %c0_57 = arith.constant 0 : index
    %71 = vector.load %arg3[%c0_56, %c0_57] : memref<3x256xbf16, #tpu.memory_space<vmem>>, vector<3x256xbf16>
    %cst_58 = arith.constant dense<0.000000e+00> : vector<256x256xf32>
    %72 = tpu.matmul %70, %71, %cst_58 {dimension_numbers = #tpu.dot_dimension_numbers<[0], [0], [1], [1], [0, 1, 1, 1], [], []>} : vector<3x256xbf16>, vector<3x256xbf16>, vector<256x256xf32> -> vector<256x256xf32>
    %c0_59 = arith.constant 0 : index
    %c0_60 = arith.constant 0 : index
    %73 = vector.load %arg4[%c0_59, %c0_60] : memref<1x256xf32, #tpu.memory_space<vmem>>, vector<1x256xf32>
    %74 = vector.broadcast %73 : vector<1x256xf32> to vector<256x256xf32>
    %75 = arith.addf %72, %74 : vector<256x256xf32>
    %cst_61 = arith.constant 0.000000e+00 : f32
    %76 = vector.broadcast %cst_61 : f32 to vector<256x256xf32>
    %77 = arith.maximumf %75, %76 : vector<256x256xf32>
    %cst_62 = arith.constant dense<0.000000e+00> : vector<256xf32>
    %78 = vector.multi_reduction <add>, %77, %cst_62 [0] : vector<256x256xf32> to vector<256xf32>
    %79 = vector.shape_cast %78 : vector<256xf32> to vector<1x256xf32>
    %c7 = arith.constant 7 : index
    %c0_63 = arith.constant 0 : index
    %c0_64 = arith.constant 0 : index
    %80 = vector.load %arg2[%c7, %c0_63, %c0_64] : memref<8x3x256xbf16, #tpu.memory_space<vmem>>, vector<1x3x256xbf16>
    %81 = vector.shape_cast %80 : vector<1x3x256xbf16> to vector<3x256xbf16>
    %c0_65 = arith.constant 0 : index
    %c0_66 = arith.constant 0 : index
    %82 = vector.load %arg3[%c0_65, %c0_66] : memref<3x256xbf16, #tpu.memory_space<vmem>>, vector<3x256xbf16>
    %cst_67 = arith.constant dense<0.000000e+00> : vector<256x256xf32>
    %83 = tpu.matmul %81, %82, %cst_67 {dimension_numbers = #tpu.dot_dimension_numbers<[0], [0], [1], [1], [0, 1, 1, 1], [], []>} : vector<3x256xbf16>, vector<3x256xbf16>, vector<256x256xf32> -> vector<256x256xf32>
    %c0_68 = arith.constant 0 : index
    %c0_69 = arith.constant 0 : index
    %84 = vector.load %arg4[%c0_68, %c0_69] : memref<1x256xf32, #tpu.memory_space<vmem>>, vector<1x256xf32>
    %85 = vector.broadcast %84 : vector<1x256xf32> to vector<256x256xf32>
    %86 = arith.addf %83, %85 : vector<256x256xf32>
    %cst_70 = arith.constant 0.000000e+00 : f32
    %87 = vector.broadcast %cst_70 : f32 to vector<256x256xf32>
    %88 = arith.maximumf %86, %87 : vector<256x256xf32>
    %cst_71 = arith.constant dense<0.000000e+00> : vector<256xf32>
    %89 = vector.multi_reduction <add>, %88, %cst_71 [0] : vector<256x256xf32> to vector<256xf32>
    %90 = vector.shape_cast %89 : vector<256xf32> to vector<1x256xf32>
    %c0_72 = arith.constant 0 : index
    %c0_73 = arith.constant 0 : index
    %91 = vector.load %arg5[%c0_72, %c0_73] : memref<8x256xf32, #tpu.memory_space<vmem>>, vector<8x256xf32>
    %92 = tpu.concatenate %13, %24, %35, %46, %57, %68, %79, %90 in 0 : vector<1x256xf32>, vector<1x256xf32>, vector<1x256xf32>, vector<1x256xf32>, vector<1x256xf32>, vector<1x256xf32>, vector<1x256xf32>, vector<1x256xf32> -> vector<8x256xf32>
    %93 = arith.addf %91, %92 : vector<8x256xf32>
    %c0_74 = arith.constant 0 : index
    %c0_75 = arith.constant 0 : index
    %94 = vector.load %arg5[%c0_74, %c0_75] : memref<8x256xf32, #tpu.memory_space<vmem>>, vector<8x256xf32>
    tpu.vector_store %arg5[%c0_74, %c0_75], %93 {strides = array<i32>} : memref<8x256xf32, #tpu.memory_space<vmem>>, vector<8x256xf32>,
    %c0_i32_76 = arith.constant 0 : i32
    %95 = arith.cmpi eq, %arg1, %c0_i32_76 : i32
    %96 = arith.extui %95 : i1 to i32
    %c0_i32_77 = arith.constant 0 : i32
    %97 = arith.cmpi ne, %96, %c0_i32_77 : i32
    scf.if %97 {
      %c0_78 = arith.constant 0 : index
      %c0_79 = arith.constant 0 : index
      %98 = vector.load %arg5[%c0_78, %c0_79] : memref<8x256xf32, #tpu.memory_space<vmem>>, vector<8x256xf32>
      %cst_80 = arith.constant 3.906250e-03 : f32
      %99 = vector.broadcast %cst_80 : f32 to vector<8x256xf32>
      %100 = arith.mulf %98, %99 : vector<8x256xf32>
      %c0_81 = arith.constant 0 : index
      %c0_82 = arith.constant 0 : index
      %101 = vector.load %arg5[%c0_81, %c0_82] : memref<8x256xf32, #tpu.memory_space<vmem>>, vector<8x256xf32>
      tpu.vector_store %arg5[%c0_81, %c0_82], %100 {strides = array<i32>} : memref<8x256xf32, #tpu.memory_space<vmem>>, vector<8x256xf32>,
    } else {
    }
    return
  }
  func.func @transform_0(%arg0: i32, %arg1: i32) -> (i32, i32, i32) {
    %c0_i32 = arith.constant 0 : i32
    %c0_i32_0 = arith.constant 0 : i32
    return %arg0, %c0_i32, %arg1 : i32, i32, i32
  }
  func.func @transform_1(%arg0: i32, %arg1: i32) -> (i32, i32) {
    %c0_i32 = arith.constant 0 : i32
    %c0_i32_0 = arith.constant 0 : i32
    %c0_i32_1 = arith.constant 0 : i32
    return %c0_i32, %c0_i32_0 : i32, i32
  }
  func.func @transform_2(%arg0: i32, %arg1: i32) -> (i32, i32) {
    %c0_i32 = arith.constant 0 : i32
    %c0_i32_0 = arith.constant 0 : i32
    %c0_i32_1 = arith.constant 0 : i32
    return %c0_i32, %c0_i32_0 : i32, i32
  }
  func.func @transform_3(%arg0: i32, %arg1: i32) -> (i32, i32) {
    %c0_i32 = arith.constant 0 : i32
    %c0_i32_0 = arith.constant 0 : i32
    return %arg0, %c0_i32 : i32, i32
  }
}

</mosaic_0001>

<llo_original>
// kernel: tpu_custom_call.1
$region0: #{tpu_custom_call.1}
  #allocation0 [shape = 'u32[]', space=smem, size = 0x4, offset = 0x4, fixed_abs, tag = 'smem constant byte address 0x4 - core index']
  #allocation1 [shape = 'u32[72,128]{1,0:T(1,128)}', space=vmem, size = 0x9000, scoped, tag = 'internal scratch']
  %s0 = inlined_call_operand.vmem [shape: bf16[16,3,256], index: 0, kind: input, shape index: {}]
  %s1 = inlined_call_operand.vmem [shape: bf16[3,256], index: 1, kind: input, shape index: {}]
  %s2 = inlined_call_operand.vmem [shape: f32[1,256], index: 2, kind: input, shape index: {}]
  %s3 = inlined_call_operand.hbm [shape: f32[16,256], index: 3, kind: output, shape index: {}]
  %s4 = sld [smem:[#allocation0]]
  $region53: #{tpu_custom_call.1} parent=0
    _
  %s6 = ssub.s32 1, %s4
  %s7 = scalar_select 0, %s6, %s4
  $region1: #{tpu_custom_call.1} parent=0
    #allocation2 [shape = 'u8[16384]{0}', space=vmem, size = 0x4000, scoped, tag = 'output window, operand 0']
    #allocation3 [shape = 's32[2]{0}', space=sflag, size = 0x8, scoped, tag = 'scoped memory for tpu_custom_call.1']
    %8 = vsyncpa [#allocation3], 0
    %s9 = scalar_lea.sflag [#allocation3], 1
    %10 = vsyncpa %s9, 0
    loop: start=0, step=1, limit=4
    $region2: #{tpu_custom_call.1} parent=1 // loop_pre_header
      _
    $region3: #{tpu_custom_call.1} parent=1 // loop_header
      %s12 = sphi 0, %s16
      %p13 = scmp.ge.s32.totalorder %s12, 4
      %s19 = sphi 0, %s31
      %s20 = sphi 0, %s27
      %s21 = sphi 0, %s19
      %s22 = sphi 0, %s20
      %s23 = sphi 0, %s21
      %s24 = sphi 0, %s22
      %s36 = sphi 0, %s38
      %s39 = sphi 0, %s36
      %s40 = sphi 0, %s39
      %s56 = sphi 0, %s40
      %s60 = sphi 0, %s60
      %s62 = sphi 0, %s60
      %s63 = sphi 0, %s62
      %s77 = sphi 0, %s63
      %s81 = sphi 0, %s81
      %s83 = sphi 0, %s81
      %s84 = sphi 0, %s83
      %s98 = sphi 0, %s84
      %s104 = sphi 0, %s106
      %s107 = sphi 0, %s104
      %s108 = sphi 0, %s107
      %s124 = sphi 0, %s108
    $region4: #{tpu_custom_call.1} parent=1 // loop_header_branch
      %15 = sbr.rel (%p13) target = $region8
    $region5: #{tpu_custom_call.1} parent=1 // loop_body
      %s17 = ssub.s32 %s12, 1
      %s18 = ssub.s32 %s12, 2
      %s25 = sadd.s32 1, %s20
      %p26 = scmp.ge.s32.totalorder %s25, 1
      %s27 = scalar_select %p26, 0, %s25
      %s28 = sadd.s32 1, %s19
      %s29 = scalar_select %p26, %s28, %s19
      %p30 = scmp.ge.s32.totalorder %s29, 2
      %s31 = scalar_select %p30, 0, %s29
      %s32 = ssub.s32 %s19, %s31
      %s33 = ssub.s32 %s20, %s27
      %s34 = sor.u32 %s32, %s33
      %p35 = scmp.eq.s32.totalorder %s34, 0
      %s37 = sadd.s32 %s36, 1
      %s38 = scalar_select %p35, %s36, %s37
      %p41 = pneg %p35
      %p42 = scmp.eq.s32.totalorder %s12, 1
      %p43 = por %p41, %p42
      %p44 = scmp.ne.s32.totalorder %s36, %s39
      %p45 = scmp.eq.s32.totalorder %s12, 0
      %p46 = por %p44, %p45
      %p47 = scmp.ne.s32.totalorder %s36, %s39
      %p48 = scmp.eq.s32.totalorder %s17, 1
      %p49 = por %p47, %p48
      %p50 = scmp.ne.s32.totalorder %s39, %s40
      %p51 = scmp.eq.s32.totalorder %s17, 0
      %p52 = por %p50, %p51
      %p53 = scmp.ne.s32.totalorder %s39, %s40
      %p54 = scmp.eq.s32.totalorder %s18, 1
      %p55 = por %p53, %p54
      %p57 = scmp.ne.s32.totalorder %s40, %s56
      %p58 = scmp.eq.s32.totalorder %s18, 0
      %p59 = por %p57, %p58
      %s61 = sadd.s32 %s60, 1
      %p64 = scmp.eq.s32.totalorder %s12, 1
      %p65 = scmp.ne.s32.totalorder %s60, %s62
      %p66 = scmp.eq.s32.totalorder %s12, 0
      %p67 = por %p65, %p66
      %p68 = scmp.ne.s32.totalorder %s60, %s62
      %p69 = scmp.eq.s32.totalorder %s17, 1
      %p70 = por %p68, %p69
      %p71 = scmp.ne.s32.totalorder %s62, %s63
      %p72 = scmp.eq.s32.totalorder %s17, 0
      %p73 = por %p71, %p72
      %p74 = scmp.ne.s32.totalorder %s62, %s63
      %p75 = scmp.eq.s32.totalorder %s18, 1
      %p76 = por %p74, %p75
      %p78 = scmp.ne.s32.totalorder %s63, %s77
      %p79 = scmp.eq.s32.totalorder %s18, 0
      %p80 = por %p78, %p79
      %s82 = sadd.s32 %s81, 1
      %p85 = scmp.eq.s32.totalorder %s12, 1
      %p86 = scmp.ne.s32.totalorder %s81, %s83
      %p87 = scmp.eq.s32.totalorder %s12, 0
      %p88 = por %p86, %p87
      %p89 = scmp.ne.s32.totalorder %s81, %s83
      %p90 = scmp.eq.s32.totalorder %s17, 1
      %p91 = por %p89, %p90
      %p92 = scmp.ne.s32.totalorder %s83, %s84
      %p93 = scmp.eq.s32.totalorder %s17, 0
      %p94 = por %p92, %p93
      %p95 = scmp.ne.s32.totalorder %s83, %s84
      %p96 = scmp.eq.s32.totalorder %s18, 1
      %p97 = por %p95, %p96
      %p99 = scmp.ne.s32.totalorder %s84, %s98
      %p100 = scmp.eq.s32.totalorder %s18, 0
      %p101 = por %p99, %p100
      %s102 = ssub.s32 %s19, %s31
      %p103 = scmp.eq.s32.totalorder %s102, 0
      %s105 = sadd.s32 %s104, 1
      %s106 = scalar_select %p103, %s104, %s105
      %p109 = pneg %p103
      %p110 = scmp.eq.s32.totalorder %s12, 1
      %p111 = por %p109, %p110
      %p112 = scmp.ne.s32.totalorder %s104, %s107
      %p113 = scmp.eq.s32.totalorder %s12, 0
      %p114 = por %p112, %p113
      %p115 = scmp.ne.s32.totalorder %s104, %s107
      %p116 = scmp.eq.s32.totalorder %s17, 1
      %p117 = por %p115, %p116
      %p118 = scmp.ne.s32.totalorder %s107, %s108
      %p119 = scmp.eq.s32.totalorder %s17, 0
      %p120 = por %p118, %p119
      %p121 = scmp.ne.s32.totalorder %s107, %s108
      %p122 = scmp.eq.s32.totalorder %s18, 1
      %p123 = por %p121, %p122
      %p125 = scmp.ne.s32.totalorder %s108, %s124
      %p126 = scmp.eq.s32.totalorder %s18, 0
      %p127 = por %p125, %p126
      %p128 = scmp.le.s32.totalorder 1, %s12
      %p129 = scmp.lt.s32.totalorder %s12, 3
      %p130 = pnand %p128, %p129
      %p131 = pneg %p130
      // Predicated region
      $region9: #{tpu_custom_call.1} parent=5 // pred_check
        _
      $region10: #{tpu_custom_call.1} parent=5 // pred_check_branch
        %133 = sbr.rel (%p130) target = $region12
      $region11: #{tpu_custom_call.1} parent=5 // pred_region
        %s134 = ssub.s32 %s12, 1
        // Predicated region
        $region13: #{tpu_custom_call.1} parent=11 // pred_check
          %p135 = pneg %p73
        $region14: #{tpu_custom_call.1} parent=11 // pred_check_branch
          %137 = sbr.rel (%p135) target = $region16
        $region15: #{tpu_custom_call.1} parent=11 // pred_region
          _
        $region16: #{tpu_custom_call.1} parent=11 // pred_fallthru
          _
        // Predicated region
        $region17: #{tpu_custom_call.1} parent=11 // pred_check
          %p138 = pneg %p94
        $region18: #{tpu_custom_call.1} parent=11 // pred_check_branch
          %140 = sbr.rel (%p138) target = $region20
        $region19: #{tpu_custom_call.1} parent=11 // pred_region
          _
        $region20: #{tpu_custom_call.1} parent=11 // pred_fallthru
          _
      $region12: #{tpu_custom_call.1} parent=5 // pred_fallthru
        _
      %p141 = scmp.lt.s32.totalorder %s12, 2
      // Predicated region
      $region21: #{tpu_custom_call.1} parent=5 // pred_check
        %p142 = pneg %p141
      $region22: #{tpu_custom_call.1} parent=5 // pred_check_branch
        %144 = sbr.rel (%p142) target = $region24
      $region23: #{tpu_custom_call.1} parent=5 // pred_region
        // Predicated region
        $region25: #{tpu_custom_call.1} parent=23 // pred_check
          %p145 = pneg %p46
        $region26: #{tpu_custom_call.1} parent=23 // pred_check_branch
          %147 = sbr.rel (%p145) target = $region28
        $region27: #{tpu_custom_call.1} parent=23 // pred_region
          %s148 = smul.u32 8, %s19
          %s149 = smul.u32 2, %s20
          %p150 = scmp.lt.s32.totalorder %s148, 15
          %s151 = scalar_select %p150, %s148, 15
          %p152 = scmp.lt.s32.totalorder %s149, 1
          %s153 = scalar_select %p152, %s149, 1
          %s154 = smul.addr %s151, 2
          %s155 = sadd.s32 %s153, %s154
          %s156 = smul.addr %s155, 2
          %s157 = scalar_lea.vmem %s0, %s156
          %s158 = smul.u32 8, %s19
          %s159 = smul.u32 2, %s20
        $region28: #{tpu_custom_call.1} parent=23 // pred_fallthru
          _
      $region24: #{tpu_custom_call.1} parent=5 // pred_fallthru
        _
      %p160 = scmp.le.s32.totalorder 1, %s12
      %p161 = scmp.lt.s32.totalorder %s12, 3
      %p162 = pnand %p160, %p161
      %p163 = pneg %p162
      // Predicated region
      $region29: #{tpu_custom_call.1} parent=5 // pred_check
        _
      $region30: #{tpu_custom_call.1} parent=5 // pred_check_branch
        %165 = sbr.rel (%p162) target = $region32
      $region31: #{tpu_custom_call.1} parent=5 // pred_region
        %s166 = ssub.s32 %s12, 1
        %s167 = smul.u32 8, %s21
        %s168 = smul.u32 2, %s22
        %p169 = scmp.lt.s32.totalorder %s167, 15
        %s170 = scalar_select %p169, %s167, 15
        %p171 = scmp.lt.s32.totalorder %s168, 1
        %s172 = scalar_select %p171, %s168, 1
        %s173 = smul.addr %s170, 2
        %s174 = sadd.s32 %s172, %s173
        %s175 = smul.addr %s174, 2
        %s176 = scalar_lea.vmem %s0, %s175
        %p177 = pneg %p52
        %p178 = pneg %p49
        %p179 = pneg %p73
        %p180 = pneg %p70
        %p181 = pneg %p94
        %p182 = pneg %p91
        %p183 = pneg %p120
        %p184 = pneg %p117
        %s185 = sand.u32 %s107, 1
        %s186 = scalar_lea.sflag [#allocation3], %s185
        %s187 = sand.u32 %s107, 1
        %s188 = smul.addr %s187, 16
        %s189 = scalar_lea.vmem [#allocation2], %s188
        %s190 = smul.u32 8, %s21
        %s191 = smul.u32 2, %s22
        %p192 = scmp.lt.s32.totalorder %s190, 15
        %s193 = scalar_select %p192, %s190, 15
        %p194 = scmp.lt.s32.totalorder %s191, 1
        %s195 = scalar_select %p194, %s191, 1
        %s196 = smul.addr %s193, 2
        %s197 = sadd.s32 %s195, %s196
        %s198 = smul.addr %s197, 2
        %s199 = scalar_lea.vmem %s0, %s198
        %s200 = smul.u32 8, %s21
        %s201 = smul.u32 2, %s22
        %p203 = scmp.eq.s32.totalorder %s22, 0
        // Predicated region
        $region33: #{tpu_custom_call.1} parent=31 // pred_check
          %p204 = pneg %p203
        $region34: #{tpu_custom_call.1} parent=31 // pred_check_branch
          %206 = sbr.rel (%p204) target = $region36
        $region35: #{tpu_custom_call.1} parent=31 // pred_region
          %207 = vst [vmem:[%s189] sm:$0xff] 0.0
          %208 = vst [vmem:[%s189 + $0x8] sm:$0xff] 0.0
        $region36: #{tpu_custom_call.1} parent=31 // pred_fallthru
          _
        %v209 = vld [vmem:[%s199] sm:$0xf]
        %v210 = vld [vmem:[%s1] sm:$0xf]
        %v211 = vld [vmem:[%s2] sm:$0x3]
        %v213 = vperm.slane %v211, 0
        %v214 = vperm.slane %v211, 1
        %218 = vst [vmem:[#allocation1] ss:$4 sm:$0xff] %v209
        %v219 = vld.sshfl [vmem:[#allocation1] sm:$0xff pattern:$0x73625140]
        %v220 = vld.sshfl [vmem:[#allocation1 + $0x8] sm:$0xff pattern:$0x73625140]
        %223 = vxpose.binary.xlu0.c.b16.start [1/16] %v220, %v219, 128
        %224 = vxpose.binary.xlu0.c.b16.cont [2/16] 0, 0, 128
        %225 = vxpose.binary.xlu0.c.b16.cont [3/16] 0, 0, 128
        %226 = vxpose.binary.xlu0.c.b16.cont [4/16] 0, 0, 128
        %227 = vxpose.binary.xlu0.c.b16.cont [5/16] 0, 0, 128
        %228 = vxpose.binary.xlu0.c.b16.cont [6/16] 0, 0, 128
        %229 = vxpose.binary.xlu0.c.b16.cont [7/16] 0, 0, 128
        %230 = vxpose.binary.xlu0.c.b16.end [8/16] 0, 0, 128
        %v231 = vpop.trf.xlu0
        %v232 = vpop.trf.xlu0
        %v233 = vpop.trf.xlu0
        %v234 = vpop.trf.xlu0
        %v235 = vpop.trf.xlu0
        %v236 = vpop.trf.xlu0
        %v237 = vpop.trf.xlu0
        %v238 = vpop.trf.xlu0
        %v239 = vpop.trf.xlu0
        %v240 = vpop.trf.xlu0
        %v241 = vpop.trf.xlu0
        %v242 = vpop.trf.xlu0
        %v243 = vpop.trf.xlu0
        %v244 = vpop.trf.xlu0
        %v245 = vpop.trf.xlu0
        %v246 = vpop.trf.xlu0
        %248 = vst [vmem:[#allocation1] ss:$4 sm:$0xff] %v210
        %v249 = vld.sshfl [vmem:[#allocation1] sm:$0xff pattern:$0x73625140]
        %v250 = vld.sshfl [vmem:[#allocation1 + $0x8] sm:$0xff pattern:$0x73625140]
        %vm251 = vcmask 23552
        %v253 = vsel %vm251, %v231, 0
        %v256 = vsel %vm251, %v233, 0
        %v259 = vsel %vm251, %v235, 0
        %v262 = vsel %vm251, %v237, 0
        %v265 = vsel %vm251, %v239, 0
        %v268 = vsel %vm251, %v241, 0
        %v271 = vsel %vm251, %v243, 0
        %v274 = vsel %vm251, %v245, 0
        %v277 = vsel %vm251, %v232, 0
        %v280 = vsel %vm251, %v234, 0
        %v283 = vsel %vm251, %v236, 0
        %v286 = vsel %vm251, %v238, 0
        %v289 = vsel %vm251, %v240, 0
        %v292 = vsel %vm251, %v242, 0
        %v295 = vsel %vm251, %v244, 0
        %v298 = vsel %vm251, %v246, 0
        %vm300 = vcmask 1040384
        %vm301 = vcmask 1041408
        %v302 = vsel %vm300, 4294967295, 65535
        %v303 = vsel %vm301, %v302, 0
        %v304 = vand.u32 %v249, %v303
        %v306 = vand.u32 %v250, %v303
        %308 = vmatpush.bf16.msra.mxu0 0
        %309 = vmatpush.bf16.msra.mxu0 0
        %310 = vmatpush.bf16.msra.mxu0 0
        %311 = vmatpush.bf16.msra.mxu0 0
        %312 = vmatpush.bf16.msra.mxu0 0
        %313 = vmatpush.bf16.msra.mxu0 0
        %314 = vmatpush.bf16.msra.mxu0 0
        %315 = vmatpush.bf16.msra.mxu0 %v304
        %316 = vmatmul.bf16.gmra.mxu0 %v253
        %v317 = vpop.f32.mrf.mxu0
        %v318 = vadd.f32 %v213, %v317
        %v319 = vpop.f32.mrf.mxu0
        %v320 = vadd.f32 %v213, %v319
        %321 = vmatmul.bf16.gmra.mxu0 %v256
        %v322 = vpop.f32.mrf.mxu0
        %v323 = vadd.f32 %v213, %v322
        %v324 = vpop.f32.mrf.mxu0
        %v325 = vadd.f32 %v213, %v324
        %326 = vmatmul.bf16.gmra.mxu0 %v259
        %v327 = vpop.f32.mrf.mxu0
        %v328 = vadd.f32 %v213, %v327
        %v329 = vpop.f32.mrf.mxu0
        %v330 = vadd.f32 %v213, %v329
        %331 = vmatmul.bf16.gmra.mxu0 %v262
        %v332 = vpop.f32.mrf.mxu0
        %v333 = vadd.f32 %v213, %v332
        %v334 = vpop.f32.mrf.mxu0
        %v335 = vadd.f32 %v213, %v334
        %336 = vmatmul.bf16.gmra.mxu0 %v265
        %v337 = vpop.f32.mrf.mxu0
        %v338 = vadd.f32 %v213, %v337
        %v339 = vpop.f32.mrf.mxu0
        %v340 = vadd.f32 %v213, %v339
        %341 = vmatmul.bf16.gmra.mxu0 %v268
        %v342 = vpop.f32.mrf.mxu0
        %v343 = vadd.f32 %v213, %v342
        %v344 = vpop.f32.mrf.mxu0
        %v345 = vadd.f32 %v213, %v344
        %346 = vmatmul.bf16.gmra.mxu0 %v271
        %v347 = vpop.f32.mrf.mxu0
        %v348 = vadd.f32 %v213, %v347
        %v349 = vpop.f32.mrf.mxu0
        %v350 = vadd.f32 %v213, %v349
        %351 = vmatmul.bf16.gmra.mxu0 %v274
        %v352 = vpop.f32.mrf.mxu0
        %v353 = vadd.f32 %v213, %v352
        %v354 = vpop.f32.mrf.mxu0
        %v355 = vadd.f32 %v213, %v354
        %356 = vmatmul.bf16.gmra.mxu0 %v277
        %v357 = vpop.f32.mrf.mxu0
        %v358 = vadd.f32 %v213, %v357
        %v359 = vpop.f32.mrf.mxu0
        %v360 = vadd.f32 %v213, %v359
        %361 = vmatmul.bf16.gmra.mxu0 %v280
        %v362 = vpop.f32.mrf.mxu0
        %v363 = vadd.f32 %v213, %v362
        %v364 = vpop.f32.mrf.mxu0
        %v365 = vadd.f32 %v213, %v364
        %366 = vmatmul.bf16.gmra.mxu0 %v283
        %v367 = vpop.f32.mrf.mxu0
        %v368 = vadd.f32 %v213, %v367
        %v369 = vpop.f32.mrf.mxu0
        %v370 = vadd.f32 %v213, %v369
        %371 = vmatmul.bf16.gmra.mxu0 %v286
        %v372 = vpop.f32.mrf.mxu0
        %v373 = vadd.f32 %v213, %v372
        %v374 = vpop.f32.mrf.mxu0
        %v375 = vadd.f32 %v213, %v374
        %376 = vmatmul.bf16.gmra.mxu0 %v289
        %v377 = vpop.f32.mrf.mxu0
        %v378 = vadd.f32 %v213, %v377
        %v379 = vpop.f32.mrf.mxu0
        %v380 = vadd.f32 %v213, %v379
        %381 = vmatmul.bf16.gmra.mxu0 %v292
        %v382 = vpop.f32.mrf.mxu0
        %v383 = vadd.f32 %v213, %v382
        %v384 = vpop.f32.mrf.mxu0
        %v385 = vadd.f32 %v213, %v384
        %386 = vmatmul.bf16.gmra.mxu0 %v295
        %v387 = vpop.f32.mrf.mxu0
        %v388 = vadd.f32 %v213, %v387
        %v389 = vpop.f32.mrf.mxu0
        %v390 = vadd.f32 %v213, %v389
        %391 = vmatmul.bf16.gmra.mxu0 %v298
        %v392 = vpop.f32.mrf.mxu0
        %v393 = vadd.f32 %v213, %v392
        %v394 = vpop.f32.mrf.mxu0
        %v395 = vadd.f32 %v213, %v394
        %396 = vdwg.mxu0
        %397 = vmatpush.bf16.msra.mxu0 0
        %398 = vmatpush.bf16.msra.mxu0 0
        %399 = vmatpush.bf16.msra.mxu0 0
        %400 = vmatpush.bf16.msra.mxu0 0
        %401 = vmatpush.bf16.msra.mxu0 0
        %402 = vmatpush.bf16.msra.mxu0 0
        %403 = vmatpush.bf16.msra.mxu0 0
        %404 = vmatpush.bf16.msra.mxu0 %v306
        %405 = vmatmul.bf16.gmra.mxu0 %v253
        %v406 = vpop.f32.mrf.mxu0
        %v407 = vadd.f32 %v214, %v406
        %v408 = vpop.f32.mrf.mxu0
        %v409 = vadd.f32 %v214, %v408
        %410 = vmatmul.bf16.gmra.mxu0 %v256
        %v411 = vpop.f32.mrf.mxu0
        %v412 = vadd.f32 %v214, %v411
        %v413 = vpop.f32.mrf.mxu0
        %v414 = vadd.f32 %v214, %v413
        %415 = vmatmul.bf16.gmra.mxu0 %v259
        %v416 = vpop.f32.mrf.mxu0
        %v417 = vadd.f32 %v214, %v416
        %v418 = vpop.f32.mrf.mxu0
        %v419 = vadd.f32 %v214, %v418
        %420 = vmatmul.bf16.gmra.mxu0 %v262
        %v421 = vpop.f32.mrf.mxu0
        %v422 = vadd.f32 %v214, %v421
        %v423 = vpop.f32.mrf.mxu0
        %v424 = vadd.f32 %v214, %v423
        %425 = vmatmul.bf16.gmra.mxu0 %v265
        %v426 = vpop.f32.mrf.mxu0
        %v427 = vadd.f32 %v214, %v426
        %v428 = vpop.f32.mrf.mxu0
        %v429 = vadd.f32 %v214, %v428
        %430 = vmatmul.bf16.gmra.mxu0 %v268
        %v431 = vpop.f32.mrf.mxu0
        %v432 = vadd.f32 %v214, %v431
        %v433 = vpop.f32.mrf.mxu0
        %v434 = vadd.f32 %v214, %v433
        %435 = vmatmul.bf16.gmra.mxu0 %v271
        %v436 = vpop.f32.mrf.mxu0
        %v437 = vadd.f32 %v214, %v436
        %v438 = vpop.f32.mrf.mxu0
        %v439 = vadd.f32 %v214, %v438
        %440 = vmatmul.bf16.gmra.mxu0 %v274
        %v441 = vpop.f32.mrf.mxu0
        %v442 = vadd.f32 %v214, %v441
        %v443 = vpop.f32.mrf.mxu0
        %v444 = vadd.f32 %v214, %v443
        %445 = vmatmul.bf16.gmra.mxu0 %v277
        %v446 = vpop.f32.mrf.mxu0
        %v447 = vadd.f32 %v214, %v446
        %v448 = vpop.f32.mrf.mxu0
        %v449 = vadd.f32 %v214, %v448
        %450 = vmatmul.bf16.gmra.mxu0 %v280
        %v451 = vpop.f32.mrf.mxu0
        %v452 = vadd.f32 %v214, %v451
        %v453 = vpop.f32.mrf.mxu0
        %v454 = vadd.f32 %v214, %v453
        %455 = vmatmul.bf16.gmra.mxu0 %v283
        %v456 = vpop.f32.mrf.mxu0
        %v457 = vadd.f32 %v214, %v456
        %v458 = vpop.f32.mrf.mxu0
        %v459 = vadd.f32 %v214, %v458
        %460 = vmatmul.bf16.gmra.mxu0 %v286
        %v461 = vpop.f32.mrf.mxu0
        %v462 = vadd.f32 %v214, %v461
        %v463 = vpop.f32.mrf.mxu0
        %v464 = vadd.f32 %v214, %v463
        %465 = vmatmul.bf16.gmra.mxu0 %v289
        %v466 = vpop.f32.mrf.mxu0
        %v467 = vadd.f32 %v214, %v466
        %v468 = vpop.f32.mrf.mxu0
        %v469 = vadd.f32 %v214, %v468
        %470 = vmatmul.bf16.gmra.mxu0 %v292
        %v471 = vpop.f32.mrf.mxu0
        %v472 = vadd.f32 %v214, %v471
        %v473 = vpop.f32.mrf.mxu0
        %v474 = vadd.f32 %v214, %v473
        %475 = vmatmul.bf16.gmra.mxu0 %v295
        %v476 = vpop.f32.mrf.mxu0
        %v477 = vadd.f32 %v214, %v476
        %v478 = vpop.f32.mrf.mxu0
        %v479 = vadd.f32 %v214, %v478
        %480 = vmatmul.bf16.gmra.mxu0 %v298
        %v481 = vpop.f32.mrf.mxu0
        %v482 = vadd.f32 %v214, %v481
        %v483 = vpop.f32.mrf.mxu0
        %v484 = vadd.f32 %v214, %v483
        %485 = vdwg.mxu0
        %v486 = vmax.f32 %v318, 0.0
        %v487 = vmax.f32 %v407, 0.0
        %v488 = vmax.f32 %v320, 0.0
        %v489 = vmax.f32 %v409, 0.0
        %v490 = vmax.f32 %v323, 0.0
        %v491 = vmax.f32 %v412, 0.0
        %v492 = vmax.f32 %v325, 0.0
        %v493 = vmax.f32 %v414, 0.0
        %v494 = vmax.f32 %v328, 0.0
        %v495 = vmax.f32 %v417, 0.0
        %v496 = vmax.f32 %v330, 0.0
        %v497 = vmax.f32 %v419, 0.0
        %v498 = vmax.f32 %v333, 0.0
        %v499 = vmax.f32 %v422, 0.0
        %v500 = vmax.f32 %v335, 0.0
        %v501 = vmax.f32 %v424, 0.0
        %v502 = vmax.f32 %v338, 0.0
        %v503 = vmax.f32 %v427, 0.0
        %v504 = vmax.f32 %v340, 0.0
        %v505 = vmax.f32 %v429, 0.0
        %v506 = vmax.f32 %v343, 0.0
        %v507 = vmax.f32 %v432, 0.0
        %v508 = vmax.f32 %v345, 0.0
        %v509 = vmax.f32 %v434, 0.0
        %v510 = vmax.f32 %v348, 0.0
        %v511 = vmax.f32 %v437, 0.0
        %v512 = vmax.f32 %v350, 0.0
        %v513 = vmax.f32 %v439, 0.0
        %v514 = vmax.f32 %v353, 0.0
        %v515 = vmax.f32 %v442, 0.0
        %v516 = vmax.f32 %v355, 0.0
        %v517 = vmax.f32 %v444, 0.0
        %v518 = vmax.f32 %v358, 0.0
        %v519 = vmax.f32 %v447, 0.0
        %v520 = vmax.f32 %v360, 0.0
        %v521 = vmax.f32 %v449, 0.0
        %v522 = vmax.f32 %v363, 0.0
        %v523 = vmax.f32 %v452, 0.0
        %v524 = vmax.f32 %v365, 0.0
        %v525 = vmax.f32 %v454, 0.0
        %v526 = vmax.f32 %v368, 0.0
        %v527 = vmax.f32 %v457, 0.0
        %v528 = vmax.f32 %v370, 0.0
        %v529 = vmax.f32 %v459, 0.0
        %v530 = vmax.f32 %v373, 0.0
        %v531 = vmax.f32 %v462, 0.0
        %v532 = vmax.f32 %v375, 0.0
        %v533 = vmax.f32 %v464, 0.0
        %v534 = vmax.f32 %v378, 0.0
        %v535 = vmax.f32 %v467, 0.0
        %v536 = vmax.f32 %v380, 0.0
        %v537 = vmax.f32 %v469, 0.0
        %v538 = vmax.f32 %v383, 0.0
        %v539 = vmax.f32 %v472, 0.0
        %v540 = vmax.f32 %v385, 0.0
        %v541 = vmax.f32 %v474, 0.0
        %v542 = vmax.f32 %v388, 0.0
        %v543 = vmax.f32 %v477, 0.0
        %v544 = vmax.f32 %v390, 0.0
        %v545 = vmax.f32 %v479, 0.0
        %v546 = vmax.f32 %v393, 0.0
        %v547 = vmax.f32 %v482, 0.0
        %v548 = vmax.f32 %v395, 0.0
        %v549 = vmax.f32 %v484, 0.0
        %v550 = vadd.f32 %v486, %v488
        %v551 = vadd.f32 %v550, %v490
        %v552 = vadd.f32 %v551, %v492
        %v553 = vadd.f32 %v552, %v494
        %v554 = vadd.f32 %v553, %v496
        %v555 = vadd.f32 %v554, %v498
        %v556 = vadd.f32 %v555, %v500
        %v557 = vadd.f32 %v556, %v502
        %v558 = vadd.f32 %v557, %v504
        %v559 = vadd.f32 %v558, %v506
        %v560 = vadd.f32 %v559, %v508
        %v561 = vadd.f32 %v560, %v510
        %v562 = vadd.f32 %v561, %v512
        %v563 = vadd.f32 %v562, %v514
        %v564 = vadd.f32 %v563, %v516
        %v565 = vadd.f32 %v564, %v518
        %v566 = vadd.f32 %v565, %v520
        %v567 = vadd.f32 %v566, %v522
        %v568 = vadd.f32 %v567, %v524
        %v569 = vadd.f32 %v568, %v526
        %v570 = vadd.f32 %v569, %v528
        %v571 = vadd.f32 %v570, %v530
        %v572 = vadd.f32 %v571, %v532
        %v573 = vadd.f32 %v572, %v534
        %v574 = vadd.f32 %v573, %v536
        %v575 = vadd.f32 %v574, %v538
        %v576 = vadd.f32 %v575, %v540
        %v577 = vadd.f32 %v576, %v542
        %v578 = vadd.f32 %v577, %v544
        %v579 = vadd.f32 %v578, %v546
        %v580 = vadd.f32 %v579, %v548
        %v581 = vrot.slane %v580, 4
        %v582 = vadd.f32 %v580, %v581
        %v583 = vrot.slane %v582, 2
        %v584 = vadd.f32 %v582, %v583
        %v585 = vrot.slane %v584, 1
        %v586 = vadd.f32 %v584, %v585
        %v587 = vadd.f32 %v487, %v489
        %v588 = vadd.f32 %v587, %v491
        %v589 = vadd.f32 %v588, %v493
        %v590 = vadd.f32 %v589, %v495
        %v591 = vadd.f32 %v590, %v497
        %v592 = vadd.f32 %v591, %v499
        %v593 = vadd.f32 %v592, %v501
        %v594 = vadd.f32 %v593, %v503
        %v595 = vadd.f32 %v594, %v505
        %v596 = vadd.f32 %v595, %v507
        %v597 = vadd.f32 %v596, %v509
        %v598 = vadd.f32 %v597, %v511
        %v599 = vadd.f32 %v598, %v513
        %v600 = vadd.f32 %v599, %v515
        %v601 = vadd.f32 %v600, %v517
        %v602 = vadd.f32 %v601, %v519
        %v603 = vadd.f32 %v602, %v521
        %v604 = vadd.f32 %v603, %v523
        %v605 = vadd.f32 %v604, %v525
        %v606 = vadd.f32 %v605, %v527
        %v607 = vadd.f32 %v606, %v529
        %v608 = vadd.f32 %v607, %v531
        %v609 = vadd.f32 %v608, %v533
        %v610 = vadd.f32 %v609, %v535
        %v611 = vadd.f32 %v610, %v537
        %v612 = vadd.f32 %v611, %v539
        %v613 = vadd.f32 %v612, %v541
        %v614 = vadd.f32 %v613, %v543
        %v615 = vadd.f32 %v614, %v545
        %v616 = vadd.f32 %v615, %v547
        %v617 = vadd.f32 %v616, %v549
        %v618 = vrot.slane %v617, 4
        %v619 = vadd.f32 %v617, %v618
        %v620 = vrot.slane %v619, 2
        %v621 = vadd.f32 %v619, %v620
        %v622 = vrot.slane %v621, 1
        %v623 = vadd.f32 %v621, %v622
        %s624 = scalar_lea.vmem %s199, 4
        %v625 = vld [vmem:[%s624] sm:$0xf]
        %627 = vst [vmem:[#allocation1] ss:$4 sm:$0xff] %v625
        %v628 = vld.sshfl [vmem:[#allocation1] sm:$0xff pattern:$0x73625140]
        %v629 = vld.sshfl [vmem:[#allocation1 + $0x8] sm:$0xff pattern:$0x73625140]
        %632 = vxpose.binary.xlu0.c.b16.start [1/16] %v629, %v628, 128
        %633 = vxpose.binary.xlu0.c.b16.cont [2/16] 0, 0, 128
        %634 = vxpose.binary.xlu0.c.b16.cont [3/16] 0, 0, 128
        %635 = vxpose.binary.xlu0.c.b16.cont [4/16] 0, 0, 128
        %636 = vxpose.binary.xlu0.c.b16.cont [5/16] 0, 0, 128
        %637 = vxpose.binary.xlu0.c.b16.cont [6/16] 0, 0, 128
        %638 = vxpose.binary.xlu0.c.b16.cont [7/16] 0, 0, 128
        %639 = vxpose.binary.xlu0.c.b16.end [8/16] 0, 0, 128
        %v640 = vpop.trf.xlu0
        %v641 = vpop.trf.xlu0
        %v642 = vpop.trf.xlu0
        %v643 = vpop.trf.xlu0
        %v644 = vpop.trf.xlu0
        %v645 = vpop.trf.xlu0
        %v646 = vpop.trf.xlu0
        %v647 = vpop.trf.xlu0
        %v648 = vpop.trf.xlu0
        %v649 = vpop.trf.xlu0
        %v650 = vpop.trf.xlu0
        %v651 = vpop.trf.xlu0
        %v652 = vpop.trf.xlu0
        %v653 = vpop.trf.xlu0
        %v654 = vpop.trf.xlu0
        %v655 = vpop.trf.xlu0
        %656 = vst [vmem:[#allocation1] ss:$4 sm:$0xff] %v210
        %v657 = vld.sshfl [vmem:[#allocation1] sm:$0xff pattern:$0x73625140]
        %v658 = vld.sshfl [vmem:[#allocation1 + $0x8] sm:$0xff pattern:$0x73625140]
        %v660 = vsel %vm251, %v640, 0
        %v663 = vsel %vm251, %v642, 0
        %v666 = vsel %vm251, %v644, 0
        %v669 = vsel %vm251, %v646, 0
        %v672 = vsel %vm251, %v648, 0
        %v675 = vsel %vm251, %v650, 0
        %v678 = vsel %vm251, %v652, 0
        %v681 = vsel %vm251, %v654, 0
        %v684 = vsel %vm251, %v641, 0
        %v687 = vsel %vm251, %v643, 0
        %v690 = vsel %vm251, %v645, 0
        %v693 = vsel %vm251, %v647, 0
        %v696 = vsel %vm251, %v649, 0
        %v699 = vsel %vm251, %v651, 0
        %v702 = vsel %vm251, %v653, 0
        %v705 = vsel %vm251, %v655, 0
        %v707 = vand.u32 %v657, %v303
        %v709 = vand.u32 %v658, %v303
        %711 = vmatpush.bf16.msra.mxu0 0
        %712 = vmatpush.bf16.msra.mxu0 0
        %713 = vmatpush.bf16.msra.mxu0 0
        %714 = vmatpush.bf16.msra.mxu0 0
        %715 = vmatpush.bf16.msra.mxu0 0
        %716 = vmatpush.bf16.msra.mxu0 0
        %717 = vmatpush.bf16.msra.mxu0 0
        %718 = vmatpush.bf16.msra.mxu0 %v707
        %719 = vmatmul.bf16.gmra.mxu0 %v660
        %v720 = vpop.f32.mrf.mxu0
        %v721 = vadd.f32 %v213, %v720
        %v722 = vpop.f32.mrf.mxu0
        %v723 = vadd.f32 %v213, %v722
        %724 = vmatmul.bf16.gmra.mxu0 %v663
        %v725 = vpop.f32.mrf.mxu0
        %v726 = vadd.f32 %v213, %v725
        %v727 = vpop.f32.mrf.mxu0
        %v728 = vadd.f32 %v213, %v727
        %729 = vmatmul.bf16.gmra.mxu0 %v666
        %v730 = vpop.f32.mrf.mxu0
        %v731 = vadd.f32 %v213, %v730
        %v732 = vpop.f32.mrf.mxu0
        %v733 = vadd.f32 %v213, %v732
        %734 = vmatmul.bf16.gmra.mxu0 %v669
        %v735 = vpop.f32.mrf.mxu0
        %v736 = vadd.f32 %v213, %v735
        %v737 = vpop.f32.mrf.mxu0
        %v738 = vadd.f32 %v213, %v737
        %739 = vmatmul.bf16.gmra.mxu0 %v672
        %v740 = vpop.f32.mrf.mxu0
        %v741 = vadd.f32 %v213, %v740
        %v742 = vpop.f32.mrf.mxu0
        %v743 = vadd.f32 %v213, %v742
        %744 = vmatmul.bf16.gmra.mxu0 %v675
        %v745 = vpop.f32.mrf.mxu0
        %v746 = vadd.f32 %v213, %v745
        %v747 = vpop.f32.mrf.mxu0
        %v748 = vadd.f32 %v213, %v747
        %749 = vmatmul.bf16.gmra.mxu0 %v678
        %v750 = vpop.f32.mrf.mxu0
        %v751 = vadd.f32 %v213, %v750
        %v752 = vpop.f32.mrf.mxu0
        %v753 = vadd.f32 %v213, %v752
        %754 = vmatmul.bf16.gmra.mxu0 %v681
        %v755 = vpop.f32.mrf.mxu0
        %v756 = vadd.f32 %v213, %v755
        %v757 = vpop.f32.mrf.mxu0
        %v758 = vadd.f32 %v213, %v757
        %759 = vmatmul.bf16.gmra.mxu0 %v684
        %v760 = vpop.f32.mrf.mxu0
        %v761 = vadd.f32 %v213, %v760
        %v762 = vpop.f32.mrf.mxu0
        %v763 = vadd.f32 %v213, %v762
        %764 = vmatmul.bf16.gmra.mxu0 %v687
        %v765 = vpop.f32.mrf.mxu0
        %v766 = vadd.f32 %v213, %v765
        %v767 = vpop.f32.mrf.mxu0
        %v768 = vadd.f32 %v213, %v767
        %769 = vmatmul.bf16.gmra.mxu0 %v690
        %v770 = vpop.f32.mrf.mxu0
        %v771 = vadd.f32 %v213, %v770
        %v772 = vpop.f32.mrf.mxu0
        %v773 = vadd.f32 %v213, %v772
        %774 = vmatmul.bf16.gmra.mxu0 %v693
        %v775 = vpop.f32.mrf.mxu0
        %v776 = vadd.f32 %v213, %v775
        %v777 = vpop.f32.mrf.mxu0
        %v778 = vadd.f32 %v213, %v777
        %779 = vmatmul.bf16.gmra.mxu0 %v696
        %v780 = vpop.f32.mrf.mxu0
        %v781 = vadd.f32 %v213, %v780
        %v782 = vpop.f32.mrf.mxu0
        %v783 = vadd.f32 %v213, %v782
        %784 = vmatmul.bf16.gmra.mxu0 %v699
        %v785 = vpop.f32.mrf.mxu0
        %v786 = vadd.f32 %v213, %v785
        %v787 = vpop.f32.mrf.mxu0
        %v788 = vadd.f32 %v213, %v787
        %789 = vmatmul.bf16.gmra.mxu0 %v702
        %v790 = vpop.f32.mrf.mxu0
        %v791 = vadd.f32 %v213, %v790
        %v792 = vpop.f32.mrf.mxu0
        %v793 = vadd.f32 %v213, %v792
        %794 = vmatmul.bf16.gmra.mxu0 %v705
        %v795 = vpop.f32.mrf.mxu0
        %v796 = vadd.f32 %v213, %v795
        %v797 = vpop.f32.mrf.mxu0
        %v798 = vadd.f32 %v213, %v797
        %799 = vdwg.mxu0
        %800 = vmatpush.bf16.msra.mxu0 0
        %801 = vmatpush.bf16.msra.mxu0 0
        %802 = vmatpush.bf16.msra.mxu0 0
        %803 = vmatpush.bf16.msra.mxu0 0
        %804 = vmatpush.bf16.msra.mxu0 0
        %805 = vmatpush.bf16.msra.mxu0 0
        %806 = vmatpush.bf16.msra.mxu0 0
        %807 = vmatpush.bf16.msra.mxu0 %v709
        %808 = vmatmul.bf16.gmra.mxu0 %v660
        %v809 = vpop.f32.mrf.mxu0
        %v810 = vadd.f32 %v214, %v809
        %v811 = vpop.f32.mrf.mxu0
        %v812 = vadd.f32 %v214, %v811
        %813 = vmatmul.bf16.gmra.mxu0 %v663
        %v814 = vpop.f32.mrf.mxu0
        %v815 = vadd.f32 %v214, %v814
        %v816 = vpop.f32.mrf.mxu0
        %v817 = vadd.f32 %v214, %v816
        %818 = vmatmul.bf16.gmra.mxu0 %v666
        %v819 = vpop.f32.mrf.mxu0
        %v820 = vadd.f32 %v214, %v819
        %v821 = vpop.f32.mrf.mxu0
        %v822 = vadd.f32 %v214, %v821
        %823 = vmatmul.bf16.gmra.mxu0 %v669
        %v824 = vpop.f32.mrf.mxu0
        %v825 = vadd.f32 %v214, %v824
        %v826 = vpop.f32.mrf.mxu0
        %v827 = vadd.f32 %v214, %v826
        %828 = vmatmul.bf16.gmra.mxu0 %v672
        %v829 = vpop.f32.mrf.mxu0
        %v830 = vadd.f32 %v214, %v829
        %v831 = vpop.f32.mrf.mxu0
        %v832 = vadd.f32 %v214, %v831
        %833 = vmatmul.bf16.gmra.mxu0 %v675
        %v834 = vpop.f32.mrf.mxu0
        %v835 = vadd.f32 %v214, %v834
        %v836 = vpop.f32.mrf.mxu0
        %v837 = vadd.f32 %v214, %v836
        %838 = vmatmul.bf16.gmra.mxu0 %v678
        %v839 = vpop.f32.mrf.mxu0
        %v840 = vadd.f32 %v214, %v839
        %v841 = vpop.f32.mrf.mxu0
        %v842 = vadd.f32 %v214, %v841
        %843 = vmatmul.bf16.gmra.mxu0 %v681
        %v844 = vpop.f32.mrf.mxu0
        %v845 = vadd.f32 %v214, %v844
        %v846 = vpop.f32.mrf.mxu0
        %v847 = vadd.f32 %v214, %v846
        %848 = vmatmul.bf16.gmra.mxu0 %v684
        %v849 = vpop.f32.mrf.mxu0
        %v850 = vadd.f32 %v214, %v849
        %v851 = vpop.f32.mrf.mxu0
        %v852 = vadd.f32 %v214, %v851
        %853 = vmatmul.bf16.gmra.mxu0 %v687
        %v854 = vpop.f32.mrf.mxu0
        %v855 = vadd.f32 %v214, %v854
        %v856 = vpop.f32.mrf.mxu0
        %v857 = vadd.f32 %v214, %v856
        %858 = vmatmul.bf16.gmra.mxu0 %v690
        %v859 = vpop.f32.mrf.mxu0
        %v860 = vadd.f32 %v214, %v859
        %v861 = vpop.f32.mrf.mxu0
        %v862 = vadd.f32 %v214, %v861
        %863 = vmatmul.bf16.gmra.mxu0 %v693
        %v864 = vpop.f32.mrf.mxu0
        %v865 = vadd.f32 %v214, %v864
        %v866 = vpop.f32.mrf.mxu0
        %v867 = vadd.f32 %v214, %v866
        %868 = vmatmul.bf16.gmra.mxu0 %v696
        %v869 = vpop.f32.mrf.mxu0
        %v870 = vadd.f32 %v214, %v869
        %v871 = vpop.f32.mrf.mxu0
        %v872 = vadd.f32 %v214, %v871
        %873 = vmatmul.bf16.gmra.mxu0 %v699
        %v874 = vpop.f32.mrf.mxu0
        %v875 = vadd.f32 %v214, %v874
        %v876 = vpop.f32.mrf.mxu0
        %v877 = vadd.f32 %v214, %v876
        %878 = vmatmul.bf16.gmra.mxu0 %v702
        %v879 = vpop.f32.mrf.mxu0
        %v880 = vadd.f32 %v214, %v879
        %v881 = vpop.f32.mrf.mxu0
        %v882 = vadd.f32 %v214, %v881
        %883 = vmatmul.bf16.gmra.mxu0 %v705
        %v884 = vpop.f32.mrf.mxu0
        %v885 = vadd.f32 %v214, %v884
        %v886 = vpop.f32.mrf.mxu0
        %v887 = vadd.f32 %v214, %v886
        %888 = vdwg.mxu0
        %v889 = vmax.f32 %v721, 0.0
        %v890 = vmax.f32 %v810, 0.0
        %v891 = vmax.f32 %v723, 0.0
        %v892 = vmax.f32 %v812, 0.0
        %v893 = vmax.f32 %v726, 0.0
        %v894 = vmax.f32 %v815, 0.0
        %v895 = vmax.f32 %v728, 0.0
        %v896 = vmax.f32 %v817, 0.0
        %v897 = vmax.f32 %v731, 0.0
        %v898 = vmax.f32 %v820, 0.0
        %v899 = vmax.f32 %v733, 0.0
        %v900 = vmax.f32 %v822, 0.0
        %v901 = vmax.f32 %v736, 0.0
        %v902 = vmax.f32 %v825, 0.0
        %v903 = vmax.f32 %v738, 0.0
        %v904 = vmax.f32 %v827, 0.0
        %v905 = vmax.f32 %v741, 0.0
        %v906 = vmax.f32 %v830, 0.0
        %v907 = vmax.f32 %v743, 0.0
        %v908 = vmax.f32 %v832, 0.0
        %v909 = vmax.f32 %v746, 0.0
        %v910 = vmax.f32 %v835, 0.0
        %v911 = vmax.f32 %v748, 0.0
        %v912 = vmax.f32 %v837, 0.0
        %v913 = vmax.f32 %v751, 0.0
        %v914 = vmax.f32 %v840, 0.0
        %v915 = vmax.f32 %v753, 0.0
        %v916 = vmax.f32 %v842, 0.0
        %v917 = vmax.f32 %v756, 0.0
        %v918 = vmax.f32 %v845, 0.0
        %v919 = vmax.f32 %v758, 0.0
        %v920 = vmax.f32 %v847, 0.0
        %v921 = vmax.f32 %v761, 0.0
        %v922 = vmax.f32 %v850, 0.0
        %v923 = vmax.f32 %v763, 0.0
        %v924 = vmax.f32 %v852, 0.0
        %v925 = vmax.f32 %v766, 0.0
        %v926 = vmax.f32 %v855, 0.0
        %v927 = vmax.f32 %v768, 0.0
        %v928 = vmax.f32 %v857, 0.0
        %v929 = vmax.f32 %v771, 0.0
        %v930 = vmax.f32 %v860, 0.0
        %v931 = vmax.f32 %v773, 0.0
        %v932 = vmax.f32 %v862, 0.0
        %v933 = vmax.f32 %v776, 0.0
        %v934 = vmax.f32 %v865, 0.0
        %v935 = vmax.f32 %v778, 0.0
        %v936 = vmax.f32 %v867, 0.0
        %v937 = vmax.f32 %v781, 0.0
        %v938 = vmax.f32 %v870, 0.0
        %v939 = vmax.f32 %v783, 0.0
        %v940 = vmax.f32 %v872, 0.0
        %v941 = vmax.f32 %v786, 0.0
        %v942 = vmax.f32 %v875, 0.0
        %v943 = vmax.f32 %v788, 0.0
        %v944 = vmax.f32 %v877, 0.0
        %v945 = vmax.f32 %v791, 0.0
        %v946 = vmax.f32 %v880, 0.0
        %v947 = vmax.f32 %v793, 0.0
        %v948 = vmax.f32 %v882, 0.0
        %v949 = vmax.f32 %v796, 0.0
        %v950 = vmax.f32 %v885, 0.0
        %v951 = vmax.f32 %v798, 0.0
        %v952 = vmax.f32 %v887, 0.0
        %v953 = vadd.f32 %v889, %v891
        %v954 = vadd.f32 %v953, %v893
        %v955 = vadd.f32 %v954, %v895
        %v956 = vadd.f32 %v955, %v897
        %v957 = vadd.f32 %v956, %v899
        %v958 = vadd.f32 %v957, %v901
        %v959 = vadd.f32 %v958, %v903
        %v960 = vadd.f32 %v959, %v905
        %v961 = vadd.f32 %v960, %v907
        %v962 = vadd.f32 %v961, %v909
        %v963 = vadd.f32 %v962, %v911
        %v964 = vadd.f32 %v963, %v913
        %v965 = vadd.f32 %v964, %v915
        %v966 = vadd.f32 %v965, %v917
        %v967 = vadd.f32 %v966, %v919
        %v968 = vadd.f32 %v967, %v921
        %v969 = vadd.f32 %v968, %v923
        %v970 = vadd.f32 %v969, %v925
        %v971 = vadd.f32 %v970, %v927
        %v972 = vadd.f32 %v971, %v929
        %v973 = vadd.f32 %v972, %v931
        %v974 = vadd.f32 %v973, %v933
        %v975 = vadd.f32 %v974, %v935
        %v976 = vadd.f32 %v975, %v937
        %v977 = vadd.f32 %v976, %v939
        %v978 = vadd.f32 %v977, %v941
        %v979 = vadd.f32 %v978, %v943
        %v980 = vadd.f32 %v979, %v945
        %v981 = vadd.f32 %v980, %v947
        %v982 = vadd.f32 %v981, %v949
        %v983 = vadd.f32 %v982, %v951
        %v984 = vrot.slane %v983, 4
        %v985 = vadd.f32 %v983, %v984
        %v986 = vrot.slane %v985, 2
        %v987 = vadd.f32 %v985, %v986
        %v988 = vrot.slane %v987, 1
        %v989 = vadd.f32 %v987, %v988
        %v990 = vadd.f32 %v890, %v892
        %v991 = vadd.f32 %v990, %v894
        %v992 = vadd.f32 %v991, %v896
        %v993 = vadd.f32 %v992, %v898
        %v994 = vadd.f32 %v993, %v900
        %v995 = vadd.f32 %v994, %v902
        %v996 = vadd.f32 %v995, %v904
        %v997 = vadd.f32 %v996, %v906
        %v998 = vadd.f32 %v997, %v908
        %v999 = vadd.f32 %v998, %v910
        %v1000 = vadd.f32 %v999, %v912
        %v1001 = vadd.f32 %v1000, %v914
        %v1002 = vadd.f32 %v1001, %v916
        %v1003 = vadd.f32 %v1002, %v918
        %v1004 = vadd.f32 %v1003, %v920
        %v1005 = vadd.f32 %v1004, %v922
        %v1006 = vadd.f32 %v1005, %v924
        %v1007 = vadd.f32 %v1006, %v926
        %v1008 = vadd.f32 %v1007, %v928
        %v1009 = vadd.f32 %v1008, %v930
        %v1010 = vadd.f32 %v1009, %v932
        %v1011 = vadd.f32 %v1010, %v934
        %v1012 = vadd.f32 %v1011, %v936
        %v1013 = vadd.f32 %v1012, %v938
        %v1014 = vadd.f32 %v1013, %v940
        %v1015 = vadd.f32 %v1014, %v942
        %v1016 = vadd.f32 %v1015, %v944
        %v1017 = vadd.f32 %v1016, %v946
        %v1018 = vadd.f32 %v1017, %v948
        %v1019 = vadd.f32 %v1018, %v950
        %v1020 = vadd.f32 %v1019, %v952
        %v1021 = vrot.slane %v1020, 4
        %v1022 = vadd.f32 %v1020, %v1021
        %v1023 = vrot.slane %v1022, 2
        %v1024 = vadd.f32 %v1022, %v1023
        %v1025 = vrot.slane %v1024, 1
        %v1026 = vadd.f32 %v1024, %v1025
        %s1027 = scalar_lea.vmem %s199, 8
        %v1028 = vld [vmem:[%s1027] sm:$0xf]
        %1030 = vst [vmem:[#allocation1] ss:$4 sm:$0xff] %v1028
        %v1031 = vld.sshfl [vmem:[#allocation1] sm:$0xff pattern:$0x73625140]
        %v1032 = vld.sshfl [vmem:[#allocation1 + $0x8] sm:$0xff pattern:$0x73625140]
        %1035 = vxpose.binary.xlu0.c.b16.start [1/16] %v1032, %v1031, 128
        %1036 = vxpose.binary.xlu0.c.b16.cont [2/16] 0, 0, 128
        %1037 = vxpose.binary.xlu0.c.b16.cont [3/16] 0, 0, 128
        %1038 = vxpose.binary.xlu0.c.b16.cont [4/16] 0, 0, 128
        %1039 = vxpose.binary.xlu0.c.b16.cont [5/16] 0, 0, 128
        %1040 = vxpose.binary.xlu0.c.b16.cont [6/16] 0, 0, 128
        %1041 = vxpose.binary.xlu0.c.b16.cont [7/16] 0, 0, 128
        %1042 = vxpose.binary.xlu0.c.b16.end [8/16] 0, 0, 128
        %v1043 = vpop.trf.xlu0
        %v1044 = vpop.trf.xlu0
        %v1045 = vpop.trf.xlu0
        %v1046 = vpop.trf.xlu0
        %v1047 = vpop.trf.xlu0
        %v1048 = vpop.trf.xlu0
        %v1049 = vpop.trf.xlu0
        %v1050 = vpop.trf.xlu0
        %v1051 = vpop.trf.xlu0
        %v1052 = vpop.trf.xlu0
        %v1053 = vpop.trf.xlu0
        %v1054 = vpop.trf.xlu0
        %v1055 = vpop.trf.xlu0
        %v1056 = vpop.trf.xlu0
        %v1057 = vpop.trf.xlu0
        %v1058 = vpop.trf.xlu0
        %1059 = vst [vmem:[#allocation1] ss:$4 sm:$0xff] %v210
        %v1060 = vld.sshfl [vmem:[#allocation1] sm:$0xff pattern:$0x73625140]
        %v1061 = vld.sshfl [vmem:[#allocation1 + $0x8] sm:$0xff pattern:$0x73625140]
        %v1063 = vsel %vm251, %v1043, 0
        %v1066 = vsel %vm251, %v1045, 0
        %v1069 = vsel %vm251, %v1047, 0
        %v1072 = vsel %vm251, %v1049, 0
        %v1075 = vsel %vm251, %v1051, 0
        %v1078 = vsel %vm251, %v1053, 0
        %v1081 = vsel %vm251, %v1055, 0
        %v1084 = vsel %vm251, %v1057, 0
        %v1087 = vsel %vm251, %v1044, 0
        %v1090 = vsel %vm251, %v1046, 0
        %v1093 = vsel %vm251, %v1048, 0
        %v1096 = vsel %vm251, %v1050, 0
        %v1099 = vsel %vm251, %v1052, 0
        %v1102 = vsel %vm251, %v1054, 0
        %v1105 = vsel %vm251, %v1056, 0
        %v1108 = vsel %vm251, %v1058, 0
        %v1110 = vand.u32 %v1060, %v303
        %v1112 = vand.u32 %v1061, %v303
        %1114 = vmatpush.bf16.msra.mxu0 0
        %1115 = vmatpush.bf16.msra.mxu0 0
        %1116 = vmatpush.bf16.msra.mxu0 0
        %1117 = vmatpush.bf16.msra.mxu0 0
        %1118 = vmatpush.bf16.msra.mxu0 0
        %1119 = vmatpush.bf16.msra.mxu0 0
        %1120 = vmatpush.bf16.msra.mxu0 0
        %1121 = vmatpush.bf16.msra.mxu0 %v1110
        %1122 = vmatmul.bf16.gmra.mxu0 %v1063
        %v1123 = vpop.f32.mrf.mxu0
        %v1124 = vadd.f32 %v213, %v1123
        %v1125 = vpop.f32.mrf.mxu0
        %v1126 = vadd.f32 %v213, %v1125
        %1127 = vmatmul.bf16.gmra.mxu0 %v1066
        %v1128 = vpop.f32.mrf.mxu0
        %v1129 = vadd.f32 %v213, %v1128
        %v1130 = vpop.f32.mrf.mxu0
        %v1131 = vadd.f32 %v213, %v1130
        %1132 = vmatmul.bf16.gmra.mxu0 %v1069
        %v1133 = vpop.f32.mrf.mxu0
        %v1134 = vadd.f32 %v213, %v1133
        %v1135 = vpop.f32.mrf.mxu0
        %v1136 = vadd.f32 %v213, %v1135
        %1137 = vmatmul.bf16.gmra.mxu0 %v1072
        %v1138 = vpop.f32.mrf.mxu0
        %v1139 = vadd.f32 %v213, %v1138
        %v1140 = vpop.f32.mrf.mxu0
        %v1141 = vadd.f32 %v213, %v1140
        %1142 = vmatmul.bf16.gmra.mxu0 %v1075
        %v1143 = vpop.f32.mrf.mxu0
        %v1144 = vadd.f32 %v213, %v1143
        %v1145 = vpop.f32.mrf.mxu0
        %v1146 = vadd.f32 %v213, %v1145
        %1147 = vmatmul.bf16.gmra.mxu0 %v1078
        %v1148 = vpop.f32.mrf.mxu0
        %v1149 = vadd.f32 %v213, %v1148
        %v1150 = vpop.f32.mrf.mxu0
        %v1151 = vadd.f32 %v213, %v1150
        %1152 = vmatmul.bf16.gmra.mxu0 %v1081
        %v1153 = vpop.f32.mrf.mxu0
        %v1154 = vadd.f32 %v213, %v1153
        %v1155 = vpop.f32.mrf.mxu0
        %v1156 = vadd.f32 %v213, %v1155
        %1157 = vmatmul.bf16.gmra.mxu0 %v1084
        %v1158 = vpop.f32.mrf.mxu0
        %v1159 = vadd.f32 %v213, %v1158
        %v1160 = vpop.f32.mrf.mxu0
        %v1161 = vadd.f32 %v213, %v1160
        %1162 = vmatmul.bf16.gmra.mxu0 %v1087
        %v1163 = vpop.f32.mrf.mxu0
        %v1164 = vadd.f32 %v213, %v1163
        %v1165 = vpop.f32.mrf.mxu0
        %v1166 = vadd.f32 %v213, %v1165
        %1167 = vmatmul.bf16.gmra.mxu0 %v1090
        %v1168 = vpop.f32.mrf.mxu0
        %v1169 = vadd.f32 %v213, %v1168
        %v1170 = vpop.f32.mrf.mxu0
        %v1171 = vadd.f32 %v213, %v1170
        %1172 = vmatmul.bf16.gmra.mxu0 %v1093
        %v1173 = vpop.f32.mrf.mxu0
        %v1174 = vadd.f32 %v213, %v1173
        %v1175 = vpop.f32.mrf.mxu0
        %v1176 = vadd.f32 %v213, %v1175
        %1177 = vmatmul.bf16.gmra.mxu0 %v1096
        %v1178 = vpop.f32.mrf.mxu0
        %v1179 = vadd.f32 %v213, %v1178
        %v1180 = vpop.f32.mrf.mxu0
        %v1181 = vadd.f32 %v213, %v1180
        %1182 = vmatmul.bf16.gmra.mxu0 %v1099
        %v1183 = vpop.f32.mrf.mxu0
        %v1184 = vadd.f32 %v213, %v1183
        %v1185 = vpop.f32.mrf.mxu0
        %v1186 = vadd.f32 %v213, %v1185
        %1187 = vmatmul.bf16.gmra.mxu0 %v1102
        %v1188 = vpop.f32.mrf.mxu0
        %v1189 = vadd.f32 %v213, %v1188
        %v1190 = vpop.f32.mrf.mxu0
        %v1191 = vadd.f32 %v213, %v1190
        %1192 = vmatmul.bf16.gmra.mxu0 %v1105
        %v1193 = vpop.f32.mrf.mxu0
        %v1194 = vadd.f32 %v213, %v1193
        %v1195 = vpop.f32.mrf.mxu0
        %v1196 = vadd.f32 %v213, %v1195
        %1197 = vmatmul.bf16.gmra.mxu0 %v1108
        %v1198 = vpop.f32.mrf.mxu0
        %v1199 = vadd.f32 %v213, %v1198
        %v1200 = vpop.f32.mrf.mxu0
        %v1201 = vadd.f32 %v213, %v1200
        %1202 = vdwg.mxu0
        %1203 = vmatpush.bf16.msra.mxu0 0
        %1204 = vmatpush.bf16.msra.mxu0 0
        %1205 = vmatpush.bf16.msra.mxu0 0
        %1206 = vmatpush.bf16.msra.mxu0 0
        %1207 = vmatpush.bf16.msra.mxu0 0
        %1208 = vmatpush.bf16.msra.mxu0 0
        %1209 = vmatpush.bf16.msra.mxu0 0
        %1210 = vmatpush.bf16.msra.mxu0 %v1112
        %1211 = vmatmul.bf16.gmra.mxu0 %v1063
        %v1212 = vpop.f32.mrf.mxu0
        %v1213 = vadd.f32 %v214, %v1212
        %v1214 = vpop.f32.mrf.mxu0
        %v1215 = vadd.f32 %v214, %v1214
        %1216 = vmatmul.bf16.gmra.mxu0 %v1066
        %v1217 = vpop.f32.mrf.mxu0
        %v1218 = vadd.f32 %v214, %v1217
        %v1219 = vpop.f32.mrf.mxu0
        %v1220 = vadd.f32 %v214, %v1219
        %1221 = vmatmul.bf16.gmra.mxu0 %v1069
        %v1222 = vpop.f32.mrf.mxu0
        %v1223 = vadd.f32 %v214, %v1222
        %v1224 = vpop.f32.mrf.mxu0
        %v1225 = vadd.f32 %v214, %v1224
        %1226 = vmatmul.bf16.gmra.mxu0 %v1072
        %v1227 = vpop.f32.mrf.mxu0
        %v1228 = vadd.f32 %v214, %v1227
        %v1229 = vpop.f32.mrf.mxu0
        %v1230 = vadd.f32 %v214, %v1229
        %1231 = vmatmul.bf16.gmra.mxu0 %v1075
        %v1232 = vpop.f32.mrf.mxu0
        %v1233 = vadd.f32 %v214, %v1232
        %v1234 = vpop.f32.mrf.mxu0
        %v1235 = vadd.f32 %v214, %v1234
        %1236 = vmatmul.bf16.gmra.mxu0 %v1078
        %v1237 = vpop.f32.mrf.mxu0
        %v1238 = vadd.f32 %v214, %v1237
        %v1239 = vpop.f32.mrf.mxu0
        %v1240 = vadd.f32 %v214, %v1239
        %1241 = vmatmul.bf16.gmra.mxu0 %v1081
        %v1242 = vpop.f32.mrf.mxu0
        %v1243 = vadd.f32 %v214, %v1242
        %v1244 = vpop.f32.mrf.mxu0
        %v1245 = vadd.f32 %v214, %v1244
        %1246 = vmatmul.bf16.gmra.mxu0 %v1084
        %v1247 = vpop.f32.mrf.mxu0
        %v1248 = vadd.f32 %v214, %v1247
        %v1249 = vpop.f32.mrf.mxu0
        %v1250 = vadd.f32 %v214, %v1249
        %1251 = vmatmul.bf16.gmra.mxu0 %v1087
        %v1252 = vpop.f32.mrf.mxu0
        %v1253 = vadd.f32 %v214, %v1252
        %v1254 = vpop.f32.mrf.mxu0
        %v1255 = vadd.f32 %v214, %v1254
        %1256 = vmatmul.bf16.gmra.mxu0 %v1090
        %v1257 = vpop.f32.mrf.mxu0
        %v1258 = vadd.f32 %v214, %v1257
        %v1259 = vpop.f32.mrf.mxu0
        %v1260 = vadd.f32 %v214, %v1259
        %1261 = vmatmul.bf16.gmra.mxu0 %v1093
        %v1262 = vpop.f32.mrf.mxu0
        %v1263 = vadd.f32 %v214, %v1262
        %v1264 = vpop.f32.mrf.mxu0
        %v1265 = vadd.f32 %v214, %v1264
        %1266 = vmatmul.bf16.gmra.mxu0 %v1096
        %v1267 = vpop.f32.mrf.mxu0
        %v1268 = vadd.f32 %v214, %v1267
        %v1269 = vpop.f32.mrf.mxu0
        %v1270 = vadd.f32 %v214, %v1269
        %1271 = vmatmul.bf16.gmra.mxu0 %v1099
        %v1272 = vpop.f32.mrf.mxu0
        %v1273 = vadd.f32 %v214, %v1272
        %v1274 = vpop.f32.mrf.mxu0
        %v1275 = vadd.f32 %v214, %v1274
        %1276 = vmatmul.bf16.gmra.mxu0 %v1102
        %v1277 = vpop.f32.mrf.mxu0
        %v1278 = vadd.f32 %v214, %v1277
        %v1279 = vpop.f32.mrf.mxu0
        %v1280 = vadd.f32 %v214, %v1279
        %1281 = vmatmul.bf16.gmra.mxu0 %v1105
        %v1282 = vpop.f32.mrf.mxu0
        %v1283 = vadd.f32 %v214, %v1282
        %v1284 = vpop.f32.mrf.mxu0
        %v1285 = vadd.f32 %v214, %v1284
        %1286 = vmatmul.bf16.gmra.mxu0 %v1108
        %v1287 = vpop.f32.mrf.mxu0
        %v1288 = vadd.f32 %v214, %v1287
        %v1289 = vpop.f32.mrf.mxu0
        %v1290 = vadd.f32 %v214, %v1289
        %1291 = vdwg.mxu0
        %v1292 = vmax.f32 %v1124, 0.0
        %v1293 = vmax.f32 %v1213, 0.0
        %v1294 = vmax.f32 %v1126, 0.0
        %v1295 = vmax.f32 %v1215, 0.0
        %v1296 = vmax.f32 %v1129, 0.0
        %v1297 = vmax.f32 %v1218, 0.0
        %v1298 = vmax.f32 %v1131, 0.0
        %v1299 = vmax.f32 %v1220, 0.0
        %v1300 = vmax.f32 %v1134, 0.0
        %v1301 = vmax.f32 %v1223, 0.0
        %v1302 = vmax.f32 %v1136, 0.0
        %v1303 = vmax.f32 %v1225, 0.0
        %v1304 = vmax.f32 %v1139, 0.0
        %v1305 = vmax.f32 %v1228, 0.0
        %v1306 = vmax.f32 %v1141, 0.0
        %v1307 = vmax.f32 %v1230, 0.0
        %v1308 = vmax.f32 %v1144, 0.0
        %v1309 = vmax.f32 %v1233, 0.0
        %v1310 = vmax.f32 %v1146, 0.0
        %v1311 = vmax.f32 %v1235, 0.0
        %v1312 = vmax.f32 %v1149, 0.0
        %v1313 = vmax.f32 %v1238, 0.0
        %v1314 = vmax.f32 %v1151, 0.0
        %v1315 = vmax.f32 %v1240, 0.0
        %v1316 = vmax.f32 %v1154, 0.0
        %v1317 = vmax.f32 %v1243, 0.0
        %v1318 = vmax.f32 %v1156, 0.0
        %v1319 = vmax.f32 %v1245, 0.0
        %v1320 = vmax.f32 %v1159, 0.0
        %v1321 = vmax.f32 %v1248, 0.0
        %v1322 = vmax.f32 %v1161, 0.0
        %v1323 = vmax.f32 %v1250, 0.0
        %v1324 = vmax.f32 %v1164, 0.0
        %v1325 = vmax.f32 %v1253, 0.0
        %v1326 = vmax.f32 %v1166, 0.0
        %v1327 = vmax.f32 %v1255, 0.0
        %v1328 = vmax.f32 %v1169, 0.0
        %v1329 = vmax.f32 %v1258, 0.0
        %v1330 = vmax.f32 %v1171, 0.0
        %v1331 = vmax.f32 %v1260, 0.0
        %v1332 = vmax.f32 %v1174, 0.0
        %v1333 = vmax.f32 %v1263, 0.0
        %v1334 = vmax.f32 %v1176, 0.0
        %v1335 = vmax.f32 %v1265, 0.0
        %v1336 = vmax.f32 %v1179, 0.0
        %v1337 = vmax.f32 %v1268, 0.0
        %v1338 = vmax.f32 %v1181, 0.0
        %v1339 = vmax.f32 %v1270, 0.0
        %v1340 = vmax.f32 %v1184, 0.0
        %v1341 = vmax.f32 %v1273, 0.0
        %v1342 = vmax.f32 %v1186, 0.0
        %v1343 = vmax.f32 %v1275, 0.0
        %v1344 = vmax.f32 %v1189, 0.0
        %v1345 = vmax.f32 %v1278, 0.0
        %v1346 = vmax.f32 %v1191, 0.0
        %v1347 = vmax.f32 %v1280, 0.0
        %v1348 = vmax.f32 %v1194, 0.0
        %v1349 = vmax.f32 %v1283, 0.0
        %v1350 = vmax.f32 %v1196, 0.0
        %v1351 = vmax.f32 %v1285, 0.0
        %v1352 = vmax.f32 %v1199, 0.0
        %v1353 = vmax.f32 %v1288, 0.0
        %v1354 = vmax.f32 %v1201, 0.0
        %v1355 = vmax.f32 %v1290, 0.0
        %v1356 = vadd.f32 %v1292, %v1294
        %v1357 = vadd.f32 %v1356, %v1296
        %v1358 = vadd.f32 %v1357, %v1298
        %v1359 = vadd.f32 %v1358, %v1300
        %v1360 = vadd.f32 %v1359, %v1302
        %v1361 = vadd.f32 %v1360, %v1304
        %v1362 = vadd.f32 %v1361, %v1306
        %v1363 = vadd.f32 %v1362, %v1308
        %v1364 = vadd.f32 %v1363, %v1310
        %v1365 = vadd.f32 %v1364, %v1312
        %v1366 = vadd.f32 %v1365, %v1314
        %v1367 = vadd.f32 %v1366, %v1316
        %v1368 = vadd.f32 %v1367, %v1318
        %v1369 = vadd.f32 %v1368, %v1320
        %v1370 = vadd.f32 %v1369, %v1322
        %v1371 = vadd.f32 %v1370, %v1324
        %v1372 = vadd.f32 %v1371, %v1326
        %v1373 = vadd.f32 %v1372, %v1328
        %v1374 = vadd.f32 %v1373, %v1330
        %v1375 = vadd.f32 %v1374, %v1332
        %v1376 = vadd.f32 %v1375, %v1334
        %v1377 = vadd.f32 %v1376, %v1336
        %v1378 = vadd.f32 %v1377, %v1338
        %v1379 = vadd.f32 %v1378, %v1340
        %v1380 = vadd.f32 %v1379, %v1342
        %v1381 = vadd.f32 %v1380, %v1344
        %v1382 = vadd.f32 %v1381, %v1346
        %v1383 = vadd.f32 %v1382, %v1348
        %v1384 = vadd.f32 %v1383, %v1350
        %v1385 = vadd.f32 %v1384, %v1352
        %v1386 = vadd.f32 %v1385, %v1354
        %v1387 = vrot.slane %v1386, 4
        %v1388 = vadd.f32 %v1386, %v1387
        %v1389 = vrot.slane %v1388, 2
        %v1390 = vadd.f32 %v1388, %v1389
        %v1391 = vrot.slane %v1390, 1
        %v1392 = vadd.f32 %v1390, %v1391
        %v1393 = vadd.f32 %v1293, %v1295
        %v1394 = vadd.f32 %v1393, %v1297
        %v1395 = vadd.f32 %v1394, %v1299
        %v1396 = vadd.f32 %v1395, %v1301
        %v1397 = vadd.f32 %v1396, %v1303
        %v1398 = vadd.f32 %v1397, %v1305
        %v1399 = vadd.f32 %v1398, %v1307
        %v1400 = vadd.f32 %v1399, %v1309
        %v1401 = vadd.f32 %v1400, %v1311
        %v1402 = vadd.f32 %v1401, %v1313
        %v1403 = vadd.f32 %v1402, %v1315
        %v1404 = vadd.f32 %v1403, %v1317
        %v1405 = vadd.f32 %v1404, %v1319
        %v1406 = vadd.f32 %v1405, %v1321
        %v1407 = vadd.f32 %v1406, %v1323
        %v1408 = vadd.f32 %v1407, %v1325
        %v1409 = vadd.f32 %v1408, %v1327
        %v1410 = vadd.f32 %v1409, %v1329
        %v1411 = vadd.f32 %v1410, %v1331
        %v1412 = vadd.f32 %v1411, %v1333
        %v1413 = vadd.f32 %v1412, %v1335
        %v1414 = vadd.f32 %v1413, %v1337
        %v1415 = vadd.f32 %v1414, %v1339
        %v1416 = vadd.f32 %v1415, %v1341
        %v1417 = vadd.f32 %v1416, %v1343
        %v1418 = vadd.f32 %v1417, %v1345
        %v1419 = vadd.f32 %v1418, %v1347
        %v1420 = vadd.f32 %v1419, %v1349
        %v1421 = vadd.f32 %v1420, %v1351
        %v1422 = vadd.f32 %v1421, %v1353
        %v1423 = vadd.f32 %v1422, %v1355
        %v1424 = vrot.slane %v1423, 4
        %v1425 = vadd.f32 %v1423, %v1424
        %v1426 = vrot.slane %v1425, 2
        %v1427 = vadd.f32 %v1425, %v1426
        %v1428 = vrot.slane %v1427, 1
        %v1429 = vadd.f32 %v1427, %v1428
        %s1430 = scalar_lea.vmem %s199, 12
        %v1431 = vld [vmem:[%s1430] sm:$0xf]
        %1433 = vst [vmem:[#allocation1] ss:$4 sm:$0xff] %v1431
        %v1434 = vld.sshfl [vmem:[#allocation1] sm:$0xff pattern:$0x73625140]
        %v1435 = vld.sshfl [vmem:[#allocation1 + $0x8] sm:$0xff pattern:$0x73625140]
        %1438 = vxpose.binary.xlu0.c.b16.start [1/16] %v1435, %v1434, 128
        %1439 = vxpose.binary.xlu0.c.b16.cont [2/16] 0, 0, 128
        %1440 = vxpose.binary.xlu0.c.b16.cont [3/16] 0, 0, 128
        %1441 = vxpose.binary.xlu0.c.b16.cont [4/16] 0, 0, 128
        %1442 = vxpose.binary.xlu0.c.b16.cont [5/16] 0, 0, 128
        %1443 = vxpose.binary.xlu0.c.b16.cont [6/16] 0, 0, 128
        %1444 = vxpose.binary.xlu0.c.b16.cont [7/16] 0, 0, 128
        %1445 = vxpose.binary.xlu0.c.b16.end [8/16] 0, 0, 128
        %v1446 = vpop.trf.xlu0
        %v1447 = vpop.trf.xlu0
        %v1448 = vpop.trf.xlu0
        %v1449 = vpop.trf.xlu0
        %v1450 = vpop.trf.xlu0
        %v1451 = vpop.trf.xlu0
        %v1452 = vpop.trf.xlu0
        %v1453 = vpop.trf.xlu0
        %v1454 = vpop.trf.xlu0
        %v1455 = vpop.trf.xlu0
        %v1456 = vpop.trf.xlu0
        %v1457 = vpop.trf.xlu0
        %v1458 = vpop.trf.xlu0
        %v1459 = vpop.trf.xlu0
        %v1460 = vpop.trf.xlu0
        %v1461 = vpop.trf.xlu0
        %1462 = vst [vmem:[#allocation1] ss:$4 sm:$0xff] %v210
        %v1463 = vld.sshfl [vmem:[#allocation1] sm:$0xff pattern:$0x73625140]
        %v1464 = vld.sshfl [vmem:[#allocation1 + $0x8] sm:$0xff pattern:$0x73625140]
        %v1466 = vsel %vm251, %v1446, 0
        %v1469 = vsel %vm251, %v1448, 0
        %v1472 = vsel %vm251, %v1450, 0
        %v1475 = vsel %vm251, %v1452, 0
        %v1478 = vsel %vm251, %v1454, 0
        %v1481 = vsel %vm251, %v1456, 0
        %v1484 = vsel %vm251, %v1458, 0
        %v1487 = vsel %vm251, %v1460, 0
        %v1490 = vsel %vm251, %v1447, 0
        %v1493 = vsel %vm251, %v1449, 0
        %v1496 = vsel %vm251, %v1451, 0
        %v1499 = vsel %vm251, %v1453, 0
        %v1502 = vsel %vm251, %v1455, 0
        %v1505 = vsel %vm251, %v1457, 0
        %v1508 = vsel %vm251, %v1459, 0
        %v1511 = vsel %vm251, %v1461, 0
        %v1513 = vand.u32 %v1463, %v303
        %v1515 = vand.u32 %v1464, %v303
        %1517 = vmatpush.bf16.msra.mxu0 0
        %1518 = vmatpush.bf16.msra.mxu0 0
        %1519 = vmatpush.bf16.msra.mxu0 0
        %1520 = vmatpush.bf16.msra.mxu0 0
        %1521 = vmatpush.bf16.msra.mxu0 0
        %1522 = vmatpush.bf16.msra.mxu0 0
        %1523 = vmatpush.bf16.msra.mxu0 0
        %1524 = vmatpush.bf16.msra.mxu0 %v1513
        %1525 = vmatmul.bf16.gmra.mxu0 %v1466
        %v1526 = vpop.f32.mrf.mxu0
        %v1527 = vadd.f32 %v213, %v1526
        %v1528 = vpop.f32.mrf.mxu0
        %v1529 = vadd.f32 %v213, %v1528
        %1530 = vmatmul.bf16.gmra.mxu0 %v1469
        %v1531 = vpop.f32.mrf.mxu0
        %v1532 = vadd.f32 %v213, %v1531
        %v1533 = vpop.f32.mrf.mxu0
        %v1534 = vadd.f32 %v213, %v1533
        %1535 = vmatmul.bf16.gmra.mxu0 %v1472
        %v1536 = vpop.f32.mrf.mxu0
        %v1537 = vadd.f32 %v213, %v1536
        %v1538 = vpop.f32.mrf.mxu0
        %v1539 = vadd.f32 %v213, %v1538
        %1540 = vmatmul.bf16.gmra.mxu0 %v1475
        %v1541 = vpop.f32.mrf.mxu0
        %v1542 = vadd.f32 %v213, %v1541
        %v1543 = vpop.f32.mrf.mxu0
        %v1544 = vadd.f32 %v213, %v1543
        %1545 = vmatmul.bf16.gmra.mxu0 %v1478
        %v1546 = vpop.f32.mrf.mxu0
        %v1547 = vadd.f32 %v213, %v1546
        %v1548 = vpop.f32.mrf.mxu0
        %v1549 = vadd.f32 %v213, %v1548
        %1550 = vmatmul.bf16.gmra.mxu0 %v1481
        %v1551 = vpop.f32.mrf.mxu0
        %v1552 = vadd.f32 %v213, %v1551
        %v1553 = vpop.f32.mrf.mxu0
        %v1554 = vadd.f32 %v213, %v1553
        %1555 = vmatmul.bf16.gmra.mxu0 %v1484
        %v1556 = vpop.f32.mrf.mxu0
        %v1557 = vadd.f32 %v213, %v1556
        %v1558 = vpop.f32.mrf.mxu0
        %v1559 = vadd.f32 %v213, %v1558
        %1560 = vmatmul.bf16.gmra.mxu0 %v1487
        %v1561 = vpop.f32.mrf.mxu0
        %v1562 = vadd.f32 %v213, %v1561
        %v1563 = vpop.f32.mrf.mxu0
        %v1564 = vadd.f32 %v213, %v1563
        %1565 = vmatmul.bf16.gmra.mxu0 %v1490
        %v1566 = vpop.f32.mrf.mxu0
        %v1567 = vadd.f32 %v213, %v1566
        %v1568 = vpop.f32.mrf.mxu0
        %v1569 = vadd.f32 %v213, %v1568
        %1570 = vmatmul.bf16.gmra.mxu0 %v1493
        %v1571 = vpop.f32.mrf.mxu0
        %v1572 = vadd.f32 %v213, %v1571
        %v1573 = vpop.f32.mrf.mxu0
        %v1574 = vadd.f32 %v213, %v1573
        %1575 = vmatmul.bf16.gmra.mxu0 %v1496
        %v1576 = vpop.f32.mrf.mxu0
        %v1577 = vadd.f32 %v213, %v1576
        %v1578 = vpop.f32.mrf.mxu0
        %v1579 = vadd.f32 %v213, %v1578
        %1580 = vmatmul.bf16.gmra.mxu0 %v1499
        %v1581 = vpop.f32.mrf.mxu0
        %v1582 = vadd.f32 %v213, %v1581
        %v1583 = vpop.f32.mrf.mxu0
        %v1584 = vadd.f32 %v213, %v1583
        %1585 = vmatmul.bf16.gmra.mxu0 %v1502
        %v1586 = vpop.f32.mrf.mxu0
        %v1587 = vadd.f32 %v213, %v1586
        %v1588 = vpop.f32.mrf.mxu0
        %v1589 = vadd.f32 %v213, %v1588
        %1590 = vmatmul.bf16.gmra.mxu0 %v1505
        %v1591 = vpop.f32.mrf.mxu0
        %v1592 = vadd.f32 %v213, %v1591
        %v1593 = vpop.f32.mrf.mxu0
        %v1594 = vadd.f32 %v213, %v1593
        %1595 = vmatmul.bf16.gmra.mxu0 %v1508
        %v1596 = vpop.f32.mrf.mxu0
        %v1597 = vadd.f32 %v213, %v1596
        %v1598 = vpop.f32.mrf.mxu0
        %v1599 = vadd.f32 %v213, %v1598
        %1600 = vmatmul.bf16.gmra.mxu0 %v1511
        %v1601 = vpop.f32.mrf.mxu0
        %v1602 = vadd.f32 %v213, %v1601
        %v1603 = vpop.f32.mrf.mxu0
        %v1604 = vadd.f32 %v213, %v1603
        %1605 = vdwg.mxu0
        %1606 = vmatpush.bf16.msra.mxu0 0
        %1607 = vmatpush.bf16.msra.mxu0 0
        %1608 = vmatpush.bf16.msra.mxu0 0
        %1609 = vmatpush.bf16.msra.mxu0 0
        %1610 = vmatpush.bf16.msra.mxu0 0
        %1611 = vmatpush.bf16.msra.mxu0 0
        %1612 = vmatpush.bf16.msra.mxu0 0
        %1613 = vmatpush.bf16.msra.mxu0 %v1515
        %1614 = vmatmul.bf16.gmra.mxu0 %v1466
        %v1615 = vpop.f32.mrf.mxu0
        %v1616 = vadd.f32 %v214, %v1615
        %v1617 = vpop.f32.mrf.mxu0
        %v1618 = vadd.f32 %v214, %v1617
        %1619 = vmatmul.bf16.gmra.mxu0 %v1469
        %v1620 = vpop.f32.mrf.mxu0
        %v1621 = vadd.f32 %v214, %v1620
        %v1622 = vpop.f32.mrf.mxu0
        %v1623 = vadd.f32 %v214, %v1622
        %1624 = vmatmul.bf16.gmra.mxu0 %v1472
        %v1625 = vpop.f32.mrf.mxu0
        %v1626 = vadd.f32 %v214, %v1625
        %v1627 = vpop.f32.mrf.mxu0
        %v1628 = vadd.f32 %v214, %v1627
        %1629 = vmatmul.bf16.gmra.mxu0 %v1475
        %v1630 = vpop.f32.mrf.mxu0
        %v1631 = vadd.f32 %v214, %v1630
        %v1632 = vpop.f32.mrf.mxu0
        %v1633 = vadd.f32 %v214, %v1632
        %1634 = vmatmul.bf16.gmra.mxu0 %v1478
        %v1635 = vpop.f32.mrf.mxu0
        %v1636 = vadd.f32 %v214, %v1635
        %v1637 = vpop.f32.mrf.mxu0
        %v1638 = vadd.f32 %v214, %v1637
        %1639 = vmatmul.bf16.gmra.mxu0 %v1481
        %v1640 = vpop.f32.mrf.mxu0
        %v1641 = vadd.f32 %v214, %v1640
        %v1642 = vpop.f32.mrf.mxu0
        %v1643 = vadd.f32 %v214, %v1642
        %1644 = vmatmul.bf16.gmra.mxu0 %v1484
        %v1645 = vpop.f32.mrf.mxu0
        %v1646 = vadd.f32 %v214, %v1645
        %v1647 = vpop.f32.mrf.mxu0
        %v1648 = vadd.f32 %v214, %v1647
        %1649 = vmatmul.bf16.gmra.mxu0 %v1487
        %v1650 = vpop.f32.mrf.mxu0
        %v1651 = vadd.f32 %v214, %v1650
        %v1652 = vpop.f32.mrf.mxu0
        %v1653 = vadd.f32 %v214, %v1652
        %1654 = vmatmul.bf16.gmra.mxu0 %v1490
        %v1655 = vpop.f32.mrf.mxu0
        %v1656 = vadd.f32 %v214, %v1655
        %v1657 = vpop.f32.mrf.mxu0
        %v1658 = vadd.f32 %v214, %v1657
        %1659 = vmatmul.bf16.gmra.mxu0 %v1493
        %v1660 = vpop.f32.mrf.mxu0
        %v1661 = vadd.f32 %v214, %v1660
        %v1662 = vpop.f32.mrf.mxu0
        %v1663 = vadd.f32 %v214, %v1662
        %1664 = vmatmul.bf16.gmra.mxu0 %v1496
        %v1665 = vpop.f32.mrf.mxu0
        %v1666 = vadd.f32 %v214, %v1665
        %v1667 = vpop.f32.mrf.mxu0
        %v1668 = vadd.f32 %v214, %v1667
        %1669 = vmatmul.bf16.gmra.mxu0 %v1499
        %v1670 = vpop.f32.mrf.mxu0
        %v1671 = vadd.f32 %v214, %v1670
        %v1672 = vpop.f32.mrf.mxu0
        %v1673 = vadd.f32 %v214, %v1672
        %1674 = vmatmul.bf16.gmra.mxu0 %v1502
        %v1675 = vpop.f32.mrf.mxu0
        %v1676 = vadd.f32 %v214, %v1675
        %v1677 = vpop.f32.mrf.mxu0
        %v1678 = vadd.f32 %v214, %v1677
        %1679 = vmatmul.bf16.gmra.mxu0 %v1505
        %v1680 = vpop.f32.mrf.mxu0
        %v1681 = vadd.f32 %v214, %v1680
        %v1682 = vpop.f32.mrf.mxu0
        %v1683 = vadd.f32 %v214, %v1682
        %1684 = vmatmul.bf16.gmra.mxu0 %v1508
        %v1685 = vpop.f32.mrf.mxu0
        %v1686 = vadd.f32 %v214, %v1685
        %v1687 = vpop.f32.mrf.mxu0
        %v1688 = vadd.f32 %v214, %v1687
        %1689 = vmatmul.bf16.gmra.mxu0 %v1511
        %v1690 = vpop.f32.mrf.mxu0
        %v1691 = vadd.f32 %v214, %v1690
        %v1692 = vpop.f32.mrf.mxu0
        %v1693 = vadd.f32 %v214, %v1692
        %1694 = vdwg.mxu0
        %v1695 = vmax.f32 %v1527, 0.0
        %v1696 = vmax.f32 %v1616, 0.0
        %v1697 = vmax.f32 %v1529, 0.0
        %v1698 = vmax.f32 %v1618, 0.0
        %v1699 = vmax.f32 %v1532, 0.0
        %v1700 = vmax.f32 %v1621, 0.0
        %v1701 = vmax.f32 %v1534, 0.0
        %v1702 = vmax.f32 %v1623, 0.0
        %v1703 = vmax.f32 %v1537, 0.0
        %v1704 = vmax.f32 %v1626, 0.0
        %v1705 = vmax.f32 %v1539, 0.0
        %v1706 = vmax.f32 %v1628, 0.0
        %v1707 = vmax.f32 %v1542, 0.0
        %v1708 = vmax.f32 %v1631, 0.0
        %v1709 = vmax.f32 %v1544, 0.0
        %v1710 = vmax.f32 %v1633, 0.0
        %v1711 = vmax.f32 %v1547, 0.0
        %v1712 = vmax.f32 %v1636, 0.0
        %v1713 = vmax.f32 %v1549, 0.0
        %v1714 = vmax.f32 %v1638, 0.0
        %v1715 = vmax.f32 %v1552, 0.0
        %v1716 = vmax.f32 %v1641, 0.0
        %v1717 = vmax.f32 %v1554, 0.0
        %v1718 = vmax.f32 %v1643, 0.0
        %v1719 = vmax.f32 %v1557, 0.0
        %v1720 = vmax.f32 %v1646, 0.0
        %v1721 = vmax.f32 %v1559, 0.0
        %v1722 = vmax.f32 %v1648, 0.0
        %v1723 = vmax.f32 %v1562, 0.0
        %v1724 = vmax.f32 %v1651, 0.0
        %v1725 = vmax.f32 %v1564, 0.0
        %v1726 = vmax.f32 %v1653, 0.0
        %v1727 = vmax.f32 %v1567, 0.0
        %v1728 = vmax.f32 %v1656, 0.0
        %v1729 = vmax.f32 %v1569, 0.0
        %v1730 = vmax.f32 %v1658, 0.0
        %v1731 = vmax.f32 %v1572, 0.0
        %v1732 = vmax.f32 %v1661, 0.0
        %v1733 = vmax.f32 %v1574, 0.0
        %v1734 = vmax.f32 %v1663, 0.0
        %v1735 = vmax.f32 %v1577, 0.0
        %v1736 = vmax.f32 %v1666, 0.0
        %v1737 = vmax.f32 %v1579, 0.0
        %v1738 = vmax.f32 %v1668, 0.0
        %v1739 = vmax.f32 %v1582, 0.0
        %v1740 = vmax.f32 %v1671, 0.0
        %v1741 = vmax.f32 %v1584, 0.0
        %v1742 = vmax.f32 %v1673, 0.0
        %v1743 = vmax.f32 %v1587, 0.0
        %v1744 = vmax.f32 %v1676, 0.0
        %v1745 = vmax.f32 %v1589, 0.0
        %v1746 = vmax.f32 %v1678, 0.0
        %v1747 = vmax.f32 %v1592, 0.0
        %v1748 = vmax.f32 %v1681, 0.0
        %v1749 = vmax.f32 %v1594, 0.0
        %v1750 = vmax.f32 %v1683, 0.0
        %v1751 = vmax.f32 %v1597, 0.0
        %v1752 = vmax.f32 %v1686, 0.0
        %v1753 = vmax.f32 %v1599, 0.0
        %v1754 = vmax.f32 %v1688, 0.0
        %v1755 = vmax.f32 %v1602, 0.0
        %v1756 = vmax.f32 %v1691, 0.0
        %v1757 = vmax.f32 %v1604, 0.0
        %v1758 = vmax.f32 %v1693, 0.0
        %v1759 = vadd.f32 %v1695, %v1697
        %v1760 = vadd.f32 %v1759, %v1699
        %v1761 = vadd.f32 %v1760, %v1701
        %v1762 = vadd.f32 %v1761, %v1703
        %v1763 = vadd.f32 %v1762, %v1705
        %v1764 = vadd.f32 %v1763, %v1707
        %v1765 = vadd.f32 %v1764, %v1709
        %v1766 = vadd.f32 %v1765, %v1711
        %v1767 = vadd.f32 %v1766, %v1713
        %v1768 = vadd.f32 %v1767, %v1715
        %v1769 = vadd.f32 %v1768, %v1717
        %v1770 = vadd.f32 %v1769, %v1719
        %v1771 = vadd.f32 %v1770, %v1721
        %v1772 = vadd.f32 %v1771, %v1723
        %v1773 = vadd.f32 %v1772, %v1725
        %v1774 = vadd.f32 %v1773, %v1727
        %v1775 = vadd.f32 %v1774, %v1729
        %v1776 = vadd.f32 %v1775, %v1731
        %v1777 = vadd.f32 %v1776, %v1733
        %v1778 = vadd.f32 %v1777, %v1735
        %v1779 = vadd.f32 %v1778, %v1737
        %v1780 = vadd.f32 %v1779, %v1739
        %v1781 = vadd.f32 %v1780, %v1741
        %v1782 = vadd.f32 %v1781, %v1743
        %v1783 = vadd.f32 %v1782, %v1745
        %v1784 = vadd.f32 %v1783, %v1747
        %v1785 = vadd.f32 %v1784, %v1749
        %v1786 = vadd.f32 %v1785, %v1751
        %v1787 = vadd.f32 %v1786, %v1753
        %v1788 = vadd.f32 %v1787, %v1755
        %v1789 = vadd.f32 %v1788, %v1757
        %v1790 = vrot.slane %v1789, 4
        %v1791 = vadd.f32 %v1789, %v1790
        %v1792 = vrot.slane %v1791, 2
        %v1793 = vadd.f32 %v1791, %v1792
        %v1794 = vrot.slane %v1793, 1
        %v1795 = vadd.f32 %v1793, %v1794
        %v1796 = vadd.f32 %v1696, %v1698
        %v1797 = vadd.f32 %v1796, %v1700
        %v1798 = vadd.f32 %v1797, %v1702
        %v1799 = vadd.f32 %v1798, %v1704
        %v1800 = vadd.f32 %v1799, %v1706
        %v1801 = vadd.f32 %v1800, %v1708
        %v1802 = vadd.f32 %v1801, %v1710
        %v1803 = vadd.f32 %v1802, %v1712
        %v1804 = vadd.f32 %v1803, %v1714
        %v1805 = vadd.f32 %v1804, %v1716
        %v1806 = vadd.f32 %v1805, %v1718
        %v1807 = vadd.f32 %v1806, %v1720
        %v1808 = vadd.f32 %v1807, %v1722
        %v1809 = vadd.f32 %v1808, %v1724
        %v1810 = vadd.f32 %v1809, %v1726
        %v1811 = vadd.f32 %v1810, %v1728
        %v1812 = vadd.f32 %v1811, %v1730
        %v1813 = vadd.f32 %v1812, %v1732
        %v1814 = vadd.f32 %v1813, %v1734
        %v1815 = vadd.f32 %v1814, %v1736
        %v1816 = vadd.f32 %v1815, %v1738
        %v1817 = vadd.f32 %v1816, %v1740
        %v1818 = vadd.f32 %v1817, %v1742
        %v1819 = vadd.f32 %v1818, %v1744
        %v1820 = vadd.f32 %v1819, %v1746
        %v1821 = vadd.f32 %v1820, %v1748
        %v1822 = vadd.f32 %v1821, %v1750
        %v1823 = vadd.f32 %v1822, %v1752
        %v1824 = vadd.f32 %v1823, %v1754
        %v1825 = vadd.f32 %v1824, %v1756
        %v1826 = vadd.f32 %v1825, %v1758
        %v1827 = vrot.slane %v1826, 4
        %v1828 = vadd.f32 %v1826, %v1827
        %v1829 = vrot.slane %v1828, 2
        %v1830 = vadd.f32 %v1828, %v1829
        %v1831 = vrot.slane %v1830, 1
        %v1832 = vadd.f32 %v1830, %v1831
        %s1833 = scalar_lea.vmem %s199, 16
        %v1834 = vld [vmem:[%s1833] sm:$0xf]
        %1836 = vst [vmem:[#allocation1] ss:$4 sm:$0xff] %v1834
        %v1837 = vld.sshfl [vmem:[#allocation1] sm:$0xff pattern:$0x73625140]
        %v1838 = vld.sshfl [vmem:[#allocation1 + $0x8] sm:$0xff pattern:$0x73625140]
        %1841 = vxpose.binary.xlu0.c.b16.start [1/16] %v1838, %v1837, 128
        %1842 = vxpose.binary.xlu0.c.b16.cont [2/16] 0, 0, 128
        %1843 = vxpose.binary.xlu0.c.b16.cont [3/16] 0, 0, 128
        %1844 = vxpose.binary.xlu0.c.b16.cont [4/16] 0, 0, 128
        %1845 = vxpose.binary.xlu0.c.b16.cont [5/16] 0, 0, 128
        %1846 = vxpose.binary.xlu0.c.b16.cont [6/16] 0, 0, 128
        %1847 = vxpose.binary.xlu0.c.b16.cont [7/16] 0, 0, 128
        %1848 = vxpose.binary.xlu0.c.b16.end [8/16] 0, 0, 128
        %v1849 = vpop.trf.xlu0
        %v1850 = vpop.trf.xlu0
        %v1851 = vpop.trf.xlu0
        %v1852 = vpop.trf.xlu0
        %v1853 = vpop.trf.xlu0
        %v1854 = vpop.trf.xlu0
        %v1855 = vpop.trf.xlu0
        %v1856 = vpop.trf.xlu0
        %v1857 = vpop.trf.xlu0
        %v1858 = vpop.trf.xlu0
        %v1859 = vpop.trf.xlu0
        %v1860 = vpop.trf.xlu0
        %v1861 = vpop.trf.xlu0
        %v1862 = vpop.trf.xlu0
        %v1863 = vpop.trf.xlu0
        %v1864 = vpop.trf.xlu0
        %1865 = vst [vmem:[#allocation1] ss:$4 sm:$0xff] %v210
        %v1866 = vld.sshfl [vmem:[#allocation1] sm:$0xff pattern:$0x73625140]
        %v1867 = vld.sshfl [vmem:[#allocation1 + $0x8] sm:$0xff pattern:$0x73625140]
        %v1869 = vsel %vm251, %v1849, 0
        %v1872 = vsel %vm251, %v1851, 0
        %v1875 = vsel %vm251, %v1853, 0
        %v1878 = vsel %vm251, %v1855, 0
        %v1881 = vsel %vm251, %v1857, 0
        %v1884 = vsel %vm251, %v1859, 0
        %v1887 = vsel %vm251, %v1861, 0
        %v1890 = vsel %vm251, %v1863, 0
        %v1893 = vsel %vm251, %v1850, 0
        %v1896 = vsel %vm251, %v1852, 0
        %v1899 = vsel %vm251, %v1854, 0
        %v1902 = vsel %vm251, %v1856, 0
        %v1905 = vsel %vm251, %v1858, 0
        %v1908 = vsel %vm251, %v1860, 0
        %v1911 = vsel %vm251, %v1862, 0
        %v1914 = vsel %vm251, %v1864, 0
        %v1916 = vand.u32 %v1866, %v303
        %v1918 = vand.u32 %v1867, %v303
        %1920 = vmatpush.bf16.msra.mxu0 0
        %1921 = vmatpush.bf16.msra.mxu0 0
        %1922 = vmatpush.bf16.msra.mxu0 0
        %1923 = vmatpush.bf16.msra.mxu0 0
        %1924 = vmatpush.bf16.msra.mxu0 0
        %1925 = vmatpush.bf16.msra.mxu0 0
        %1926 = vmatpush.bf16.msra.mxu0 0
        %1927 = vmatpush.bf16.msra.mxu0 %v1916
        %1928 = vmatmul.bf16.gmra.mxu0 %v1869
        %v1929 = vpop.f32.mrf.mxu0
        %v1930 = vadd.f32 %v213, %v1929
        %v1931 = vpop.f32.mrf.mxu0
        %v1932 = vadd.f32 %v213, %v1931
        %1933 = vmatmul.bf16.gmra.mxu0 %v1872
        %v1934 = vpop.f32.mrf.mxu0
        %v1935 = vadd.f32 %v213, %v1934
        %v1936 = vpop.f32.mrf.mxu0
        %v1937 = vadd.f32 %v213, %v1936
        %1938 = vmatmul.bf16.gmra.mxu0 %v1875
        %v1939 = vpop.f32.mrf.mxu0
        %v1940 = vadd.f32 %v213, %v1939
        %v1941 = vpop.f32.mrf.mxu0
        %v1942 = vadd.f32 %v213, %v1941
        %1943 = vmatmul.bf16.gmra.mxu0 %v1878
        %v1944 = vpop.f32.mrf.mxu0
        %v1945 = vadd.f32 %v213, %v1944
        %v1946 = vpop.f32.mrf.mxu0
        %v1947 = vadd.f32 %v213, %v1946
        %1948 = vmatmul.bf16.gmra.mxu0 %v1881
        %v1949 = vpop.f32.mrf.mxu0
        %v1950 = vadd.f32 %v213, %v1949
        %v1951 = vpop.f32.mrf.mxu0
        %v1952 = vadd.f32 %v213, %v1951
        %1953 = vmatmul.bf16.gmra.mxu0 %v1884
        %v1954 = vpop.f32.mrf.mxu0
        %v1955 = vadd.f32 %v213, %v1954
        %v1956 = vpop.f32.mrf.mxu0
        %v1957 = vadd.f32 %v213, %v1956
        %1958 = vmatmul.bf16.gmra.mxu0 %v1887
        %v1959 = vpop.f32.mrf.mxu0
        %v1960 = vadd.f32 %v213, %v1959
        %v1961 = vpop.f32.mrf.mxu0
        %v1962 = vadd.f32 %v213, %v1961
        %1963 = vmatmul.bf16.gmra.mxu0 %v1890
        %v1964 = vpop.f32.mrf.mxu0
        %v1965 = vadd.f32 %v213, %v1964
        %v1966 = vpop.f32.mrf.mxu0
        %v1967 = vadd.f32 %v213, %v1966
        %1968 = vmatmul.bf16.gmra.mxu0 %v1893
        %v1969 = vpop.f32.mrf.mxu0
        %v1970 = vadd.f32 %v213, %v1969
        %v1971 = vpop.f32.mrf.mxu0
        %v1972 = vadd.f32 %v213, %v1971
        %1973 = vmatmul.bf16.gmra.mxu0 %v1896
        %v1974 = vpop.f32.mrf.mxu0
        %v1975 = vadd.f32 %v213, %v1974
        %v1976 = vpop.f32.mrf.mxu0
        %v1977 = vadd.f32 %v213, %v1976
        %1978 = vmatmul.bf16.gmra.mxu0 %v1899
        %v1979 = vpop.f32.mrf.mxu0
        %v1980 = vadd.f32 %v213, %v1979
        %v1981 = vpop.f32.mrf.mxu0
        %v1982 = vadd.f32 %v213, %v1981
        %1983 = vmatmul.bf16.gmra.mxu0 %v1902
        %v1984 = vpop.f32.mrf.mxu0
        %v1985 = vadd.f32 %v213, %v1984
        %v1986 = vpop.f32.mrf.mxu0
        %v1987 = vadd.f32 %v213, %v1986
        %1988 = vmatmul.bf16.gmra.mxu0 %v1905
        %v1989 = vpop.f32.mrf.mxu0
        %v1990 = vadd.f32 %v213, %v1989
        %v1991 = vpop.f32.mrf.mxu0
        %v1992 = vadd.f32 %v213, %v1991
        %1993 = vmatmul.bf16.gmra.mxu0 %v1908
        %v1994 = vpop.f32.mrf.mxu0
        %v1995 = vadd.f32 %v213, %v1994
        %v1996 = vpop.f32.mrf.mxu0
        %v1997 = vadd.f32 %v213, %v1996
        %1998 = vmatmul.bf16.gmra.mxu0 %v1911
        %v1999 = vpop.f32.mrf.mxu0
        %v2000 = vadd.f32 %v213, %v1999
        %v2001 = vpop.f32.mrf.mxu0
        %v2002 = vadd.f32 %v213, %v2001
        %2003 = vmatmul.bf16.gmra.mxu0 %v1914
        %v2004 = vpop.f32.mrf.mxu0
        %v2005 = vadd.f32 %v213, %v2004
        %v2006 = vpop.f32.mrf.mxu0
        %v2007 = vadd.f32 %v213, %v2006
        %2008 = vdwg.mxu0
        %2009 = vmatpush.bf16.msra.mxu0 0
        %2010 = vmatpush.bf16.msra.mxu0 0
        %2011 = vmatpush.bf16.msra.mxu0 0
        %2012 = vmatpush.bf16.msra.mxu0 0
        %2013 = vmatpush.bf16.msra.mxu0 0
        %2014 = vmatpush.bf16.msra.mxu0 0
        %2015 = vmatpush.bf16.msra.mxu0 0
        %2016 = vmatpush.bf16.msra.mxu0 %v1918
        %2017 = vmatmul.bf16.gmra.mxu0 %v1869
        %v2018 = vpop.f32.mrf.mxu0
        %v2019 = vadd.f32 %v214, %v2018
        %v2020 = vpop.f32.mrf.mxu0
        %v2021 = vadd.f32 %v214, %v2020
        %2022 = vmatmul.bf16.gmra.mxu0 %v1872
        %v2023 = vpop.f32.mrf.mxu0
        %v2024 = vadd.f32 %v214, %v2023
        %v2025 = vpop.f32.mrf.mxu0
        %v2026 = vadd.f32 %v214, %v2025
        %2027 = vmatmul.bf16.gmra.mxu0 %v1875
        %v2028 = vpop.f32.mrf.mxu0
        %v2029 = vadd.f32 %v214, %v2028
        %v2030 = vpop.f32.mrf.mxu0
        %v2031 = vadd.f32 %v214, %v2030
        %2032 = vmatmul.bf16.gmra.mxu0 %v1878
        %v2033 = vpop.f32.mrf.mxu0
        %v2034 = vadd.f32 %v214, %v2033
        %v2035 = vpop.f32.mrf.mxu0
        %v2036 = vadd.f32 %v214, %v2035
        %2037 = vmatmul.bf16.gmra.mxu0 %v1881
        %v2038 = vpop.f32.mrf.mxu0
        %v2039 = vadd.f32 %v214, %v2038
        %v2040 = vpop.f32.mrf.mxu0
        %v2041 = vadd.f32 %v214, %v2040
        %2042 = vmatmul.bf16.gmra.mxu0 %v1884
        %v2043 = vpop.f32.mrf.mxu0
        %v2044 = vadd.f32 %v214, %v2043
        %v2045 = vpop.f32.mrf.mxu0
        %v2046 = vadd.f32 %v214, %v2045
        %2047 = vmatmul.bf16.gmra.mxu0 %v1887
        %v2048 = vpop.f32.mrf.mxu0
        %v2049 = vadd.f32 %v214, %v2048
        %v2050 = vpop.f32.mrf.mxu0
        %v2051 = vadd.f32 %v214, %v2050
        %2052 = vmatmul.bf16.gmra.mxu0 %v1890
        %v2053 = vpop.f32.mrf.mxu0
        %v2054 = vadd.f32 %v214, %v2053
        %v2055 = vpop.f32.mrf.mxu0
        %v2056 = vadd.f32 %v214, %v2055
        %2057 = vmatmul.bf16.gmra.mxu0 %v1893
        %v2058 = vpop.f32.mrf.mxu0
        %v2059 = vadd.f32 %v214, %v2058
        %v2060 = vpop.f32.mrf.mxu0
        %v2061 = vadd.f32 %v214, %v2060
        %2062 = vmatmul.bf16.gmra.mxu0 %v1896
        %v2063 = vpop.f32.mrf.mxu0
        %v2064 = vadd.f32 %v214, %v2063
        %v2065 = vpop.f32.mrf.mxu0
        %v2066 = vadd.f32 %v214, %v2065
        %2067 = vmatmul.bf16.gmra.mxu0 %v1899
        %v2068 = vpop.f32.mrf.mxu0
        %v2069 = vadd.f32 %v214, %v2068
        %v2070 = vpop.f32.mrf.mxu0
        %v2071 = vadd.f32 %v214, %v2070
        %2072 = vmatmul.bf16.gmra.mxu0 %v1902
        %v2073 = vpop.f32.mrf.mxu0
        %v2074 = vadd.f32 %v214, %v2073
        %v2075 = vpop.f32.mrf.mxu0
        %v2076 = vadd.f32 %v214, %v2075
        %2077 = vmatmul.bf16.gmra.mxu0 %v1905
        %v2078 = vpop.f32.mrf.mxu0
        %v2079 = vadd.f32 %v214, %v2078
        %v2080 = vpop.f32.mrf.mxu0
        %v2081 = vadd.f32 %v214, %v2080
        %2082 = vmatmul.bf16.gmra.mxu0 %v1908
        %v2083 = vpop.f32.mrf.mxu0
        %v2084 = vadd.f32 %v214, %v2083
        %v2085 = vpop.f32.mrf.mxu0
        %v2086 = vadd.f32 %v214, %v2085
        %2087 = vmatmul.bf16.gmra.mxu0 %v1911
        %v2088 = vpop.f32.mrf.mxu0
        %v2089 = vadd.f32 %v214, %v2088
        %v2090 = vpop.f32.mrf.mxu0
        %v2091 = vadd.f32 %v214, %v2090
        %2092 = vmatmul.bf16.gmra.mxu0 %v1914
        %v2093 = vpop.f32.mrf.mxu0
        %v2094 = vadd.f32 %v214, %v2093
        %v2095 = vpop.f32.mrf.mxu0
        %v2096 = vadd.f32 %v214, %v2095
        %2097 = vdwg.mxu0
        %v2098 = vmax.f32 %v1930, 0.0
        %v2099 = vmax.f32 %v2019, 0.0
        %v2100 = vmax.f32 %v1932, 0.0
        %v2101 = vmax.f32 %v2021, 0.0
        %v2102 = vmax.f32 %v1935, 0.0
        %v2103 = vmax.f32 %v2024, 0.0
        %v2104 = vmax.f32 %v1937, 0.0
        %v2105 = vmax.f32 %v2026, 0.0
        %v2106 = vmax.f32 %v1940, 0.0
        %v2107 = vmax.f32 %v2029, 0.0
        %v2108 = vmax.f32 %v1942, 0.0
        %v2109 = vmax.f32 %v2031, 0.0
        %v2110 = vmax.f32 %v1945, 0.0
        %v2111 = vmax.f32 %v2034, 0.0
        %v2112 = vmax.f32 %v1947, 0.0
        %v2113 = vmax.f32 %v2036, 0.0
        %v2114 = vmax.f32 %v1950, 0.0
        %v2115 = vmax.f32 %v2039, 0.0
        %v2116 = vmax.f32 %v1952, 0.0
        %v2117 = vmax.f32 %v2041, 0.0
        %v2118 = vmax.f32 %v1955, 0.0
        %v2119 = vmax.f32 %v2044, 0.0
        %v2120 = vmax.f32 %v1957, 0.0
        %v2121 = vmax.f32 %v2046, 0.0
        %v2122 = vmax.f32 %v1960, 0.0
        %v2123 = vmax.f32 %v2049, 0.0
        %v2124 = vmax.f32 %v1962, 0.0
        %v2125 = vmax.f32 %v2051, 0.0
        %v2126 = vmax.f32 %v1965, 0.0
        %v2127 = vmax.f32 %v2054, 0.0
        %v2128 = vmax.f32 %v1967, 0.0
        %v2129 = vmax.f32 %v2056, 0.0
        %v2130 = vmax.f32 %v1970, 0.0
        %v2131 = vmax.f32 %v2059, 0.0
        %v2132 = vmax.f32 %v1972, 0.0
        %v2133 = vmax.f32 %v2061, 0.0
        %v2134 = vmax.f32 %v1975, 0.0
        %v2135 = vmax.f32 %v2064, 0.0
        %v2136 = vmax.f32 %v1977, 0.0
        %v2137 = vmax.f32 %v2066, 0.0
        %v2138 = vmax.f32 %v1980, 0.0
        %v2139 = vmax.f32 %v2069, 0.0
        %v2140 = vmax.f32 %v1982, 0.0
        %v2141 = vmax.f32 %v2071, 0.0
        %v2142 = vmax.f32 %v1985, 0.0
        %v2143 = vmax.f32 %v2074, 0.0
        %v2144 = vmax.f32 %v1987, 0.0
        %v2145 = vmax.f32 %v2076, 0.0
        %v2146 = vmax.f32 %v1990, 0.0
        %v2147 = vmax.f32 %v2079, 0.0
        %v2148 = vmax.f32 %v1992, 0.0
        %v2149 = vmax.f32 %v2081, 0.0
        %v2150 = vmax.f32 %v1995, 0.0
        %v2151 = vmax.f32 %v2084, 0.0
        %v2152 = vmax.f32 %v1997, 0.0
        %v2153 = vmax.f32 %v2086, 0.0
        %v2154 = vmax.f32 %v2000, 0.0
        %v2155 = vmax.f32 %v2089, 0.0
        %v2156 = vmax.f32 %v2002, 0.0
        %v2157 = vmax.f32 %v2091, 0.0
        %v2158 = vmax.f32 %v2005, 0.0
        %v2159 = vmax.f32 %v2094, 0.0
        %v2160 = vmax.f32 %v2007, 0.0
        %v2161 = vmax.f32 %v2096, 0.0
        %v2162 = vadd.f32 %v2098, %v2100
        %v2163 = vadd.f32 %v2162, %v2102
        %v2164 = vadd.f32 %v2163, %v2104
        %v2165 = vadd.f32 %v2164, %v2106
        %v2166 = vadd.f32 %v2165, %v2108
        %v2167 = vadd.f32 %v2166, %v2110
        %v2168 = vadd.f32 %v2167, %v2112
        %v2169 = vadd.f32 %v2168, %v2114
        %v2170 = vadd.f32 %v2169, %v2116
        %v2171 = vadd.f32 %v2170, %v2118
        %v2172 = vadd.f32 %v2171, %v2120
        %v2173 = vadd.f32 %v2172, %v2122
        %v2174 = vadd.f32 %v2173, %v2124
        %v2175 = vadd.f32 %v2174, %v2126
        %v2176 = vadd.f32 %v2175, %v2128
        %v2177 = vadd.f32 %v2176, %v2130
        %v2178 = vadd.f32 %v2177, %v2132
        %v2179 = vadd.f32 %v2178, %v2134
        %v2180 = vadd.f32 %v2179, %v2136
        %v2181 = vadd.f32 %v2180, %v2138
        %v2182 = vadd.f32 %v2181, %v2140
        %v2183 = vadd.f32 %v2182, %v2142
        %v2184 = vadd.f32 %v2183, %v2144
        %v2185 = vadd.f32 %v2184, %v2146
        %v2186 = vadd.f32 %v2185, %v2148
        %v2187 = vadd.f32 %v2186, %v2150
        %v2188 = vadd.f32 %v2187, %v2152
        %v2189 = vadd.f32 %v2188, %v2154
        %v2190 = vadd.f32 %v2189, %v2156
        %v2191 = vadd.f32 %v2190, %v2158
        %v2192 = vadd.f32 %v2191, %v2160
        %v2193 = vrot.slane %v2192, 4
        %v2194 = vadd.f32 %v2192, %v2193
        %v2195 = vrot.slane %v2194, 2
        %v2196 = vadd.f32 %v2194, %v2195
        %v2197 = vrot.slane %v2196, 1
        %v2198 = vadd.f32 %v2196, %v2197
        %v2199 = vadd.f32 %v2099, %v2101
        %v2200 = vadd.f32 %v2199, %v2103
        %v2201 = vadd.f32 %v2200, %v2105
        %v2202 = vadd.f32 %v2201, %v2107
        %v2203 = vadd.f32 %v2202, %v2109
        %v2204 = vadd.f32 %v2203, %v2111
        %v2205 = vadd.f32 %v2204, %v2113
        %v2206 = vadd.f32 %v2205, %v2115
        %v2207 = vadd.f32 %v2206, %v2117
        %v2208 = vadd.f32 %v2207, %v2119
        %v2209 = vadd.f32 %v2208, %v2121
        %v2210 = vadd.f32 %v2209, %v2123
        %v2211 = vadd.f32 %v2210, %v2125
        %v2212 = vadd.f32 %v2211, %v2127
        %v2213 = vadd.f32 %v2212, %v2129
        %v2214 = vadd.f32 %v2213, %v2131
        %v2215 = vadd.f32 %v2214, %v2133
        %v2216 = vadd.f32 %v2215, %v2135
        %v2217 = vadd.f32 %v2216, %v2137
        %v2218 = vadd.f32 %v2217, %v2139
        %v2219 = vadd.f32 %v2218, %v2141
        %v2220 = vadd.f32 %v2219, %v2143
        %v2221 = vadd.f32 %v2220, %v2145
        %v2222 = vadd.f32 %v2221, %v2147
        %v2223 = vadd.f32 %v2222, %v2149
        %v2224 = vadd.f32 %v2223, %v2151
        %v2225 = vadd.f32 %v2224, %v2153
        %v2226 = vadd.f32 %v2225, %v2155
        %v2227 = vadd.f32 %v2226, %v2157
        %v2228 = vadd.f32 %v2227, %v2159
        %v2229 = vadd.f32 %v2228, %v2161
        %v2230 = vrot.slane %v2229, 4
        %v2231 = vadd.f32 %v2229, %v2230
        %v2232 = vrot.slane %v2231, 2
        %v2233 = vadd.f32 %v2231, %v2232
        %v2234 = vrot.slane %v2233, 1
        %v2235 = vadd.f32 %v2233, %v2234
        %s2236 = scalar_lea.vmem %s199, 20
        %v2237 = vld [vmem:[%s2236] sm:$0xf]
        %2239 = vst [vmem:[#allocation1] ss:$4 sm:$0xff] %v2237
        %v2240 = vld.sshfl [vmem:[#allocation1] sm:$0xff pattern:$0x73625140]
        %v2241 = vld.sshfl [vmem:[#allocation1 + $0x8] sm:$0xff pattern:$0x73625140]
        %2244 = vxpose.binary.xlu0.c.b16.start [1/16] %v2241, %v2240, 128
        %2245 = vxpose.binary.xlu0.c.b16.cont [2/16] 0, 0, 128
        %2246 = vxpose.binary.xlu0.c.b16.cont [3/16] 0, 0, 128
        %2247 = vxpose.binary.xlu0.c.b16.cont [4/16] 0, 0, 128
        %2248 = vxpose.binary.xlu0.c.b16.cont [5/16] 0, 0, 128
        %2249 = vxpose.binary.xlu0.c.b16.cont [6/16] 0, 0, 128
        %2250 = vxpose.binary.xlu0.c.b16.cont [7/16] 0, 0, 128
        %2251 = vxpose.binary.xlu0.c.b16.end [8/16] 0, 0, 128
        %v2252 = vpop.trf.xlu0
        %v2253 = vpop.trf.xlu0
        %v2254 = vpop.trf.xlu0
        %v2255 = vpop.trf.xlu0
        %v2256 = vpop.trf.xlu0
        %v2257 = vpop.trf.xlu0
        %v2258 = vpop.trf.xlu0
        %v2259 = vpop.trf.xlu0
        %v2260 = vpop.trf.xlu0
        %v2261 = vpop.trf.xlu0
        %v2262 = vpop.trf.xlu0
        %v2263 = vpop.trf.xlu0
        %v2264 = vpop.trf.xlu0
        %v2265 = vpop.trf.xlu0
        %v2266 = vpop.trf.xlu0
        %v2267 = vpop.trf.xlu0
        %2268 = vst [vmem:[#allocation1] ss:$4 sm:$0xff] %v210
        %v2269 = vld.sshfl [vmem:[#allocation1] sm:$0xff pattern:$0x73625140]
        %v2270 = vld.sshfl [vmem:[#allocation1 + $0x8] sm:$0xff pattern:$0x73625140]
        %v2272 = vsel %vm251, %v2252, 0
        %v2275 = vsel %vm251, %v2254, 0
        %v2278 = vsel %vm251, %v2256, 0
        %v2281 = vsel %vm251, %v2258, 0
        %v2284 = vsel %vm251, %v2260, 0
        %v2287 = vsel %vm251, %v2262, 0
        %v2290 = vsel %vm251, %v2264, 0
        %v2293 = vsel %vm251, %v2266, 0
        %v2296 = vsel %vm251, %v2253, 0
        %v2299 = vsel %vm251, %v2255, 0
        %v2302 = vsel %vm251, %v2257, 0
        %v2305 = vsel %vm251, %v2259, 0
        %v2308 = vsel %vm251, %v2261, 0
        %v2311 = vsel %vm251, %v2263, 0
        %v2314 = vsel %vm251, %v2265, 0
        %v2317 = vsel %vm251, %v2267, 0
        %v2319 = vand.u32 %v2269, %v303
        %v2321 = vand.u32 %v2270, %v303
        %2323 = vmatpush.bf16.msra.mxu0 0
        %2324 = vmatpush.bf16.msra.mxu0 0
        %2325 = vmatpush.bf16.msra.mxu0 0
        %2326 = vmatpush.bf16.msra.mxu0 0
        %2327 = vmatpush.bf16.msra.mxu0 0
        %2328 = vmatpush.bf16.msra.mxu0 0
        %2329 = vmatpush.bf16.msra.mxu0 0
        %2330 = vmatpush.bf16.msra.mxu0 %v2319
        %2331 = vmatmul.bf16.gmra.mxu0 %v2272
        %v2332 = vpop.f32.mrf.mxu0
        %v2333 = vadd.f32 %v213, %v2332
        %v2334 = vpop.f32.mrf.mxu0
        %v2335 = vadd.f32 %v213, %v2334
        %2336 = vmatmul.bf16.gmra.mxu0 %v2275
        %v2337 = vpop.f32.mrf.mxu0
        %v2338 = vadd.f32 %v213, %v2337
        %v2339 = vpop.f32.mrf.mxu0
        %v2340 = vadd.f32 %v213, %v2339
        %2341 = vmatmul.bf16.gmra.mxu0 %v2278
        %v2342 = vpop.f32.mrf.mxu0
        %v2343 = vadd.f32 %v213, %v2342
        %v2344 = vpop.f32.mrf.mxu0
        %v2345 = vadd.f32 %v213, %v2344
        %2346 = vmatmul.bf16.gmra.mxu0 %v2281
        %v2347 = vpop.f32.mrf.mxu0
        %v2348 = vadd.f32 %v213, %v2347
        %v2349 = vpop.f32.mrf.mxu0
        %v2350 = vadd.f32 %v213, %v2349
        %2351 = vmatmul.bf16.gmra.mxu0 %v2284
        %v2352 = vpop.f32.mrf.mxu0
        %v2353 = vadd.f32 %v213, %v2352
        %v2354 = vpop.f32.mrf.mxu0
        %v2355 = vadd.f32 %v213, %v2354
        %2356 = vmatmul.bf16.gmra.mxu0 %v2287
        %v2357 = vpop.f32.mrf.mxu0
        %v2358 = vadd.f32 %v213, %v2357
        %v2359 = vpop.f32.mrf.mxu0
        %v2360 = vadd.f32 %v213, %v2359
        %2361 = vmatmul.bf16.gmra.mxu0 %v2290
        %v2362 = vpop.f32.mrf.mxu0
        %v2363 = vadd.f32 %v213, %v2362
        %v2364 = vpop.f32.mrf.mxu0
        %v2365 = vadd.f32 %v213, %v2364
        %2366 = vmatmul.bf16.gmra.mxu0 %v2293
        %v2367 = vpop.f32.mrf.mxu0
        %v2368 = vadd.f32 %v213, %v2367
        %v2369 = vpop.f32.mrf.mxu0
        %v2370 = vadd.f32 %v213, %v2369
        %2371 = vmatmul.bf16.gmra.mxu0 %v2296
        %v2372 = vpop.f32.mrf.mxu0
        %v2373 = vadd.f32 %v213, %v2372
        %v2374 = vpop.f32.mrf.mxu0
        %v2375 = vadd.f32 %v213, %v2374
        %2376 = vmatmul.bf16.gmra.mxu0 %v2299
        %v2377 = vpop.f32.mrf.mxu0
        %v2378 = vadd.f32 %v213, %v2377
        %v2379 = vpop.f32.mrf.mxu0
        %v2380 = vadd.f32 %v213, %v2379
        %2381 = vmatmul.bf16.gmra.mxu0 %v2302
        %v2382 = vpop.f32.mrf.mxu0
        %v2383 = vadd.f32 %v213, %v2382
        %v2384 = vpop.f32.mrf.mxu0
        %v2385 = vadd.f32 %v213, %v2384
        %2386 = vmatmul.bf16.gmra.mxu0 %v2305
        %v2387 = vpop.f32.mrf.mxu0
        %v2388 = vadd.f32 %v213, %v2387
        %v2389 = vpop.f32.mrf.mxu0
        %v2390 = vadd.f32 %v213, %v2389
        %2391 = vmatmul.bf16.gmra.mxu0 %v2308
        %v2392 = vpop.f32.mrf.mxu0
        %v2393 = vadd.f32 %v213, %v2392
        %v2394 = vpop.f32.mrf.mxu0
        %v2395 = vadd.f32 %v213, %v2394
        %2396 = vmatmul.bf16.gmra.mxu0 %v2311
        %v2397 = vpop.f32.mrf.mxu0
        %v2398 = vadd.f32 %v213, %v2397
        %v2399 = vpop.f32.mrf.mxu0
        %v2400 = vadd.f32 %v213, %v2399
        %2401 = vmatmul.bf16.gmra.mxu0 %v2314
        %v2402 = vpop.f32.mrf.mxu0
        %v2403 = vadd.f32 %v213, %v2402
        %v2404 = vpop.f32.mrf.mxu0
        %v2405 = vadd.f32 %v213, %v2404
        %2406 = vmatmul.bf16.gmra.mxu0 %v2317
        %v2407 = vpop.f32.mrf.mxu0
        %v2408 = vadd.f32 %v213, %v2407
        %v2409 = vpop.f32.mrf.mxu0
        %v2410 = vadd.f32 %v213, %v2409
        %2411 = vdwg.mxu0
        %2412 = vmatpush.bf16.msra.mxu0 0
        %2413 = vmatpush.bf16.msra.mxu0 0
        %2414 = vmatpush.bf16.msra.mxu0 0
        %2415 = vmatpush.bf16.msra.mxu0 0
        %2416 = vmatpush.bf16.msra.mxu0 0
        %2417 = vmatpush.bf16.msra.mxu0 0
        %2418 = vmatpush.bf16.msra.mxu0 0
        %2419 = vmatpush.bf16.msra.mxu0 %v2321
        %2420 = vmatmul.bf16.gmra.mxu0 %v2272
        %v2421 = vpop.f32.mrf.mxu0
        %v2422 = vadd.f32 %v214, %v2421
        %v2423 = vpop.f32.mrf.mxu0
        %v2424 = vadd.f32 %v214, %v2423
        %2425 = vmatmul.bf16.gmra.mxu0 %v2275
        %v2426 = vpop.f32.mrf.mxu0
        %v2427 = vadd.f32 %v214, %v2426
        %v2428 = vpop.f32.mrf.mxu0
        %v2429 = vadd.f32 %v214, %v2428
        %2430 = vmatmul.bf16.gmra.mxu0 %v2278
        %v2431 = vpop.f32.mrf.mxu0
        %v2432 = vadd.f32 %v214, %v2431
        %v2433 = vpop.f32.mrf.mxu0
        %v2434 = vadd.f32 %v214, %v2433
        %2435 = vmatmul.bf16.gmra.mxu0 %v2281
        %v2436 = vpop.f32.mrf.mxu0
        %v2437 = vadd.f32 %v214, %v2436
        %v2438 = vpop.f32.mrf.mxu0
        %v2439 = vadd.f32 %v214, %v2438
        %2440 = vmatmul.bf16.gmra.mxu0 %v2284
        %v2441 = vpop.f32.mrf.mxu0
        %v2442 = vadd.f32 %v214, %v2441
        %v2443 = vpop.f32.mrf.mxu0
        %v2444 = vadd.f32 %v214, %v2443
        %2445 = vmatmul.bf16.gmra.mxu0 %v2287
        %v2446 = vpop.f32.mrf.mxu0
        %v2447 = vadd.f32 %v214, %v2446
        %v2448 = vpop.f32.mrf.mxu0
        %v2449 = vadd.f32 %v214, %v2448
        %2450 = vmatmul.bf16.gmra.mxu0 %v2290
        %v2451 = vpop.f32.mrf.mxu0
        %v2452 = vadd.f32 %v214, %v2451
        %v2453 = vpop.f32.mrf.mxu0
        %v2454 = vadd.f32 %v214, %v2453
        %2455 = vmatmul.bf16.gmra.mxu0 %v2293
        %v2456 = vpop.f32.mrf.mxu0
        %v2457 = vadd.f32 %v214, %v2456
        %v2458 = vpop.f32.mrf.mxu0
        %v2459 = vadd.f32 %v214, %v2458
        %2460 = vmatmul.bf16.gmra.mxu0 %v2296
        %v2461 = vpop.f32.mrf.mxu0
        %v2462 = vadd.f32 %v214, %v2461
        %v2463 = vpop.f32.mrf.mxu0
        %v2464 = vadd.f32 %v214, %v2463
        %2465 = vmatmul.bf16.gmra.mxu0 %v2299
        %v2466 = vpop.f32.mrf.mxu0
        %v2467 = vadd.f32 %v214, %v2466
        %v2468 = vpop.f32.mrf.mxu0
        %v2469 = vadd.f32 %v214, %v2468
        %2470 = vmatmul.bf16.gmra.mxu0 %v2302
        %v2471 = vpop.f32.mrf.mxu0
        %v2472 = vadd.f32 %v214, %v2471
        %v2473 = vpop.f32.mrf.mxu0
        %v2474 = vadd.f32 %v214, %v2473
        %2475 = vmatmul.bf16.gmra.mxu0 %v2305
        %v2476 = vpop.f32.mrf.mxu0
        %v2477 = vadd.f32 %v214, %v2476
        %v2478 = vpop.f32.mrf.mxu0
        %v2479 = vadd.f32 %v214, %v2478
        %2480 = vmatmul.bf16.gmra.mxu0 %v2308
        %v2481 = vpop.f32.mrf.mxu0
        %v2482 = vadd.f32 %v214, %v2481
        %v2483 = vpop.f32.mrf.mxu0
        %v2484 = vadd.f32 %v214, %v2483
        %2485 = vmatmul.bf16.gmra.mxu0 %v2311
        %v2486 = vpop.f32.mrf.mxu0
        %v2487 = vadd.f32 %v214, %v2486
        %v2488 = vpop.f32.mrf.mxu0
        %v2489 = vadd.f32 %v214, %v2488
        %2490 = vmatmul.bf16.gmra.mxu0 %v2314
        %v2491 = vpop.f32.mrf.mxu0
        %v2492 = vadd.f32 %v214, %v2491
        %v2493 = vpop.f32.mrf.mxu0
        %v2494 = vadd.f32 %v214, %v2493
        %2495 = vmatmul.bf16.gmra.mxu0 %v2317
        %v2496 = vpop.f32.mrf.mxu0
        %v2497 = vadd.f32 %v214, %v2496
        %v2498 = vpop.f32.mrf.mxu0
        %v2499 = vadd.f32 %v214, %v2498
        %2500 = vdwg.mxu0
        %v2501 = vmax.f32 %v2333, 0.0
        %v2502 = vmax.f32 %v2422, 0.0
        %v2503 = vmax.f32 %v2335, 0.0
        %v2504 = vmax.f32 %v2424, 0.0
        %v2505 = vmax.f32 %v2338, 0.0
        %v2506 = vmax.f32 %v2427, 0.0
        %v2507 = vmax.f32 %v2340, 0.0
        %v2508 = vmax.f32 %v2429, 0.0
        %v2509 = vmax.f32 %v2343, 0.0
        %v2510 = vmax.f32 %v2432, 0.0
        %v2511 = vmax.f32 %v2345, 0.0
        %v2512 = vmax.f32 %v2434, 0.0
        %v2513 = vmax.f32 %v2348, 0.0
        %v2514 = vmax.f32 %v2437, 0.0
        %v2515 = vmax.f32 %v2350, 0.0
        %v2516 = vmax.f32 %v2439, 0.0
        %v2517 = vmax.f32 %v2353, 0.0
        %v2518 = vmax.f32 %v2442, 0.0
        %v2519 = vmax.f32 %v2355, 0.0
        %v2520 = vmax.f32 %v2444, 0.0
        %v2521 = vmax.f32 %v2358, 0.0
        %v2522 = vmax.f32 %v2447, 0.0
        %v2523 = vmax.f32 %v2360, 0.0
        %v2524 = vmax.f32 %v2449, 0.0
        %v2525 = vmax.f32 %v2363, 0.0
        %v2526 = vmax.f32 %v2452, 0.0
        %v2527 = vmax.f32 %v2365, 0.0
        %v2528 = vmax.f32 %v2454, 0.0
        %v2529 = vmax.f32 %v2368, 0.0
        %v2530 = vmax.f32 %v2457, 0.0
        %v2531 = vmax.f32 %v2370, 0.0
        %v2532 = vmax.f32 %v2459, 0.0
        %v2533 = vmax.f32 %v2373, 0.0
        %v2534 = vmax.f32 %v2462, 0.0
        %v2535 = vmax.f32 %v2375, 0.0
        %v2536 = vmax.f32 %v2464, 0.0
        %v2537 = vmax.f32 %v2378, 0.0
        %v2538 = vmax.f32 %v2467, 0.0
        %v2539 = vmax.f32 %v2380, 0.0
        %v2540 = vmax.f32 %v2469, 0.0
        %v2541 = vmax.f32 %v2383, 0.0
        %v2542 = vmax.f32 %v2472, 0.0
        %v2543 = vmax.f32 %v2385, 0.0
        %v2544 = vmax.f32 %v2474, 0.0
        %v2545 = vmax.f32 %v2388, 0.0
        %v2546 = vmax.f32 %v2477, 0.0
        %v2547 = vmax.f32 %v2390, 0.0
        %v2548 = vmax.f32 %v2479, 0.0
        %v2549 = vmax.f32 %v2393, 0.0
        %v2550 = vmax.f32 %v2482, 0.0
        %v2551 = vmax.f32 %v2395, 0.0
        %v2552 = vmax.f32 %v2484, 0.0
        %v2553 = vmax.f32 %v2398, 0.0
        %v2554 = vmax.f32 %v2487, 0.0
        %v2555 = vmax.f32 %v2400, 0.0
        %v2556 = vmax.f32 %v2489, 0.0
        %v2557 = vmax.f32 %v2403, 0.0
        %v2558 = vmax.f32 %v2492, 0.0
        %v2559 = vmax.f32 %v2405, 0.0
        %v2560 = vmax.f32 %v2494, 0.0
        %v2561 = vmax.f32 %v2408, 0.0
        %v2562 = vmax.f32 %v2497, 0.0
        %v2563 = vmax.f32 %v2410, 0.0
        %v2564 = vmax.f32 %v2499, 0.0
        %v2565 = vadd.f32 %v2501, %v2503
        %v2566 = vadd.f32 %v2565, %v2505
        %v2567 = vadd.f32 %v2566, %v2507
        %v2568 = vadd.f32 %v2567, %v2509
        %v2569 = vadd.f32 %v2568, %v2511
        %v2570 = vadd.f32 %v2569, %v2513
        %v2571 = vadd.f32 %v2570, %v2515
        %v2572 = vadd.f32 %v2571, %v2517
        %v2573 = vadd.f32 %v2572, %v2519
        %v2574 = vadd.f32 %v2573, %v2521
        %v2575 = vadd.f32 %v2574, %v2523
        %v2576 = vadd.f32 %v2575, %v2525
        %v2577 = vadd.f32 %v2576, %v2527
        %v2578 = vadd.f32 %v2577, %v2529
        %v2579 = vadd.f32 %v2578, %v2531
        %v2580 = vadd.f32 %v2579, %v2533
        %v2581 = vadd.f32 %v2580, %v2535
        %v2582 = vadd.f32 %v2581, %v2537
        %v2583 = vadd.f32 %v2582, %v2539
        %v2584 = vadd.f32 %v2583, %v2541
        %v2585 = vadd.f32 %v2584, %v2543
        %v2586 = vadd.f32 %v2585, %v2545
        %v2587 = vadd.f32 %v2586, %v2547
        %v2588 = vadd.f32 %v2587, %v2549
        %v2589 = vadd.f32 %v2588, %v2551
        %v2590 = vadd.f32 %v2589, %v2553
        %v2591 = vadd.f32 %v2590, %v2555
        %v2592 = vadd.f32 %v2591, %v2557
        %v2593 = vadd.f32 %v2592, %v2559
        %v2594 = vadd.f32 %v2593, %v2561
        %v2595 = vadd.f32 %v2594, %v2563
        %v2596 = vrot.slane %v2595, 4
        %v2597 = vadd.f32 %v2595, %v2596
        %v2598 = vrot.slane %v2597, 2
        %v2599 = vadd.f32 %v2597, %v2598
        %v2600 = vrot.slane %v2599, 1
        %v2601 = vadd.f32 %v2599, %v2600
        %v2602 = vadd.f32 %v2502, %v2504
        %v2603 = vadd.f32 %v2602, %v2506
        %v2604 = vadd.f32 %v2603, %v2508
        %v2605 = vadd.f32 %v2604, %v2510
        %v2606 = vadd.f32 %v2605, %v2512
        %v2607 = vadd.f32 %v2606, %v2514
        %v2608 = vadd.f32 %v2607, %v2516
        %v2609 = vadd.f32 %v2608, %v2518
        %v2610 = vadd.f32 %v2609, %v2520
        %v2611 = vadd.f32 %v2610, %v2522
        %v2612 = vadd.f32 %v2611, %v2524
        %v2613 = vadd.f32 %v2612, %v2526
        %v2614 = vadd.f32 %v2613, %v2528
        %v2615 = vadd.f32 %v2614, %v2530
        %v2616 = vadd.f32 %v2615, %v2532
        %v2617 = vadd.f32 %v2616, %v2534
        %v2618 = vadd.f32 %v2617, %v2536
        %v2619 = vadd.f32 %v2618, %v2538
        %v2620 = vadd.f32 %v2619, %v2540
        %v2621 = vadd.f32 %v2620, %v2542
        %v2622 = vadd.f32 %v2621, %v2544
        %v2623 = vadd.f32 %v2622, %v2546
        %v2624 = vadd.f32 %v2623, %v2548
        %v2625 = vadd.f32 %v2624, %v2550
        %v2626 = vadd.f32 %v2625, %v2552
        %v2627 = vadd.f32 %v2626, %v2554
        %v2628 = vadd.f32 %v2627, %v2556
        %v2629 = vadd.f32 %v2628, %v2558
        %v2630 = vadd.f32 %v2629, %v2560
        %v2631 = vadd.f32 %v2630, %v2562
        %v2632 = vadd.f32 %v2631, %v2564
        %v2633 = vrot.slane %v2632, 4
        %v2634 = vadd.f32 %v2632, %v2633
        %v2635 = vrot.slane %v2634, 2
        %v2636 = vadd.f32 %v2634, %v2635
        %v2637 = vrot.slane %v2636, 1
        %v2638 = vadd.f32 %v2636, %v2637
        %s2639 = scalar_lea.vmem %s199, 24
        %v2640 = vld [vmem:[%s2639] sm:$0xf]
        %2642 = vst [vmem:[#allocation1] ss:$4 sm:$0xff] %v2640
        %v2643 = vld.sshfl [vmem:[#allocation1] sm:$0xff pattern:$0x73625140]
        %v2644 = vld.sshfl [vmem:[#allocation1 + $0x8] sm:$0xff pattern:$0x73625140]
        %2647 = vxpose.binary.xlu0.c.b16.start [1/16] %v2644, %v2643, 128
        %2648 = vxpose.binary.xlu0.c.b16.cont [2/16] 0, 0, 128
        %2649 = vxpose.binary.xlu0.c.b16.cont [3/16] 0, 0, 128
        %2650 = vxpose.binary.xlu0.c.b16.cont [4/16] 0, 0, 128
        %2651 = vxpose.binary.xlu0.c.b16.cont [5/16] 0, 0, 128
        %2652 = vxpose.binary.xlu0.c.b16.cont [6/16] 0, 0, 128
        %2653 = vxpose.binary.xlu0.c.b16.cont [7/16] 0, 0, 128
        %2654 = vxpose.binary.xlu0.c.b16.end [8/16] 0, 0, 128
        %v2655 = vpop.trf.xlu0
        %v2656 = vpop.trf.xlu0
        %v2657 = vpop.trf.xlu0
        %v2658 = vpop.trf.xlu0
        %v2659 = vpop.trf.xlu0
        %v2660 = vpop.trf.xlu0
        %v2661 = vpop.trf.xlu0
        %v2662 = vpop.trf.xlu0
        %v2663 = vpop.trf.xlu0
        %v2664 = vpop.trf.xlu0
        %v2665 = vpop.trf.xlu0
        %v2666 = vpop.trf.xlu0
        %v2667 = vpop.trf.xlu0
        %v2668 = vpop.trf.xlu0
        %v2669 = vpop.trf.xlu0
        %v2670 = vpop.trf.xlu0
        %2671 = vst [vmem:[#allocation1] ss:$4 sm:$0xff] %v210
        %v2672 = vld.sshfl [vmem:[#allocation1] sm:$0xff pattern:$0x73625140]
        %v2673 = vld.sshfl [vmem:[#allocation1 + $0x8] sm:$0xff pattern:$0x73625140]
        %v2675 = vsel %vm251, %v2655, 0
        %v2678 = vsel %vm251, %v2657, 0
        %v2681 = vsel %vm251, %v2659, 0
        %v2684 = vsel %vm251, %v2661, 0
        %v2687 = vsel %vm251, %v2663, 0
        %v2690 = vsel %vm251, %v2665, 0
        %v2693 = vsel %vm251, %v2667, 0
        %v2696 = vsel %vm251, %v2669, 0
        %v2699 = vsel %vm251, %v2656, 0
        %v2702 = vsel %vm251, %v2658, 0
        %v2705 = vsel %vm251, %v2660, 0
        %v2708 = vsel %vm251, %v2662, 0
        %v2711 = vsel %vm251, %v2664, 0
        %v2714 = vsel %vm251, %v2666, 0
        %v2717 = vsel %vm251, %v2668, 0
        %v2720 = vsel %vm251, %v2670, 0
        %v2722 = vand.u32 %v2672, %v303
        %v2724 = vand.u32 %v2673, %v303
        %2726 = vmatpush.bf16.msra.mxu0 0
        %2727 = vmatpush.bf16.msra.mxu0 0
        %2728 = vmatpush.bf16.msra.mxu0 0
        %2729 = vmatpush.bf16.msra.mxu0 0
        %2730 = vmatpush.bf16.msra.mxu0 0
        %2731 = vmatpush.bf16.msra.mxu0 0
        %2732 = vmatpush.bf16.msra.mxu0 0
        %2733 = vmatpush.bf16.msra.mxu0 %v2722
        %2734 = vmatmul.bf16.gmra.mxu0 %v2675
        %v2735 = vpop.f32.mrf.mxu0
        %v2736 = vadd.f32 %v213, %v2735
        %v2737 = vpop.f32.mrf.mxu0
        %v2738 = vadd.f32 %v213, %v2737
        %2739 = vmatmul.bf16.gmra.mxu0 %v2678
        %v2740 = vpop.f32.mrf.mxu0
        %v2741 = vadd.f32 %v213, %v2740
        %v2742 = vpop.f32.mrf.mxu0
        %v2743 = vadd.f32 %v213, %v2742
        %2744 = vmatmul.bf16.gmra.mxu0 %v2681
        %v2745 = vpop.f32.mrf.mxu0
        %v2746 = vadd.f32 %v213, %v2745
        %v2747 = vpop.f32.mrf.mxu0
        %v2748 = vadd.f32 %v213, %v2747
        %2749 = vmatmul.bf16.gmra.mxu0 %v2684
        %v2750 = vpop.f32.mrf.mxu0
        %v2751 = vadd.f32 %v213, %v2750
        %v2752 = vpop.f32.mrf.mxu0
        %v2753 = vadd.f32 %v213, %v2752
        %2754 = vmatmul.bf16.gmra.mxu0 %v2687
        %v2755 = vpop.f32.mrf.mxu0
        %v2756 = vadd.f32 %v213, %v2755
        %v2757 = vpop.f32.mrf.mxu0
        %v2758 = vadd.f32 %v213, %v2757
        %2759 = vmatmul.bf16.gmra.mxu0 %v2690
        %v2760 = vpop.f32.mrf.mxu0
        %v2761 = vadd.f32 %v213, %v2760
        %v2762 = vpop.f32.mrf.mxu0
        %v2763 = vadd.f32 %v213, %v2762
        %2764 = vmatmul.bf16.gmra.mxu0 %v2693
        %v2765 = vpop.f32.mrf.mxu0
        %v2766 = vadd.f32 %v213, %v2765
        %v2767 = vpop.f32.mrf.mxu0
        %v2768 = vadd.f32 %v213, %v2767
        %2769 = vmatmul.bf16.gmra.mxu0 %v2696
        %v2770 = vpop.f32.mrf.mxu0
        %v2771 = vadd.f32 %v213, %v2770
        %v2772 = vpop.f32.mrf.mxu0
        %v2773 = vadd.f32 %v213, %v2772
        %2774 = vmatmul.bf16.gmra.mxu0 %v2699
        %v2775 = vpop.f32.mrf.mxu0
        %v2776 = vadd.f32 %v213, %v2775
        %v2777 = vpop.f32.mrf.mxu0
        %v2778 = vadd.f32 %v213, %v2777
        %2779 = vmatmul.bf16.gmra.mxu0 %v2702
        %v2780 = vpop.f32.mrf.mxu0
        %v2781 = vadd.f32 %v213, %v2780
        %v2782 = vpop.f32.mrf.mxu0
        %v2783 = vadd.f32 %v213, %v2782
        %2784 = vmatmul.bf16.gmra.mxu0 %v2705
        %v2785 = vpop.f32.mrf.mxu0
        %v2786 = vadd.f32 %v213, %v2785
        %v2787 = vpop.f32.mrf.mxu0
        %v2788 = vadd.f32 %v213, %v2787
        %2789 = vmatmul.bf16.gmra.mxu0 %v2708
        %v2790 = vpop.f32.mrf.mxu0
        %v2791 = vadd.f32 %v213, %v2790
        %v2792 = vpop.f32.mrf.mxu0
        %v2793 = vadd.f32 %v213, %v2792
        %2794 = vmatmul.bf16.gmra.mxu0 %v2711
        %v2795 = vpop.f32.mrf.mxu0
        %v2796 = vadd.f32 %v213, %v2795
        %v2797 = vpop.f32.mrf.mxu0
        %v2798 = vadd.f32 %v213, %v2797
        %2799 = vmatmul.bf16.gmra.mxu0 %v2714
        %v2800 = vpop.f32.mrf.mxu0
        %v2801 = vadd.f32 %v213, %v2800
        %v2802 = vpop.f32.mrf.mxu0
        %v2803 = vadd.f32 %v213, %v2802
        %2804 = vmatmul.bf16.gmra.mxu0 %v2717
        %v2805 = vpop.f32.mrf.mxu0
        %v2806 = vadd.f32 %v213, %v2805
        %v2807 = vpop.f32.mrf.mxu0
        %v2808 = vadd.f32 %v213, %v2807
        %2809 = vmatmul.bf16.gmra.mxu0 %v2720
        %v2810 = vpop.f32.mrf.mxu0
        %v2811 = vadd.f32 %v213, %v2810
        %v2812 = vpop.f32.mrf.mxu0
        %v2813 = vadd.f32 %v213, %v2812
        %2814 = vdwg.mxu0
        %2815 = vmatpush.bf16.msra.mxu0 0
        %2816 = vmatpush.bf16.msra.mxu0 0
        %2817 = vmatpush.bf16.msra.mxu0 0
        %2818 = vmatpush.bf16.msra.mxu0 0
        %2819 = vmatpush.bf16.msra.mxu0 0
        %2820 = vmatpush.bf16.msra.mxu0 0
        %2821 = vmatpush.bf16.msra.mxu0 0
        %2822 = vmatpush.bf16.msra.mxu0 %v2724
        %2823 = vmatmul.bf16.gmra.mxu0 %v2675
        %v2824 = vpop.f32.mrf.mxu0
        %v2825 = vadd.f32 %v214, %v2824
        %v2826 = vpop.f32.mrf.mxu0
        %v2827 = vadd.f32 %v214, %v2826
        %2828 = vmatmul.bf16.gmra.mxu0 %v2678
        %v2829 = vpop.f32.mrf.mxu0
        %v2830 = vadd.f32 %v214, %v2829
        %v2831 = vpop.f32.mrf.mxu0
        %v2832 = vadd.f32 %v214, %v2831
        %2833 = vmatmul.bf16.gmra.mxu0 %v2681
        %v2834 = vpop.f32.mrf.mxu0
        %v2835 = vadd.f32 %v214, %v2834
        %v2836 = vpop.f32.mrf.mxu0
        %v2837 = vadd.f32 %v214, %v2836
        %2838 = vmatmul.bf16.gmra.mxu0 %v2684
        %v2839 = vpop.f32.mrf.mxu0
        %v2840 = vadd.f32 %v214, %v2839
        %v2841 = vpop.f32.mrf.mxu0
        %v2842 = vadd.f32 %v214, %v2841
        %2843 = vmatmul.bf16.gmra.mxu0 %v2687
        %v2844 = vpop.f32.mrf.mxu0
        %v2845 = vadd.f32 %v214, %v2844
        %v2846 = vpop.f32.mrf.mxu0
        %v2847 = vadd.f32 %v214, %v2846
        %2848 = vmatmul.bf16.gmra.mxu0 %v2690
        %v2849 = vpop.f32.mrf.mxu0
        %v2850 = vadd.f32 %v214, %v2849
        %v2851 = vpop.f32.mrf.mxu0
        %v2852 = vadd.f32 %v214, %v2851
        %2853 = vmatmul.bf16.gmra.mxu0 %v2693
        %v2854 = vpop.f32.mrf.mxu0
        %v2855 = vadd.f32 %v214, %v2854
        %v2856 = vpop.f32.mrf.mxu0
        %v2857 = vadd.f32 %v214, %v2856
        %2858 = vmatmul.bf16.gmra.mxu0 %v2696
        %v2859 = vpop.f32.mrf.mxu0
        %v2860 = vadd.f32 %v214, %v2859
        %v2861 = vpop.f32.mrf.mxu0
        %v2862 = vadd.f32 %v214, %v2861
        %2863 = vmatmul.bf16.gmra.mxu0 %v2699
        %v2864 = vpop.f32.mrf.mxu0
        %v2865 = vadd.f32 %v214, %v2864
        %v2866 = vpop.f32.mrf.mxu0
        %v2867 = vadd.f32 %v214, %v2866
        %2868 = vmatmul.bf16.gmra.mxu0 %v2702
        %v2869 = vpop.f32.mrf.mxu0
        %v2870 = vadd.f32 %v214, %v2869
        %v2871 = vpop.f32.mrf.mxu0
        %v2872 = vadd.f32 %v214, %v2871
        %2873 = vmatmul.bf16.gmra.mxu0 %v2705
        %v2874 = vpop.f32.mrf.mxu0
        %v2875 = vadd.f32 %v214, %v2874
        %v2876 = vpop.f32.mrf.mxu0
        %v2877 = vadd.f32 %v214, %v2876
        %2878 = vmatmul.bf16.gmra.mxu0 %v2708
        %v2879 = vpop.f32.mrf.mxu0
        %v2880 = vadd.f32 %v214, %v2879
        %v2881 = vpop.f32.mrf.mxu0
        %v2882 = vadd.f32 %v214, %v2881
        %2883 = vmatmul.bf16.gmra.mxu0 %v2711
        %v2884 = vpop.f32.mrf.mxu0
        %v2885 = vadd.f32 %v214, %v2884
        %v2886 = vpop.f32.mrf.mxu0
        %v2887 = vadd.f32 %v214, %v2886
        %2888 = vmatmul.bf16.gmra.mxu0 %v2714
        %v2889 = vpop.f32.mrf.mxu0
        %v2890 = vadd.f32 %v214, %v2889
        %v2891 = vpop.f32.mrf.mxu0
        %v2892 = vadd.f32 %v214, %v2891
        %2893 = vmatmul.bf16.gmra.mxu0 %v2717
        %v2894 = vpop.f32.mrf.mxu0
        %v2895 = vadd.f32 %v214, %v2894
        %v2896 = vpop.f32.mrf.mxu0
        %v2897 = vadd.f32 %v214, %v2896
        %2898 = vmatmul.bf16.gmra.mxu0 %v2720
        %v2899 = vpop.f32.mrf.mxu0
        %v2900 = vadd.f32 %v214, %v2899
        %v2901 = vpop.f32.mrf.mxu0
        %v2902 = vadd.f32 %v214, %v2901
        %2903 = vdwg.mxu0
        %v2904 = vmax.f32 %v2736, 0.0
        %v2905 = vmax.f32 %v2825, 0.0
        %v2906 = vmax.f32 %v2738, 0.0
        %v2907 = vmax.f32 %v2827, 0.0
        %v2908 = vmax.f32 %v2741, 0.0
        %v2909 = vmax.f32 %v2830, 0.0
        %v2910 = vmax.f32 %v2743, 0.0
        %v2911 = vmax.f32 %v2832, 0.0
        %v2912 = vmax.f32 %v2746, 0.0
        %v2913 = vmax.f32 %v2835, 0.0
        %v2914 = vmax.f32 %v2748, 0.0
        %v2915 = vmax.f32 %v2837, 0.0
        %v2916 = vmax.f32 %v2751, 0.0
        %v2917 = vmax.f32 %v2840, 0.0
        %v2918 = vmax.f32 %v2753, 0.0
        %v2919 = vmax.f32 %v2842, 0.0
        %v2920 = vmax.f32 %v2756, 0.0
        %v2921 = vmax.f32 %v2845, 0.0
        %v2922 = vmax.f32 %v2758, 0.0
        %v2923 = vmax.f32 %v2847, 0.0
        %v2924 = vmax.f32 %v2761, 0.0
        %v2925 = vmax.f32 %v2850, 0.0
        %v2926 = vmax.f32 %v2763, 0.0
        %v2927 = vmax.f32 %v2852, 0.0
        %v2928 = vmax.f32 %v2766, 0.0
        %v2929 = vmax.f32 %v2855, 0.0
        %v2930 = vmax.f32 %v2768, 0.0
        %v2931 = vmax.f32 %v2857, 0.0
        %v2932 = vmax.f32 %v2771, 0.0
        %v2933 = vmax.f32 %v2860, 0.0
        %v2934 = vmax.f32 %v2773, 0.0
        %v2935 = vmax.f32 %v2862, 0.0
        %v2936 = vmax.f32 %v2776, 0.0
        %v2937 = vmax.f32 %v2865, 0.0
        %v2938 = vmax.f32 %v2778, 0.0
        %v2939 = vmax.f32 %v2867, 0.0
        %v2940 = vmax.f32 %v2781, 0.0
        %v2941 = vmax.f32 %v2870, 0.0
        %v2942 = vmax.f32 %v2783, 0.0
        %v2943 = vmax.f32 %v2872, 0.0
        %v2944 = vmax.f32 %v2786, 0.0
        %v2945 = vmax.f32 %v2875, 0.0
        %v2946 = vmax.f32 %v2788, 0.0
        %v2947 = vmax.f32 %v2877, 0.0
        %v2948 = vmax.f32 %v2791, 0.0
        %v2949 = vmax.f32 %v2880, 0.0
        %v2950 = vmax.f32 %v2793, 0.0
        %v2951 = vmax.f32 %v2882, 0.0
        %v2952 = vmax.f32 %v2796, 0.0
        %v2953 = vmax.f32 %v2885, 0.0
        %v2954 = vmax.f32 %v2798, 0.0
        %v2955 = vmax.f32 %v2887, 0.0
        %v2956 = vmax.f32 %v2801, 0.0
        %v2957 = vmax.f32 %v2890, 0.0
        %v2958 = vmax.f32 %v2803, 0.0
        %v2959 = vmax.f32 %v2892, 0.0
        %v2960 = vmax.f32 %v2806, 0.0
        %v2961 = vmax.f32 %v2895, 0.0
        %v2962 = vmax.f32 %v2808, 0.0
        %v2963 = vmax.f32 %v2897, 0.0
        %v2964 = vmax.f32 %v2811, 0.0
        %v2965 = vmax.f32 %v2900, 0.0
        %v2966 = vmax.f32 %v2813, 0.0
        %v2967 = vmax.f32 %v2902, 0.0
        %v2968 = vadd.f32 %v2904, %v2906
        %v2969 = vadd.f32 %v2968, %v2908
        %v2970 = vadd.f32 %v2969, %v2910
        %v2971 = vadd.f32 %v2970, %v2912
        %v2972 = vadd.f32 %v2971, %v2914
        %v2973 = vadd.f32 %v2972, %v2916
        %v2974 = vadd.f32 %v2973, %v2918
        %v2975 = vadd.f32 %v2974, %v2920
        %v2976 = vadd.f32 %v2975, %v2922
        %v2977 = vadd.f32 %v2976, %v2924
        %v2978 = vadd.f32 %v2977, %v2926
        %v2979 = vadd.f32 %v2978, %v2928
        %v2980 = vadd.f32 %v2979, %v2930
        %v2981 = vadd.f32 %v2980, %v2932
        %v2982 = vadd.f32 %v2981, %v2934
        %v2983 = vadd.f32 %v2982, %v2936
        %v2984 = vadd.f32 %v2983, %v2938
        %v2985 = vadd.f32 %v2984, %v2940
        %v2986 = vadd.f32 %v2985, %v2942
        %v2987 = vadd.f32 %v2986, %v2944
        %v2988 = vadd.f32 %v2987, %v2946
        %v2989 = vadd.f32 %v2988, %v2948
        %v2990 = vadd.f32 %v2989, %v2950
        %v2991 = vadd.f32 %v2990, %v2952
        %v2992 = vadd.f32 %v2991, %v2954
        %v2993 = vadd.f32 %v2992, %v2956
        %v2994 = vadd.f32 %v2993, %v2958
        %v2995 = vadd.f32 %v2994, %v2960
        %v2996 = vadd.f32 %v2995, %v2962
        %v2997 = vadd.f32 %v2996, %v2964
        %v2998 = vadd.f32 %v2997, %v2966
        %v2999 = vrot.slane %v2998, 4
        %v3000 = vadd.f32 %v2998, %v2999
        %v3001 = vrot.slane %v3000, 2
        %v3002 = vadd.f32 %v3000, %v3001
        %v3003 = vrot.slane %v3002, 1
        %v3004 = vadd.f32 %v3002, %v3003
        %v3005 = vadd.f32 %v2905, %v2907
        %v3006 = vadd.f32 %v3005, %v2909
        %v3007 = vadd.f32 %v3006, %v2911
        %v3008 = vadd.f32 %v3007, %v2913
        %v3009 = vadd.f32 %v3008, %v2915
        %v3010 = vadd.f32 %v3009, %v2917
        %v3011 = vadd.f32 %v3010, %v2919
        %v3012 = vadd.f32 %v3011, %v2921
        %v3013 = vadd.f32 %v3012, %v2923
        %v3014 = vadd.f32 %v3013, %v2925
        %v3015 = vadd.f32 %v3014, %v2927
        %v3016 = vadd.f32 %v3015, %v2929
        %v3017 = vadd.f32 %v3016, %v2931
        %v3018 = vadd.f32 %v3017, %v2933
        %v3019 = vadd.f32 %v3018, %v2935
        %v3020 = vadd.f32 %v3019, %v2937
        %v3021 = vadd.f32 %v3020, %v2939
        %v3022 = vadd.f32 %v3021, %v2941
        %v3023 = vadd.f32 %v3022, %v2943
        %v3024 = vadd.f32 %v3023, %v2945
        %v3025 = vadd.f32 %v3024, %v2947
        %v3026 = vadd.f32 %v3025, %v2949
        %v3027 = vadd.f32 %v3026, %v2951
        %v3028 = vadd.f32 %v3027, %v2953
        %v3029 = vadd.f32 %v3028, %v2955
        %v3030 = vadd.f32 %v3029, %v2957
        %v3031 = vadd.f32 %v3030, %v2959
        %v3032 = vadd.f32 %v3031, %v2961
        %v3033 = vadd.f32 %v3032, %v2963
        %v3034 = vadd.f32 %v3033, %v2965
        %v3035 = vadd.f32 %v3034, %v2967
        %v3036 = vrot.slane %v3035, 4
        %v3037 = vadd.f32 %v3035, %v3036
        %v3038 = vrot.slane %v3037, 2
        %v3039 = vadd.f32 %v3037, %v3038
        %v3040 = vrot.slane %v3039, 1
        %v3041 = vadd.f32 %v3039, %v3040
        %s3042 = scalar_lea.vmem %s199, 28
        %v3043 = vld [vmem:[%s3042] sm:$0xf]
        %3045 = vst [vmem:[#allocation1] ss:$4 sm:$0xff] %v3043
        %v3046 = vld.sshfl [vmem:[#allocation1] sm:$0xff pattern:$0x73625140]
        %v3047 = vld.sshfl [vmem:[#allocation1 + $0x8] sm:$0xff pattern:$0x73625140]
        %3050 = vxpose.binary.xlu0.c.b16.start [1/16] %v3047, %v3046, 128
        %3051 = vxpose.binary.xlu0.c.b16.cont [2/16] 0, 0, 128
        %3052 = vxpose.binary.xlu0.c.b16.cont [3/16] 0, 0, 128
        %3053 = vxpose.binary.xlu0.c.b16.cont [4/16] 0, 0, 128
        %3054 = vxpose.binary.xlu0.c.b16.cont [5/16] 0, 0, 128
        %3055 = vxpose.binary.xlu0.c.b16.cont [6/16] 0, 0, 128
        %3056 = vxpose.binary.xlu0.c.b16.cont [7/16] 0, 0, 128
        %3057 = vxpose.binary.xlu0.c.b16.end [8/16] 0, 0, 128
        %v3058 = vpop.trf.xlu0
        %v3059 = vpop.trf.xlu0
        %v3060 = vpop.trf.xlu0
        %v3061 = vpop.trf.xlu0
        %v3062 = vpop.trf.xlu0
        %v3063 = vpop.trf.xlu0
        %v3064 = vpop.trf.xlu0
        %v3065 = vpop.trf.xlu0
        %v3066 = vpop.trf.xlu0
        %v3067 = vpop.trf.xlu0
        %v3068 = vpop.trf.xlu0
        %v3069 = vpop.trf.xlu0
        %v3070 = vpop.trf.xlu0
        %v3071 = vpop.trf.xlu0
        %v3072 = vpop.trf.xlu0
        %v3073 = vpop.trf.xlu0
        %3074 = vst [vmem:[#allocation1] ss:$4 sm:$0xff] %v210
        %v3075 = vld.sshfl [vmem:[#allocation1] sm:$0xff pattern:$0x73625140]
        %v3076 = vld.sshfl [vmem:[#allocation1 + $0x8] sm:$0xff pattern:$0x73625140]
        %v3078 = vsel %vm251, %v3058, 0
        %v3081 = vsel %vm251, %v3060, 0
        %v3084 = vsel %vm251, %v3062, 0
        %v3087 = vsel %vm251, %v3064, 0
        %v3090 = vsel %vm251, %v3066, 0
        %v3093 = vsel %vm251, %v3068, 0
        %v3096 = vsel %vm251, %v3070, 0
        %v3099 = vsel %vm251, %v3072, 0
        %v3102 = vsel %vm251, %v3059, 0
        %v3105 = vsel %vm251, %v3061, 0
        %v3108 = vsel %vm251, %v3063, 0
        %v3111 = vsel %vm251, %v3065, 0
        %v3114 = vsel %vm251, %v3067, 0
        %v3117 = vsel %vm251, %v3069, 0
        %v3120 = vsel %vm251, %v3071, 0
        %v3123 = vsel %vm251, %v3073, 0
        %v3125 = vand.u32 %v3075, %v303
        %v3127 = vand.u32 %v3076, %v303
        %3129 = vmatpush.bf16.msra.mxu0 0
        %3130 = vmatpush.bf16.msra.mxu0 0
        %3131 = vmatpush.bf16.msra.mxu0 0
        %3132 = vmatpush.bf16.msra.mxu0 0
        %3133 = vmatpush.bf16.msra.mxu0 0
        %3134 = vmatpush.bf16.msra.mxu0 0
        %3135 = vmatpush.bf16.msra.mxu0 0
        %3136 = vmatpush.bf16.msra.mxu0 %v3125
        %3137 = vmatmul.bf16.gmra.mxu0 %v3078
        %v3138 = vpop.f32.mrf.mxu0
        %v3139 = vadd.f32 %v213, %v3138
        %v3140 = vpop.f32.mrf.mxu0
        %v3141 = vadd.f32 %v213, %v3140
        %3142 = vmatmul.bf16.gmra.mxu0 %v3081
        %v3143 = vpop.f32.mrf.mxu0
        %v3144 = vadd.f32 %v213, %v3143
        %v3145 = vpop.f32.mrf.mxu0
        %v3146 = vadd.f32 %v213, %v3145
        %3147 = vmatmul.bf16.gmra.mxu0 %v3084
        %v3148 = vpop.f32.mrf.mxu0
        %v3149 = vadd.f32 %v213, %v3148
        %v3150 = vpop.f32.mrf.mxu0
        %v3151 = vadd.f32 %v213, %v3150
        %3152 = vmatmul.bf16.gmra.mxu0 %v3087
        %v3153 = vpop.f32.mrf.mxu0
        %v3154 = vadd.f32 %v213, %v3153
        %v3155 = vpop.f32.mrf.mxu0
        %v3156 = vadd.f32 %v213, %v3155
        %3157 = vmatmul.bf16.gmra.mxu0 %v3090
        %v3158 = vpop.f32.mrf.mxu0
        %v3159 = vadd.f32 %v213, %v3158
        %v3160 = vpop.f32.mrf.mxu0
        %v3161 = vadd.f32 %v213, %v3160
        %3162 = vmatmul.bf16.gmra.mxu0 %v3093
        %v3163 = vpop.f32.mrf.mxu0
        %v3164 = vadd.f32 %v213, %v3163
        %v3165 = vpop.f32.mrf.mxu0
        %v3166 = vadd.f32 %v213, %v3165
        %3167 = vmatmul.bf16.gmra.mxu0 %v3096
        %v3168 = vpop.f32.mrf.mxu0
        %v3169 = vadd.f32 %v213, %v3168
        %v3170 = vpop.f32.mrf.mxu0
        %v3171 = vadd.f32 %v213, %v3170
        %3172 = vmatmul.bf16.gmra.mxu0 %v3099
        %v3173 = vpop.f32.mrf.mxu0
        %v3174 = vadd.f32 %v213, %v3173
        %v3175 = vpop.f32.mrf.mxu0
        %v3176 = vadd.f32 %v213, %v3175
        %3177 = vmatmul.bf16.gmra.mxu0 %v3102
        %v3178 = vpop.f32.mrf.mxu0
        %v3179 = vadd.f32 %v213, %v3178
        %v3180 = vpop.f32.mrf.mxu0
        %v3181 = vadd.f32 %v213, %v3180
        %3182 = vmatmul.bf16.gmra.mxu0 %v3105
        %v3183 = vpop.f32.mrf.mxu0
        %v3184 = vadd.f32 %v213, %v3183
        %v3185 = vpop.f32.mrf.mxu0
        %v3186 = vadd.f32 %v213, %v3185
        %3187 = vmatmul.bf16.gmra.mxu0 %v3108
        %v3188 = vpop.f32.mrf.mxu0
        %v3189 = vadd.f32 %v213, %v3188
        %v3190 = vpop.f32.mrf.mxu0
        %v3191 = vadd.f32 %v213, %v3190
        %3192 = vmatmul.bf16.gmra.mxu0 %v3111
        %v3193 = vpop.f32.mrf.mxu0
        %v3194 = vadd.f32 %v213, %v3193
        %v3195 = vpop.f32.mrf.mxu0
        %v3196 = vadd.f32 %v213, %v3195
        %3197 = vmatmul.bf16.gmra.mxu0 %v3114
        %v3198 = vpop.f32.mrf.mxu0
        %v3199 = vadd.f32 %v213, %v3198
        %v3200 = vpop.f32.mrf.mxu0
        %v3201 = vadd.f32 %v213, %v3200
        %3202 = vmatmul.bf16.gmra.mxu0 %v3117
        %v3203 = vpop.f32.mrf.mxu0
        %v3204 = vadd.f32 %v213, %v3203
        %v3205 = vpop.f32.mrf.mxu0
        %v3206 = vadd.f32 %v213, %v3205
        %3207 = vmatmul.bf16.gmra.mxu0 %v3120
        %v3208 = vpop.f32.mrf.mxu0
        %v3209 = vadd.f32 %v213, %v3208
        %v3210 = vpop.f32.mrf.mxu0
        %v3211 = vadd.f32 %v213, %v3210
        %3212 = vmatmul.bf16.gmra.mxu0 %v3123
        %v3213 = vpop.f32.mrf.mxu0
        %v3214 = vadd.f32 %v213, %v3213
        %v3215 = vpop.f32.mrf.mxu0
        %v3216 = vadd.f32 %v213, %v3215
        %3217 = vdwg.mxu0
        %3218 = vmatpush.bf16.msra.mxu0 0
        %3219 = vmatpush.bf16.msra.mxu0 0
        %3220 = vmatpush.bf16.msra.mxu0 0
        %3221 = vmatpush.bf16.msra.mxu0 0
        %3222 = vmatpush.bf16.msra.mxu0 0
        %3223 = vmatpush.bf16.msra.mxu0 0
        %3224 = vmatpush.bf16.msra.mxu0 0
        %3225 = vmatpush.bf16.msra.mxu0 %v3127
        %3226 = vmatmul.bf16.gmra.mxu0 %v3078
        %v3227 = vpop.f32.mrf.mxu0
        %v3228 = vadd.f32 %v214, %v3227
        %v3229 = vpop.f32.mrf.mxu0
        %v3230 = vadd.f32 %v214, %v3229
        %3231 = vmatmul.bf16.gmra.mxu0 %v3081
        %v3232 = vpop.f32.mrf.mxu0
        %v3233 = vadd.f32 %v214, %v3232
        %v3234 = vpop.f32.mrf.mxu0
        %v3235 = vadd.f32 %v214, %v3234
        %3236 = vmatmul.bf16.gmra.mxu0 %v3084
        %v3237 = vpop.f32.mrf.mxu0
        %v3238 = vadd.f32 %v214, %v3237
        %v3239 = vpop.f32.mrf.mxu0
        %v3240 = vadd.f32 %v214, %v3239
        %3241 = vmatmul.bf16.gmra.mxu0 %v3087
        %v3242 = vpop.f32.mrf.mxu0
        %v3243 = vadd.f32 %v214, %v3242
        %v3244 = vpop.f32.mrf.mxu0
        %v3245 = vadd.f32 %v214, %v3244
        %3246 = vmatmul.bf16.gmra.mxu0 %v3090
        %v3247 = vpop.f32.mrf.mxu0
        %v3248 = vadd.f32 %v214, %v3247
        %v3249 = vpop.f32.mrf.mxu0
        %v3250 = vadd.f32 %v214, %v3249
        %3251 = vmatmul.bf16.gmra.mxu0 %v3093
        %v3252 = vpop.f32.mrf.mxu0
        %v3253 = vadd.f32 %v214, %v3252
        %v3254 = vpop.f32.mrf.mxu0
        %v3255 = vadd.f32 %v214, %v3254
        %3256 = vmatmul.bf16.gmra.mxu0 %v3096
        %v3257 = vpop.f32.mrf.mxu0
        %v3258 = vadd.f32 %v214, %v3257
        %v3259 = vpop.f32.mrf.mxu0
        %v3260 = vadd.f32 %v214, %v3259
        %3261 = vmatmul.bf16.gmra.mxu0 %v3099
        %v3262 = vpop.f32.mrf.mxu0
        %v3263 = vadd.f32 %v214, %v3262
        %v3264 = vpop.f32.mrf.mxu0
        %v3265 = vadd.f32 %v214, %v3264
        %3266 = vmatmul.bf16.gmra.mxu0 %v3102
        %v3267 = vpop.f32.mrf.mxu0
        %v3268 = vadd.f32 %v214, %v3267
        %v3269 = vpop.f32.mrf.mxu0
        %v3270 = vadd.f32 %v214, %v3269
        %3271 = vmatmul.bf16.gmra.mxu0 %v3105
        %v3272 = vpop.f32.mrf.mxu0
        %v3273 = vadd.f32 %v214, %v3272
        %v3274 = vpop.f32.mrf.mxu0
        %v3275 = vadd.f32 %v214, %v3274
        %3276 = vmatmul.bf16.gmra.mxu0 %v3108
        %v3277 = vpop.f32.mrf.mxu0
        %v3278 = vadd.f32 %v214, %v3277
        %v3279 = vpop.f32.mrf.mxu0
        %v3280 = vadd.f32 %v214, %v3279
        %3281 = vmatmul.bf16.gmra.mxu0 %v3111
        %v3282 = vpop.f32.mrf.mxu0
        %v3283 = vadd.f32 %v214, %v3282
        %v3284 = vpop.f32.mrf.mxu0
        %v3285 = vadd.f32 %v214, %v3284
        %3286 = vmatmul.bf16.gmra.mxu0 %v3114
        %v3287 = vpop.f32.mrf.mxu0
        %v3288 = vadd.f32 %v214, %v3287
        %v3289 = vpop.f32.mrf.mxu0
        %v3290 = vadd.f32 %v214, %v3289
        %3291 = vmatmul.bf16.gmra.mxu0 %v3117
        %v3292 = vpop.f32.mrf.mxu0
        %v3293 = vadd.f32 %v214, %v3292
        %v3294 = vpop.f32.mrf.mxu0
        %v3295 = vadd.f32 %v214, %v3294
        %3296 = vmatmul.bf16.gmra.mxu0 %v3120
        %v3297 = vpop.f32.mrf.mxu0
        %v3298 = vadd.f32 %v214, %v3297
        %v3299 = vpop.f32.mrf.mxu0
        %v3300 = vadd.f32 %v214, %v3299
        %3301 = vmatmul.bf16.gmra.mxu0 %v3123
        %v3302 = vpop.f32.mrf.mxu0
        %v3303 = vadd.f32 %v214, %v3302
        %v3304 = vpop.f32.mrf.mxu0
        %v3305 = vadd.f32 %v214, %v3304
        %3306 = vdwg.mxu0
        %v3307 = vmax.f32 %v3139, 0.0
        %v3308 = vmax.f32 %v3228, 0.0
        %v3309 = vmax.f32 %v3141, 0.0
        %v3310 = vmax.f32 %v3230, 0.0
        %v3311 = vmax.f32 %v3144, 0.0
        %v3312 = vmax.f32 %v3233, 0.0
        %v3313 = vmax.f32 %v3146, 0.0
        %v3314 = vmax.f32 %v3235, 0.0
        %v3315 = vmax.f32 %v3149, 0.0
        %v3316 = vmax.f32 %v3238, 0.0
        %v3317 = vmax.f32 %v3151, 0.0
        %v3318 = vmax.f32 %v3240, 0.0
        %v3319 = vmax.f32 %v3154, 0.0
        %v3320 = vmax.f32 %v3243, 0.0
        %v3321 = vmax.f32 %v3156, 0.0
        %v3322 = vmax.f32 %v3245, 0.0
        %v3323 = vmax.f32 %v3159, 0.0
        %v3324 = vmax.f32 %v3248, 0.0
        %v3325 = vmax.f32 %v3161, 0.0
        %v3326 = vmax.f32 %v3250, 0.0
        %v3327 = vmax.f32 %v3164, 0.0
        %v3328 = vmax.f32 %v3253, 0.0
        %v3329 = vmax.f32 %v3166, 0.0
        %v3330 = vmax.f32 %v3255, 0.0
        %v3331 = vmax.f32 %v3169, 0.0
        %v3332 = vmax.f32 %v3258, 0.0
        %v3333 = vmax.f32 %v3171, 0.0
        %v3334 = vmax.f32 %v3260, 0.0
        %v3335 = vmax.f32 %v3174, 0.0
        %v3336 = vmax.f32 %v3263, 0.0
        %v3337 = vmax.f32 %v3176, 0.0
        %v3338 = vmax.f32 %v3265, 0.0
        %v3339 = vmax.f32 %v3179, 0.0
        %v3340 = vmax.f32 %v3268, 0.0
        %v3341 = vmax.f32 %v3181, 0.0
        %v3342 = vmax.f32 %v3270, 0.0
        %v3343 = vmax.f32 %v3184, 0.0
        %v3344 = vmax.f32 %v3273, 0.0
        %v3345 = vmax.f32 %v3186, 0.0
        %v3346 = vmax.f32 %v3275, 0.0
        %v3347 = vmax.f32 %v3189, 0.0
        %v3348 = vmax.f32 %v3278, 0.0
        %v3349 = vmax.f32 %v3191, 0.0
        %v3350 = vmax.f32 %v3280, 0.0
        %v3351 = vmax.f32 %v3194, 0.0
        %v3352 = vmax.f32 %v3283, 0.0
        %v3353 = vmax.f32 %v3196, 0.0
        %v3354 = vmax.f32 %v3285, 0.0
        %v3355 = vmax.f32 %v3199, 0.0
        %v3356 = vmax.f32 %v3288, 0.0
        %v3357 = vmax.f32 %v3201, 0.0
        %v3358 = vmax.f32 %v3290, 0.0
        %v3359 = vmax.f32 %v3204, 0.0
        %v3360 = vmax.f32 %v3293, 0.0
        %v3361 = vmax.f32 %v3206, 0.0
        %v3362 = vmax.f32 %v3295, 0.0
        %v3363 = vmax.f32 %v3209, 0.0
        %v3364 = vmax.f32 %v3298, 0.0
        %v3365 = vmax.f32 %v3211, 0.0
        %v3366 = vmax.f32 %v3300, 0.0
        %v3367 = vmax.f32 %v3214, 0.0
        %v3368 = vmax.f32 %v3303, 0.0
        %v3369 = vmax.f32 %v3216, 0.0
        %v3370 = vmax.f32 %v3305, 0.0
        %v3371 = vadd.f32 %v3307, %v3309
        %v3372 = vadd.f32 %v3371, %v3311
        %v3373 = vadd.f32 %v3372, %v3313
        %v3374 = vadd.f32 %v3373, %v3315
        %v3375 = vadd.f32 %v3374, %v3317
        %v3376 = vadd.f32 %v3375, %v3319
        %v3377 = vadd.f32 %v3376, %v3321
        %v3378 = vadd.f32 %v3377, %v3323
        %v3379 = vadd.f32 %v3378, %v3325
        %v3380 = vadd.f32 %v3379, %v3327
        %v3381 = vadd.f32 %v3380, %v3329
        %v3382 = vadd.f32 %v3381, %v3331
        %v3383 = vadd.f32 %v3382, %v3333
        %v3384 = vadd.f32 %v3383, %v3335
        %v3385 = vadd.f32 %v3384, %v3337
        %v3386 = vadd.f32 %v3385, %v3339
        %v3387 = vadd.f32 %v3386, %v3341
        %v3388 = vadd.f32 %v3387, %v3343
        %v3389 = vadd.f32 %v3388, %v3345
        %v3390 = vadd.f32 %v3389, %v3347
        %v3391 = vadd.f32 %v3390, %v3349
        %v3392 = vadd.f32 %v3391, %v3351
        %v3393 = vadd.f32 %v3392, %v3353
        %v3394 = vadd.f32 %v3393, %v3355
        %v3395 = vadd.f32 %v3394, %v3357
        %v3396 = vadd.f32 %v3395, %v3359
        %v3397 = vadd.f32 %v3396, %v3361
        %v3398 = vadd.f32 %v3397, %v3363
        %v3399 = vadd.f32 %v3398, %v3365
        %v3400 = vadd.f32 %v3399, %v3367
        %v3401 = vadd.f32 %v3400, %v3369
        %v3402 = vrot.slane %v3401, 4
        %v3403 = vadd.f32 %v3401, %v3402
        %v3404 = vrot.slane %v3403, 2
        %v3405 = vadd.f32 %v3403, %v3404
        %v3406 = vrot.slane %v3405, 1
        %v3407 = vadd.f32 %v3405, %v3406
        %v3408 = vadd.f32 %v3308, %v3310
        %v3409 = vadd.f32 %v3408, %v3312
        %v3410 = vadd.f32 %v3409, %v3314
        %v3411 = vadd.f32 %v3410, %v3316
        %v3412 = vadd.f32 %v3411, %v3318
        %v3413 = vadd.f32 %v3412, %v3320
        %v3414 = vadd.f32 %v3413, %v3322
        %v3415 = vadd.f32 %v3414, %v3324
        %v3416 = vadd.f32 %v3415, %v3326
        %v3417 = vadd.f32 %v3416, %v3328
        %v3418 = vadd.f32 %v3417, %v3330
        %v3419 = vadd.f32 %v3418, %v3332
        %v3420 = vadd.f32 %v3419, %v3334
        %v3421 = vadd.f32 %v3420, %v3336
        %v3422 = vadd.f32 %v3421, %v3338
        %v3423 = vadd.f32 %v3422, %v3340
        %v3424 = vadd.f32 %v3423, %v3342
        %v3425 = vadd.f32 %v3424, %v3344
        %v3426 = vadd.f32 %v3425, %v3346
        %v3427 = vadd.f32 %v3426, %v3348
        %v3428 = vadd.f32 %v3427, %v3350
        %v3429 = vadd.f32 %v3428, %v3352
        %v3430 = vadd.f32 %v3429, %v3354
        %v3431 = vadd.f32 %v3430, %v3356
        %v3432 = vadd.f32 %v3431, %v3358
        %v3433 = vadd.f32 %v3432, %v3360
        %v3434 = vadd.f32 %v3433, %v3362
        %v3435 = vadd.f32 %v3434, %v3364
        %v3436 = vadd.f32 %v3435, %v3366
        %v3437 = vadd.f32 %v3436, %v3368
        %v3438 = vadd.f32 %v3437, %v3370
        %v3439 = vrot.slane %v3438, 4
        %v3440 = vadd.f32 %v3438, %v3439
        %v3441 = vrot.slane %v3440, 2
        %v3442 = vadd.f32 %v3440, %v3441
        %v3443 = vrot.slane %v3442, 1
        %v3444 = vadd.f32 %v3442, %v3443
        %v3445 = vld [vmem:[%s189] sm:$0xff]
        %v3446 = vld [vmem:[%s189 + $0x8] sm:$0xff]
        %v3447 = vsel %vm300, %v586, %v989
        %v3448 = vsel %vm300, %v623, %v1026
        %v3449 = vsel %vm301, %v3447, %v1392
        %v3450 = vsel %vm301, %v3448, %v1429
        %vm3451 = vcmask 1042432
        %v3452 = vsel %vm3451, %v3449, %v1795
        %v3453 = vsel %vm3451, %v3450, %v1832
        %vm3454 = vcmask 1043456
        %v3455 = vsel %vm3454, %v3452, %v2198
        %v3456 = vsel %vm3454, %v3453, %v2235
        %vm3457 = vcmask 1044480
        %v3458 = vsel %vm3457, %v3455, %v2601
        %v3459 = vsel %vm3457, %v3456, %v2638
        %vm3460 = vcmask 1045504
        %v3461 = vsel %vm3460, %v3458, %v3004
        %v3462 = vsel %vm3460, %v3459, %v3041
        %vm3463 = vcmask 1046528
        %v3464 = vsel %vm3463, %v3461, %v3407
        %v3465 = vsel %vm3463, %v3462, %v3444
        %v3466 = vadd.f32 %v3445, %v3464
        %v3467 = vadd.f32 %v3446, %v3465
        %3468 = vst [vmem:[%s189] sm:$0xff] %v3466
        %3469 = vst [vmem:[%s189 + $0x8] sm:$0xff] %v3467
        // Predicated region
        $region37: #{tpu_custom_call.1} parent=31 // pred_check
          %p3470 = pneg %p203
        $region38: #{tpu_custom_call.1} parent=31 // pred_check_branch
          %3472 = sbr.rel (%p3470) target = $region40
        $region39: #{tpu_custom_call.1} parent=31 // pred_region
          %v3473 = vld [vmem:[%s189] sm:$0xff]
          %v3474 = vld [vmem:[%s189 + $0x8] sm:$0xff]
          %v3475 = vmul.f32 %v3473, 0.00390625
          %v3476 = vmul.f32 %v3474, 0.00390625
          %3477 = vst [vmem:[%s189] sm:$0xff] %v3475
          %3478 = vst [vmem:[%s189 + $0x8] sm:$0xff] %v3476
        $region40: #{tpu_custom_call.1} parent=31 // pred_fallthru
          _
        %s3479 = sand.u32 %s107, 1
        %s3480 = scalar_lea.sflag [#allocation3], %s3479
        %s3481 = sand.u32 %s107, 1
        %s3482 = smul.addr %s3481, 16
        %s3483 = scalar_lea.vmem [#allocation2], %s3482
        // Predicated region
        $region41: #{tpu_custom_call.1} parent=31 // pred_check
          %p3484 = pneg %p117
        $region42: #{tpu_custom_call.1} parent=31 // pred_check_branch
          %3486 = sbr.rel (%p3484) target = $region44
        $region43: #{tpu_custom_call.1} parent=31 // pred_region
          %3488 = vsyncadd %s3480, 0
          %s3489 = smul.addr %s21, 2
          %s3490 = smul.addr %s3489, 8
          %s3491 = scalar_lea.hbm %s3, %s3490
          %s3493 = sshll.u32 %s3483, 4
          %s3494 = int_to_ptr.vmem [resolvable:$true] %s3493
          %s3495 = sshll.u32 %s3491, 4
          %s3496 = int_to_ptr.hbm [resolvable:$true] %s3495
          %3498 = dma.vmem_to_hbm [thread:$0]  %s3494, 256, %s3496, %s3480
        $region44: #{tpu_custom_call.1} parent=31 // pred_fallthru
          _
      $region32: #{tpu_custom_call.1} parent=5 // pred_fallthru
        _
      %p3499 = scmp.le.s32.totalorder 2, %s12
      // Predicated region
      $region45: #{tpu_custom_call.1} parent=5 // pred_check
        %p3500 = pneg %p3499
      $region46: #{tpu_custom_call.1} parent=5 // pred_check_branch
        %3502 = sbr.rel (%p3500) target = $region48
      $region47: #{tpu_custom_call.1} parent=5 // pred_region
        %s3503 = ssub.s32 %s12, 2
        // Predicated region
        $region49: #{tpu_custom_call.1} parent=47 // pred_check
          %p3504 = pneg %p123
        $region50: #{tpu_custom_call.1} parent=47 // pred_check_branch
          %3506 = sbr.rel (%p3504) target = $region52
        $region51: #{tpu_custom_call.1} parent=47 // pred_region
          %s3507 = sand.u32 %s108, 1
          %s3508 = scalar_lea.sflag [#allocation3], %s3507
          %s3509 = sand.u32 %s108, 1
          %s3510 = smul.addr %s3509, 16
          %s3511 = scalar_lea.vmem [#allocation2], %s3510
          %3513 = dma.done %s3508, 256
        $region52: #{tpu_custom_call.1} parent=47 // pred_fallthru
          _
      $region48: #{tpu_custom_call.1} parent=5 // pred_fallthru
        _
    $region6: #{tpu_custom_call.1} parent=1 // loop_footer
      %s16 = sadd.s32 1, %s12
    $region7: #{tpu_custom_call.1} parent=1 // loop_footer_branch
      %11 = sbr.rel target = $region3
    $region8: #{tpu_custom_call.1} parent=1 // loop_exit
      _
    %3514 = vsyncpa [#allocation3], 1
    %s3515 = scalar_lea.sflag [#allocation3], 1
    %3516 = vsyncpa %s3515, 1

</llo_original>
